<compile_context>
chip_gen: v5e
topology: v5e:2x2
jax: 0.10.0
libtpu: 0.0.40
codegen_flags: <defaults>
</compile_context>

<pallas_src>
import math
from collections import namedtuple
from functools import partial

import jax
import jax.numpy as jnp
from jax.experimental import pallas as pl
from jax.experimental.pallas import tpu as pltpu


# ---------------------------------------------------------------------------
# Shared per-layer computation (used by both kernel variants)
# ---------------------------------------------------------------------------

def _layer_norm(h, g, b):
    mu = jnp.mean(h, axis=-1, keepdims=True)
    var = jnp.mean(jnp.square(h - mu), axis=-1, keepdims=True)
    return (h - mu) * jax.lax.rsqrt(var + 1e-5) * g + b


def _gelu_tanh(h):
    # tanh-approximate GELU (see TODO above re: erf).
    return 0.5 * h * (1.0 + jnp.tanh(0.7978845608028654
                                     * (h + 0.044715 * h * h * h)))


def _encoder_layer(x, neg_hb, batch, seq, n_heads,
                   wqkv, bqkv, wo, bo, g1, be1, g2, be2, w1, bf1, w2, bf2):
    """One pre-norm transformer encoder layer.

    x:      [N, D] f32 activations, N = batch * seq (row n = b * seq + s)
    neg_hb: [H*B, 1, S] f32 additive key-padding mask, head-major (h * B + b)
    """
    N, D = x.shape
    H, B, S = n_heads, batch, seq
    dh = D // H
    inv_sqrt_dh = 1.0 / math.sqrt(dh)
    bf16 = jnp.bfloat16

    # ---- self-attention block (norm_first: x + SA(LN(x))) ----
    xn = _layer_norm(x, g1, be1).astype(bf16)

    # One fused, lane-dense QKV projection (review item 1).
    qkv = jnp.dot(xn, wqkv, preferred_element_type=jnp.float32) + bqkv   # [N, 3D]

    # Head split: layout-only.  Static lane slices of width dh, reshaped to
    # [B, S, dh] (leading-dim split) and stacked head-major along the leading
    # axis -> [H*B, S, dh].  No compute is serialized per head.
    def split_heads(col_off):
        parts = [qkv[:, col_off + h * dh: col_off + (h + 1) * dh].reshape(B, S, dh)
                 for h in range(H)]
        return jnp.concatenate(parts, axis=0)            # [H*B, S, dh]

    q_hb = split_heads(0)
    k_hb = split_heads(D)
    v_hb = split_heads(2 * D)

    # Scores / softmax / context batched over all heads at once (review item 2).
    s = jnp.einsum('bqd,bkd->bqk', q_hb, k_hb,
                   preferred_element_type=jnp.float32) * inv_sqrt_dh     # [HB,S,S]
    s = s + neg_hb                                       # key-padding mask (once)
    s = s - jnp.max(s, axis=-1, keepdims=True)           # f32 softmax
    e = jnp.exp(s)
    p = e * pl.reciprocal(jnp.sum(e, axis=-1, keepdims=True), approx=True)
    ctx = jnp.einsum('bqk,bkd->bqd', p, v_hb,
                     preferred_element_type=jnp.float32)                 # [HB,S,dh]

    # Head merge (layout-only) + ONE K=D output projection (review item 3).
    ctx4 = ctx.reshape(H, B, S, dh)
    ctx_cat = jnp.concatenate([ctx4[h].reshape(N, dh) for h in range(H)],
                              axis=-1)                                   # [N, D]
    attn = jnp.dot(ctx_cat.astype(bf16), wo,
                   preferred_element_type=jnp.float32) + bo
    x = x + attn

    # ---- feed-forward block (norm_first: x + FFN(LN(x))) ----
    xn2 = _layer_norm(x, g2, be2).astype(bf16)
    h1 = jnp.dot(xn2, w1, preferred_element_type=jnp.float32) + bf1
    h1 = _gelu_tanh(h1)                                   # f32 VPU/EUP math
    h2 = jnp.dot(h1.astype(bf16), w2,
                 preferred_element_type=jnp.float32) + bf2
    return x + h2


# ---------------------------------------------------------------------------
# Kernel variants
# ---------------------------------------------------------------------------

def streamed_encoder_kernel(x0_ref, neg_ref,
                            wqkv_ref, bqkv_ref, wo_ref, bo_ref,
                            g1_ref, be1_ref, g2_ref, be2_ref,
                            w1_ref, bf1_ref, w2_ref, bf2_ref,
                            o_ref, *, n_heads, batch, seq):
    """One grid step == one encoder layer; activation resident in o_ref."""
    l = pl.program_id(0)

    # Layer 0: seed the resident activation.  The output BlockSpec index map is
    # constant over the layer axis (which is "arbitrary"), so o_ref stays in
    # VMEM across the whole grid (accumulator pattern).
    @pl.when(l == 0)
    def _():
        o_ref[...] = x0_ref[...]

    o_ref[...] = _encoder_layer(
        o_ref[...], neg_ref[...], batch, seq, n_heads,
        wqkv_ref[0], bqkv_ref[0], wo_ref[0], bo_ref[0],
        g1_ref[0], be1_ref[0], g2_ref[0], be2_ref[0],
        w1_ref[0], bf1_ref[0], w2_ref[0], bf2_ref[0])


def resident_encoder_kernel(x0_ref, neg_ref,
                            wqkv_ref, bqkv_ref, wo_ref, bo_ref,
                            g1_ref, be1_ref, g2_ref, be2_ref,
                            w1_ref, bf1_ref, w2_ref, bf2_ref,
                            o_ref, *, n_heads, n_layers, batch, seq):
    """All layers' weights resident in VMEM; layer loop runs inside the kernel."""
    x = x0_ref[...]
    neg = neg_ref[...]
    # Static unroll: this path is only taken when the total weight footprint is
    # small, so there is no per-layer DMA to overlap and n_layers is modest.
    for l in range(n_layers):
        x = _encoder_layer(x, neg, batch, seq, n_heads,
                           wqkv_ref[l], bqkv_ref[l], wo_ref[l], bo_ref[l],
                           g1_ref[l], be1_ref[l], g2_ref[l], be2_ref[l],
                           w1_ref[l], bf1_ref[l], w2_ref[l], bf2_ref[l])
    o_ref[...] = x


# ---------------------------------------------------------------------------
# Wrapper: specs, VMEM sizing, path selection
# ---------------------------------------------------------------------------

def _layer_spec(arr):
    """One layer's slice of a [L, ...]-stacked parameter per grid step."""
    nd = arr.ndim
    return pl.BlockSpec((1,) + tuple(arr.shape[1:]),
                        lambda l, _nd=nd: (l,) + (0,) * (_nd - 1))


def _const_spec(arr):
    """Full array, same block every grid step (resident across the grid)."""
    nd = arr.ndim
    return pl.BlockSpec(tuple(arr.shape), lambda l, _nd=nd: (0,) * _nd)


def _act_vmem_bytes(N, D, Dff, H, B, S):
    """Generous estimate of in-kernel activation temporaries (f32)."""
    f32 = 4
    return (6 * N * D * f32              # resident x / out (+ buffers), x0, residual
            + 2 * H * B * S * f32        # additive key-padding mask
            + 3 * N * D * f32            # fused qkv result ([N, 3D])
            + 3 * N * D * f32            # head-split q/k/v copies
            + 4 * H * B * S * S * f32    # scores / exp / probs / softmax temps
            + 2 * N * D * f32            # ctx + reassembled ctx
            + 2 * N * Dff * f32          # FFN hidden + GELU temp
            + 2 * N * D * f32)           # layernorm temps


def _vmem_limit_bytes(estimate_bytes):
    """Explicit scoped-VMEM limit: 2x estimate, floored at 32 MiB, capped below
    the physical VMEM of the current chip (64 MiB on v7x, 128 MiB v5e/v6e)."""
    try:
        physical = int(pltpu.get_tpu_info().vmem_capacity_bytes)
    except Exception:
        physical = 64 * 1024 * 1024      # conservative fallback (v7x per-core)
    floor = 32 * 1024 * 1024
    ceil = max((physical * 7) // 8, floor)
    return int(min(max(2 * int(estimate_bytes), floor), ceil))


# Keep all layers resident only when weights + activations comfortably fit the
# smallest VMEM budget (v7x: 64 MiB physical).
_RESIDENT_MAX_BYTES = 40 * 1024 * 1024


def encoder_forward(x0, neg_hb, params, n_heads, n_layers, batch, seq,
                    mode="auto"):
    N, D = x0.shape
    Dff = params[8].shape[-1]            # w1: [L, D, Dff]
    H, B, S = n_heads, batch, seq

    weight_bytes = sum(int(p.size) * p.dtype.itemsize for p in params)
    act_bytes = _act_vmem_bytes(N, D, Dff, H, B, S)
    if mode == "auto":
        mode = ("resident" if weight_bytes + act_bytes <= _RESIDENT_MAX_BYTES
                else "streamed")

    if mode == "resident":
        # Small model: all weights resident, no grid -> no per-step pipeline
        # overhead, no per-layer weight DMA re-issue.
        n_inputs = 2 + len(params)
        return pl.pallas_call(
            partial(resident_encoder_kernel, n_heads=H, n_layers=n_layers,
                    batch=B, seq=S),
            out_shape=jax.ShapeDtypeStruct((N, D), jnp.float32),
            in_specs=[pl.BlockSpec(memory_space=pltpu.MemorySpace.VMEM)] * n_inputs,
            out_specs=pl.BlockSpec(memory_space=pltpu.MemorySpace.VMEM),
            compiler_params=pltpu.CompilerParams(
                vmem_limit_bytes=_vmem_limit_bytes(weight_bytes + act_bytes)),
        )(x0, neg_hb, *params)

    # Large model: stream one layer's weights per grid step (double-buffered by
    # the Pallas pipeline); activation stays resident in the output VMEM block.
    per_layer_weight_bytes = weight_bytes // max(n_layers, 1)
    est = 2 * per_layer_weight_bytes + act_bytes
    in_specs = ([_const_spec(x0), _const_spec(neg_hb)]
                + [_layer_spec(p) for p in params])
    return pl.pallas_call(
        partial(streamed_encoder_kernel, n_heads=H, batch=B, seq=S),
        out_shape=jax.ShapeDtypeStruct((N, D), jnp.float32),
        grid=(n_layers,),
        in_specs=in_specs,
        out_specs=pl.BlockSpec((N, D), lambda l: (0, 0)),
        compiler_params=pltpu.CompilerParams(
            # Layer axis is a sequential dependency chain.
            dimension_semantics=("arbitrary",),
            vmem_limit_bytes=_vmem_limit_bytes(est)),
    )(x0, neg_hb, *params)


def standard_encoder(token_ids, e_mask, emb_table, pe, params, n_heads,
                     n_layers, mode="auto"):
    B, S = token_ids.shape
    D = emb_table.shape[1]
    # Embedding gather + scale + PE add: plain jnp (XLA fuses; no Pallas launch).
    gathered = jnp.take(emb_table, token_ids, axis=0)                # [B, S, D]
    x0 = (gathered * math.sqrt(D) + pe[None, :, :]).reshape(B * S, D)
    x0 = x0.astype(jnp.float32)
    # Additive key-padding mask (src_key_padding_mask: True -> masked), f32,
    # replicated per head (head-major order h * B + b) so the in-kernel softmax
    # batches over all heads with a single broadcast.
    neg = jnp.where(e_mask, -1e9, 0.0).astype(jnp.float32).reshape(B, 1, S)
    neg_hb = jnp.tile(neg, (n_heads, 1, 1))                          # [H*B, 1, S]
    out = encoder_forward(x0, neg_hb, params, n_heads, n_layers, B, S, mode=mode)
    return out.reshape(B, S, D)


# ---------------------------------------------------------------------------
# Deterministic parameter construction + demo
# ---------------------------------------------------------------------------

def make_encoder_params(key, n_layers, D, Dff, H):
    """Layer-stacked params.  Order:
    (wqkv, bqkv, wo, bo, g1, be1, g2, be2, w1, bf1, w2, bf2).
    Matmul weights are bf16 (halves weight DMA, bf16 MXU); Q/K/V weights are
    fused host-side into a single [L, D, 3D] tensor for one lane-dense matmul.
    """
    ks = jax.random.split(key, 12)
    n = lambda k, shape, s=0.05: jax.random.normal(k, shape, jnp.float32) * s
    wq = n(ks[0], (n_layers, D, D));    bq = n(ks[1], (n_layers, D))
    wk = n(ks[2], (n_layers, D, D));    bk = n(ks[3], (n_layers, D))
    wv = n(ks[4], (n_layers, D, D));    bv = n(ks[5], (n_layers, D))
    wo = n(ks[6], (n_layers, D, D));    bo = n(ks[7], (n_layers, D))
    w1 = n(ks[8], (n_layers, D, Dff));  bf1 = n(ks[9], (n_layers, Dff))
    w2 = n(ks[10], (n_layers, Dff, D)); bf2 = n(ks[11], (n_layers, D))
    g1 = jnp.ones((n_layers, 1, D), jnp.float32)
    be1 = jnp.zeros((n_layers, 1, D), jnp.float32)
    g2 = jnp.ones((n_layers, 1, D), jnp.float32)
    be2 = jnp.zeros((n_layers, 1, D), jnp.float32)

    bf16 = jnp.bfloat16
    wqkv = jnp.concatenate([wq, wk, wv], axis=-1).astype(bf16)       # [L, D, 3D]
    bqkv = jnp.concatenate([bq, bk, bv], axis=-1).reshape(n_layers, 1, 3 * D)
    return (wqkv, bqkv,
            wo.astype(bf16), bo.reshape(n_layers, 1, D),
            g1, be1, g2, be2,
            w1.astype(bf16), bf1.reshape(n_layers, 1, Dff),
            w2.astype(bf16), bf2.reshape(n_layers, 1, D))


def sinusoidal_pe(S, D):
    pos = jnp.arange(S, dtype=jnp.float32)[:, None]
    i = jnp.arange(0, D, 2, dtype=jnp.float32)
    div = jnp.exp(-math.log(10000.0) * i / D)
    pe = jnp.zeros((S, D), jnp.float32)
    pe = pe.at[:, 0::2].set(jnp.sin(pos * div))
    pe = pe.at[:, 1::2].set(jnp.cos(pos * div))
    return pe


if __name__ == "__main__":
    Config = namedtuple(
        "Config",
        ["hidden_dim", "n_heads", "pff_dim", "dropout_ratio", "n_layers",
         "vocab_size"])
    # hidden_dim=256 with 2 heads -> head_dim=128: every per-head lane slice /
    # concat is aligned to the 128-lane vreg tile (TPU-natural small config).
    config = Config(hidden_dim=256, n_heads=2, pff_dim=512,
                    dropout_ratio=0.1, n_layers=2, vocab_size=50)

    B, S = 2, 8
    key = jax.random.PRNGKey(0)
    k_emb, k_tok, k_par = jax.random.split(key, 3)

    emb_table = jax.random.normal(
        k_emb, (config.vocab_size, config.hidden_dim), jnp.float32) * 0.05
    pe = sinusoidal_pe(S, config.hidden_dim)
    params = make_encoder_params(k_par, config.n_layers, config.hidden_dim,
                                 config.pff_dim, config.n_heads)

    token_ids = jax.random.randint(k_tok, (B, S), 0, config.vocab_size, jnp.int32)
    # src_key_padding_mask: True = padding (second sequence has 2 padded tokens)
    e_mask = jnp.array([[False] * S,
                        [False] * (S - 2) + [True] * 2], dtype=jnp.bool_)

    # "auto" picks the all-resident path at this (tiny) size.
    out_resident = standard_encoder(token_ids, e_mask, emb_table, pe, params,
                                    config.n_heads, config.n_layers, mode="auto")
    out_resident = jax.block_until_ready(out_resident)

    # Also exercise the layer-streaming path (used for large models) and check
    # the two paths agree.
    out_streamed = standard_encoder(token_ids, e_mask, emb_table, pe, params,
                                    config.n_heads, config.n_layers,
                                    mode="streamed")
    out_streamed = jax.block_until_ready(out_streamed)

    assert out_resident.shape == (B, S, config.hidden_dim)
    assert out_resident.dtype == jnp.float32
    assert bool(jnp.allclose(out_resident, out_streamed, atol=1e-3, rtol=1e-3))
    print("KERNEL_OK")
</pallas_src>

<mosaic_0001>
module attributes {stable_mosaic.version = 11 : i64} {
  func.func @resident_encoder_kernel(%arg0: memref<16x256xf32, #tpu.memory_space<vmem>>, %arg1: memref<4x1x8xf32, #tpu.memory_space<vmem>>, %arg2: memref<2x256x768xbf16, #tpu.memory_space<vmem>>, %arg3: memref<2x1x768xf32, #tpu.memory_space<vmem>>, %arg4: memref<2x256x256xbf16, #tpu.memory_space<vmem>>, %arg5: memref<2x1x256xf32, #tpu.memory_space<vmem>>, %arg6: memref<2x1x256xf32, #tpu.memory_space<vmem>>, %arg7: memref<2x1x256xf32, #tpu.memory_space<vmem>>, %arg8: memref<2x1x256xf32, #tpu.memory_space<vmem>>, %arg9: memref<2x1x256xf32, #tpu.memory_space<vmem>>, %arg10: memref<2x256x512xbf16, #tpu.memory_space<vmem>>, %arg11: memref<2x1x512xf32, #tpu.memory_space<vmem>>, %arg12: memref<2x512x256xbf16, #tpu.memory_space<vmem>>, %arg13: memref<2x1x256xf32, #tpu.memory_space<vmem>>, %arg14: memref<16x256xf32, #tpu.memory_space<vmem>>) attributes {dimension_semantics = [], scalar_prefetch = 0 : i64, scratch_operands = 0 : i64, tpu.core_type = #tpu.core_type<tc>} {
    %c0 = arith.constant 0 : index
    %c0_0 = arith.constant 0 : index
    %0 = vector.load %arg0[%c0, %c0_0] : memref<16x256xf32, #tpu.memory_space<vmem>>, vector<16x256xf32>
    %c0_1 = arith.constant 0 : index
    %c0_2 = arith.constant 0 : index
    %c0_3 = arith.constant 0 : index
    %1 = vector.load %arg1[%c0_1, %c0_2, %c0_3] : memref<4x1x8xf32, #tpu.memory_space<vmem>>, vector<4x1x8xf32>
    %c0_4 = arith.constant 0 : index
    %c0_5 = arith.constant 0 : index
    %c0_6 = arith.constant 0 : index
    %2 = vector.load %arg2[%c0_4, %c0_5, %c0_6] : memref<2x256x768xbf16, #tpu.memory_space<vmem>>, vector<1x256x768xbf16>
    %3 = vector.shape_cast %2 : vector<1x256x768xbf16> to vector<256x768xbf16>
    %c0_7 = arith.constant 0 : index
    %c0_8 = arith.constant 0 : index
    %c0_9 = arith.constant 0 : index
    %4 = vector.load %arg3[%c0_7, %c0_8, %c0_9] : memref<2x1x768xf32, #tpu.memory_space<vmem>>, vector<1x1x768xf32>
    %5 = vector.shape_cast %4 : vector<1x1x768xf32> to vector<1x768xf32>
    %c0_10 = arith.constant 0 : index
    %c0_11 = arith.constant 0 : index
    %c0_12 = arith.constant 0 : index
    %6 = vector.load %arg4[%c0_10, %c0_11, %c0_12] : memref<2x256x256xbf16, #tpu.memory_space<vmem>>, vector<1x256x256xbf16>
    %7 = vector.shape_cast %6 : vector<1x256x256xbf16> to vector<256x256xbf16>
    %c0_13 = arith.constant 0 : index
    %c0_14 = arith.constant 0 : index
    %c0_15 = arith.constant 0 : index
    %8 = vector.load %arg5[%c0_13, %c0_14, %c0_15] : memref<2x1x256xf32, #tpu.memory_space<vmem>>, vector<1x1x256xf32>
    %9 = vector.shape_cast %8 : vector<1x1x256xf32> to vector<1x256xf32>
    %c0_16 = arith.constant 0 : index
    %c0_17 = arith.constant 0 : index
    %c0_18 = arith.constant 0 : index
    %10 = vector.load %arg6[%c0_16, %c0_17, %c0_18] : memref<2x1x256xf32, #tpu.memory_space<vmem>>, vector<1x1x256xf32>
    %11 = vector.shape_cast %10 : vector<1x1x256xf32> to vector<1x256xf32>
    %c0_19 = arith.constant 0 : index
    %c0_20 = arith.constant 0 : index
    %c0_21 = arith.constant 0 : index
    %12 = vector.load %arg7[%c0_19, %c0_20, %c0_21] : memref<2x1x256xf32, #tpu.memory_space<vmem>>, vector<1x1x256xf32>
    %13 = vector.shape_cast %12 : vector<1x1x256xf32> to vector<1x256xf32>
    %c0_22 = arith.constant 0 : index
    %c0_23 = arith.constant 0 : index
    %c0_24 = arith.constant 0 : index
    %14 = vector.load %arg8[%c0_22, %c0_23, %c0_24] : memref<2x1x256xf32, #tpu.memory_space<vmem>>, vector<1x1x256xf32>
    %15 = vector.shape_cast %14 : vector<1x1x256xf32> to vector<1x256xf32>
    %c0_25 = arith.constant 0 : index
    %c0_26 = arith.constant 0 : index
    %c0_27 = arith.constant 0 : index
    %16 = vector.load %arg9[%c0_25, %c0_26, %c0_27] : memref<2x1x256xf32, #tpu.memory_space<vmem>>, vector<1x1x256xf32>
    %17 = vector.shape_cast %16 : vector<1x1x256xf32> to vector<1x256xf32>
    %c0_28 = arith.constant 0 : index
    %c0_29 = arith.constant 0 : index
    %c0_30 = arith.constant 0 : index
    %18 = vector.load %arg10[%c0_28, %c0_29, %c0_30] : memref<2x256x512xbf16, #tpu.memory_space<vmem>>, vector<1x256x512xbf16>
    %19 = vector.shape_cast %18 : vector<1x256x512xbf16> to vector<256x512xbf16>
    %c0_31 = arith.constant 0 : index
    %c0_32 = arith.constant 0 : index
    %c0_33 = arith.constant 0 : index
    %20 = vector.load %arg11[%c0_31, %c0_32, %c0_33] : memref<2x1x512xf32, #tpu.memory_space<vmem>>, vector<1x1x512xf32>
    %21 = vector.shape_cast %20 : vector<1x1x512xf32> to vector<1x512xf32>
    %c0_34 = arith.constant 0 : index
    %c0_35 = arith.constant 0 : index
    %c0_36 = arith.constant 0 : index
    %22 = vector.load %arg12[%c0_34, %c0_35, %c0_36] : memref<2x512x256xbf16, #tpu.memory_space<vmem>>, vector<1x512x256xbf16>
    %23 = vector.shape_cast %22 : vector<1x512x256xbf16> to vector<512x256xbf16>
    %c0_37 = arith.constant 0 : index
    %c0_38 = arith.constant 0 : index
    %c0_39 = arith.constant 0 : index
    %24 = vector.load %arg13[%c0_37, %c0_38, %c0_39] : memref<2x1x256xf32, #tpu.memory_space<vmem>>, vector<1x1x256xf32>
    %25 = vector.shape_cast %24 : vector<1x1x256xf32> to vector<1x256xf32>
    %cst = arith.constant dense<0.000000e+00> : vector<16xf32>
    %26 = vector.multi_reduction <add>, %0, %cst [1] : vector<16x256xf32> to vector<16xf32>
    %27 = vector.shape_cast %26 : vector<16xf32> to vector<16x1xf32>
    %cst_40 = arith.constant 2.560000e+02 : f32
    %28 = vector.broadcast %cst_40 : f32 to vector<16x1xf32>
    %29 = arith.divf %27, %28 : vector<16x1xf32>
    %30 = vector.broadcast %29 : vector<16x1xf32> to vector<16x256xf32>
    %31 = arith.subf %0, %30 : vector<16x256xf32>
    %32 = arith.mulf %31, %31 : vector<16x256xf32>
    %cst_41 = arith.constant dense<0.000000e+00> : vector<16xf32>
    %33 = vector.multi_reduction <add>, %32, %cst_41 [1] : vector<16x256xf32> to vector<16xf32>
    %34 = vector.shape_cast %33 : vector<16xf32> to vector<16x1xf32>
    %cst_42 = arith.constant 2.560000e+02 : f32
    %35 = vector.broadcast %cst_42 : f32 to vector<16x1xf32>
    %36 = arith.divf %34, %35 : vector<16x1xf32>
    %37 = vector.broadcast %29 : vector<16x1xf32> to vector<16x256xf32>
    %38 = arith.subf %0, %37 : vector<16x256xf32>
    %cst_43 = arith.constant 9.99999974E-6 : f32
    %39 = vector.broadcast %cst_43 : f32 to vector<16x1xf32>
    %40 = arith.addf %36, %39 : vector<16x1xf32>
    %41 = math.rsqrt %40 : vector<16x1xf32>
    %42 = vector.broadcast %41 : vector<16x1xf32> to vector<16x256xf32>
    %43 = arith.mulf %38, %42 : vector<16x256xf32>
    %44 = vector.broadcast %11 : vector<1x256xf32> to vector<16x256xf32>
    %45 = arith.mulf %43, %44 : vector<16x256xf32>
    %46 = vector.broadcast %13 : vector<1x256xf32> to vector<16x256xf32>
    %47 = arith.addf %45, %46 : vector<16x256xf32>
    %48 = arith.truncf %47 : vector<16x256xf32> to vector<16x256xbf16>
    %cst_44 = arith.constant dense<0.000000e+00> : vector<16x768xf32>
    %49 = tpu.matmul %48, %3, %cst_44 {dimension_numbers = #tpu.dot_dimension_numbers<[1], [0], [0], [1], [0, 0, 1, 1], [], []>} : vector<16x256xbf16>, vector<256x768xbf16>, vector<16x768xf32> -> vector<16x768xf32>
    %50 = vector.broadcast %5 : vector<1x768xf32> to vector<16x768xf32>
    %51 = arith.addf %49, %50 : vector<16x768xf32>
    %52 = vector.extract_strided_slice %51 {offsets = [0, 0], sizes = [16, 128], strides = [1, 1]} : vector<16x768xf32> to vector<16x128xf32>
    %53 = vector.shape_cast %52 : vector<16x128xf32> to vector<2x8x128xf32>
    %54 = vector.extract_strided_slice %51 {offsets = [0, 128], sizes = [16, 128], strides = [1, 1]} : vector<16x768xf32> to vector<16x128xf32>
    %55 = vector.shape_cast %54 : vector<16x128xf32> to vector<2x8x128xf32>
    %56 = tpu.concatenate %53, %55 in 0 : vector<2x8x128xf32>, vector<2x8x128xf32> -> vector<4x8x128xf32>
    %57 = vector.extract_strided_slice %51 {offsets = [0, 256], sizes = [16, 128], strides = [1, 1]} : vector<16x768xf32> to vector<16x128xf32>
    %58 = vector.shape_cast %57 : vector<16x128xf32> to vector<2x8x128xf32>
    %59 = vector.extract_strided_slice %51 {offsets = [0, 384], sizes = [16, 128], strides = [1, 1]} : vector<16x768xf32> to vector<16x128xf32>
    %60 = vector.shape_cast %59 : vector<16x128xf32> to vector<2x8x128xf32>
    %61 = tpu.concatenate %58, %60 in 0 : vector<2x8x128xf32>, vector<2x8x128xf32> -> vector<4x8x128xf32>
    %62 = vector.extract_strided_slice %51 {offsets = [0, 512], sizes = [16, 128], strides = [1, 1]} : vector<16x768xf32> to vector<16x128xf32>
    %63 = vector.shape_cast %62 : vector<16x128xf32> to vector<2x8x128xf32>
    %64 = vector.extract_strided_slice %51 {offsets = [0, 640], sizes = [16, 128], strides = [1, 1]} : vector<16x768xf32> to vector<16x128xf32>
    %65 = vector.shape_cast %64 : vector<16x128xf32> to vector<2x8x128xf32>
    %66 = tpu.concatenate %63, %65 in 0 : vector<2x8x128xf32>, vector<2x8x128xf32> -> vector<4x8x128xf32>
    "tpu.trace_start"() <{level = 10 : i32, message = "bqd,bkd->bqk"}> : () -> ()
    %cst_45 = arith.constant dense<0.000000e+00> : vector<4x8x8xf32>
    %67 = tpu.matmul %56, %61, %cst_45 {dimension_numbers = #tpu.dot_dimension_numbers<[2], [2], [1], [1], [0, 0, 0, 1, 1, 1], [0], [0]>} : vector<4x8x128xf32>, vector<4x8x128xf32>, vector<4x8x8xf32> -> vector<4x8x8xf32>
    "tpu.trace_stop"() : () -> ()
    %cst_46 = arith.constant 0.0883883461 : f32
    %68 = vector.broadcast %cst_46 : f32 to vector<4x8x8xf32>
    %69 = arith.mulf %67, %68 : vector<4x8x8xf32>
    %70 = vector.broadcast %1 : vector<4x1x8xf32> to vector<4x8x8xf32>
    %71 = arith.addf %69, %70 : vector<4x8x8xf32>
    %cst_47 = arith.constant dense<0xFF800000> : vector<4x8xf32>
    %72 = vector.multi_reduction <maximumf>, %71, %cst_47 [2] : vector<4x8x8xf32> to vector<4x8xf32>
    %73 = vector.shape_cast %72 : vector<4x8xf32> to vector<4x8x1xf32>
    %74 = vector.broadcast %73 : vector<4x8x1xf32> to vector<4x8x8xf32>
    %75 = arith.subf %71, %74 : vector<4x8x8xf32>
    %76 = math.exp %75 : vector<4x8x8xf32>
    %cst_48 = arith.constant dense<0.000000e+00> : vector<4x8xf32>
    %77 = vector.multi_reduction <add>, %76, %cst_48 [2] : vector<4x8x8xf32> to vector<4x8xf32>
    %78 = vector.shape_cast %77 : vector<4x8xf32> to vector<4x8x1xf32>
    %79 = tpu.reciprocal %78 {approx = true} : vector<4x8x1xf32> -> vector<4x8x1xf32>
    %80 = vector.broadcast %79 : vector<4x8x1xf32> to vector<4x8x8xf32>
    %81 = arith.mulf %76, %80 : vector<4x8x8xf32>
    "tpu.trace_start"() <{level = 10 : i32, message = "bqk,bkd->bqd"}> : () -> ()
    %cst_49 = arith.constant dense<0.000000e+00> : vector<4x8x128xf32>
    %82 = tpu.matmul %81, %66, %cst_49 {dimension_numbers = #tpu.dot_dimension_numbers<[2], [1], [1], [2], [0, 0, 0, 1, 1, 2], [0], [0]>} : vector<4x8x8xf32>, vector<4x8x128xf32>, vector<4x8x128xf32> -> vector<4x8x128xf32>
    "tpu.trace_stop"() : () -> ()
    %83 = vector.shape_cast %82 : vector<4x8x128xf32> to vector<2x2x8x128xf32>
    %84 = vector.extract_strided_slice %83 {offsets = [0, 0, 0, 0], sizes = [1, 2, 8, 128], strides = [1, 1, 1, 1]} : vector<2x2x8x128xf32> to vector<1x2x8x128xf32>
    %85 = vector.shape_cast %84 : vector<1x2x8x128xf32> to vector<2x8x128xf32>
    %86 = vector.shape_cast %85 : vector<2x8x128xf32> to vector<16x128xf32>
    %87 = vector.extract_strided_slice %83 {offsets = [1, 0, 0, 0], sizes = [1, 2, 8, 128], strides = [1, 1, 1, 1]} : vector<2x2x8x128xf32> to vector<1x2x8x128xf32>
    %88 = vector.shape_cast %87 : vector<1x2x8x128xf32> to vector<2x8x128xf32>
    %89 = vector.shape_cast %88 : vector<2x8x128xf32> to vector<16x128xf32>
    %90 = tpu.concatenate %86, %89 in 1 : vector<16x128xf32>, vector<16x128xf32> -> vector<16x256xf32>
    %91 = arith.truncf %90 : vector<16x256xf32> to vector<16x256xbf16>
    %cst_50 = arith.constant dense<0.000000e+00> : vector<16x256xf32>
    %92 = tpu.matmul %91, %7, %cst_50 {dimension_numbers = #tpu.dot_dimension_numbers<[1], [0], [0], [1], [0, 0, 1, 1], [], []>} : vector<16x256xbf16>, vector<256x256xbf16>, vector<16x256xf32> -> vector<16x256xf32>
    %93 = vector.broadcast %9 : vector<1x256xf32> to vector<16x256xf32>
    %94 = arith.addf %92, %93 : vector<16x256xf32>
    %95 = arith.addf %0, %94 : vector<16x256xf32>
    %cst_51 = arith.constant dense<0.000000e+00> : vector<16xf32>
    %96 = vector.multi_reduction <add>, %95, %cst_51 [1] : vector<16x256xf32> to vector<16xf32>
    %97 = vector.shape_cast %96 : vector<16xf32> to vector<16x1xf32>
    %cst_52 = arith.constant 2.560000e+02 : f32
    %98 = vector.broadcast %cst_52 : f32 to vector<16x1xf32>
    %99 = arith.divf %97, %98 : vector<16x1xf32>
    %100 = vector.broadcast %99 : vector<16x1xf32> to vector<16x256xf32>
    %101 = arith.subf %95, %100 : vector<16x256xf32>
    %102 = arith.mulf %101, %101 : vector<16x256xf32>
    %cst_53 = arith.constant dense<0.000000e+00> : vector<16xf32>
    %103 = vector.multi_reduction <add>, %102, %cst_53 [1] : vector<16x256xf32> to vector<16xf32>
    %104 = vector.shape_cast %103 : vector<16xf32> to vector<16x1xf32>
    %cst_54 = arith.constant 2.560000e+02 : f32
    %105 = vector.broadcast %cst_54 : f32 to vector<16x1xf32>
    %106 = arith.divf %104, %105 : vector<16x1xf32>
    %107 = vector.broadcast %99 : vector<16x1xf32> to vector<16x256xf32>
    %108 = arith.subf %95, %107 : vector<16x256xf32>
    %cst_55 = arith.constant 9.99999974E-6 : f32
    %109 = vector.broadcast %cst_55 : f32 to vector<16x1xf32>
    %110 = arith.addf %106, %109 : vector<16x1xf32>
    %111 = math.rsqrt %110 : vector<16x1xf32>
    %112 = vector.broadcast %111 : vector<16x1xf32> to vector<16x256xf32>
    %113 = arith.mulf %108, %112 : vector<16x256xf32>
    %114 = vector.broadcast %15 : vector<1x256xf32> to vector<16x256xf32>
    %115 = arith.mulf %113, %114 : vector<16x256xf32>
    %116 = vector.broadcast %17 : vector<1x256xf32> to vector<16x256xf32>
    %117 = arith.addf %115, %116 : vector<16x256xf32>
    %118 = arith.truncf %117 : vector<16x256xf32> to vector<16x256xbf16>
    %cst_56 = arith.constant dense<0.000000e+00> : vector<16x512xf32>
    %119 = tpu.matmul %118, %19, %cst_56 {dimension_numbers = #tpu.dot_dimension_numbers<[1], [0], [0], [1], [0, 0, 1, 1], [], []>} : vector<16x256xbf16>, vector<256x512xbf16>, vector<16x512xf32> -> vector<16x512xf32>
    %120 = vector.broadcast %21 : vector<1x512xf32> to vector<16x512xf32>
    %121 = arith.addf %119, %120 : vector<16x512xf32>
    %cst_57 = arith.constant 5.000000e-01 : f32
    %122 = vector.broadcast %cst_57 : f32 to vector<16x512xf32>
    %123 = arith.mulf %122, %121 : vector<16x512xf32>
    %cst_58 = arith.constant 4.471500e-02 : f32
    %124 = vector.broadcast %cst_58 : f32 to vector<16x512xf32>
    %125 = arith.mulf %124, %121 : vector<16x512xf32>
    %126 = arith.mulf %125, %121 : vector<16x512xf32>
    %127 = arith.mulf %126, %121 : vector<16x512xf32>
    %128 = arith.addf %121, %127 : vector<16x512xf32>
    %cst_59 = arith.constant 0.797884583 : f32
    %129 = vector.broadcast %cst_59 : f32 to vector<16x512xf32>
    %130 = arith.mulf %129, %128 : vector<16x512xf32>
    %131 = math.tanh %130 : vector<16x512xf32>
    %cst_60 = arith.constant 1.000000e+00 : f32
    %132 = vector.broadcast %cst_60 : f32 to vector<16x512xf32>
    %133 = arith.addf %132, %131 : vector<16x512xf32>
    %134 = arith.mulf %123, %133 : vector<16x512xf32>
    %135 = arith.truncf %134 : vector<16x512xf32> to vector<16x512xbf16>
    %cst_61 = arith.constant dense<0.000000e+00> : vector<16x256xf32>
    %136 = tpu.matmul %135, %23, %cst_61 {dimension_numbers = #tpu.dot_dimension_numbers<[1], [0], [0], [1], [0, 0, 1, 1], [], []>} : vector<16x512xbf16>, vector<512x256xbf16>, vector<16x256xf32> -> vector<16x256xf32>
    %137 = vector.broadcast %25 : vector<1x256xf32> to vector<16x256xf32>
    %138 = arith.addf %136, %137 : vector<16x256xf32>
    %139 = arith.addf %95, %138 : vector<16x256xf32>
    %c1 = arith.constant 1 : index
    %c0_62 = arith.constant 0 : index
    %c0_63 = arith.constant 0 : index
    %140 = vector.load %arg2[%c1, %c0_62, %c0_63] : memref<2x256x768xbf16, #tpu.memory_space<vmem>>, vector<1x256x768xbf16>
    %141 = vector.shape_cast %140 : vector<1x256x768xbf16> to vector<256x768xbf16>
    %c1_64 = arith.constant 1 : index
    %c0_65 = arith.constant 0 : index
    %c0_66 = arith.constant 0 : index
    %142 = vector.load %arg3[%c1_64, %c0_65, %c0_66] : memref<2x1x768xf32, #tpu.memory_space<vmem>>, vector<1x1x768xf32>
    %143 = vector.shape_cast %142 : vector<1x1x768xf32> to vector<1x768xf32>
    %c1_67 = arith.constant 1 : index
    %c0_68 = arith.constant 0 : index
    %c0_69 = arith.constant 0 : index
    %144 = vector.load %arg4[%c1_67, %c0_68, %c0_69] : memref<2x256x256xbf16, #tpu.memory_space<vmem>>, vector<1x256x256xbf16>
    %145 = vector.shape_cast %144 : vector<1x256x256xbf16> to vector<256x256xbf16>
    %c1_70 = arith.constant 1 : index
    %c0_71 = arith.constant 0 : index
    %c0_72 = arith.constant 0 : index
    %146 = vector.load %arg5[%c1_70, %c0_71, %c0_72] : memref<2x1x256xf32, #tpu.memory_space<vmem>>, vector<1x1x256xf32>
    %147 = vector.shape_cast %146 : vector<1x1x256xf32> to vector<1x256xf32>
    %c1_73 = arith.constant 1 : index
    %c0_74 = arith.constant 0 : index
    %c0_75 = arith.constant 0 : index
    %148 = vector.load %arg6[%c1_73, %c0_74, %c0_75] : memref<2x1x256xf32, #tpu.memory_space<vmem>>, vector<1x1x256xf32>
    %149 = vector.shape_cast %148 : vector<1x1x256xf32> to vector<1x256xf32>
    %c1_76 = arith.constant 1 : index
    %c0_77 = arith.constant 0 : index
    %c0_78 = arith.constant 0 : index
    %150 = vector.load %arg7[%c1_76, %c0_77, %c0_78] : memref<2x1x256xf32, #tpu.memory_space<vmem>>, vector<1x1x256xf32>
    %151 = vector.shape_cast %150 : vector<1x1x256xf32> to vector<1x256xf32>
    %c1_79 = arith.constant 1 : index
    %c0_80 = arith.constant 0 : index
    %c0_81 = arith.constant 0 : index
    %152 = vector.load %arg8[%c1_79, %c0_80, %c0_81] : memref<2x1x256xf32, #tpu.memory_space<vmem>>, vector<1x1x256xf32>
    %153 = vector.shape_cast %152 : vector<1x1x256xf32> to vector<1x256xf32>
    %c1_82 = arith.constant 1 : index
    %c0_83 = arith.constant 0 : index
    %c0_84 = arith.constant 0 : index
    %154 = vector.load %arg9[%c1_82, %c0_83, %c0_84] : memref<2x1x256xf32, #tpu.memory_space<vmem>>, vector<1x1x256xf32>
    %155 = vector.shape_cast %154 : vector<1x1x256xf32> to vector<1x256xf32>
    %c1_85 = arith.constant 1 : index
    %c0_86 = arith.constant 0 : index
    %c0_87 = arith.constant 0 : index
    %156 = vector.load %arg10[%c1_85, %c0_86, %c0_87] : memref<2x256x512xbf16, #tpu.memory_space<vmem>>, vector<1x256x512xbf16>
    %157 = vector.shape_cast %156 : vector<1x256x512xbf16> to vector<256x512xbf16>
    %c1_88 = arith.constant 1 : index
    %c0_89 = arith.constant 0 : index
    %c0_90 = arith.constant 0 : index
    %158 = vector.load %arg11[%c1_88, %c0_89, %c0_90] : memref<2x1x512xf32, #tpu.memory_space<vmem>>, vector<1x1x512xf32>
    %159 = vector.shape_cast %158 : vector<1x1x512xf32> to vector<1x512xf32>
    %c1_91 = arith.constant 1 : index
    %c0_92 = arith.constant 0 : index
    %c0_93 = arith.constant 0 : index
    %160 = vector.load %arg12[%c1_91, %c0_92, %c0_93] : memref<2x512x256xbf16, #tpu.memory_space<vmem>>, vector<1x512x256xbf16>
    %161 = vector.shape_cast %160 : vector<1x512x256xbf16> to vector<512x256xbf16>
    %c1_94 = arith.constant 1 : index
    %c0_95 = arith.constant 0 : index
    %c0_96 = arith.constant 0 : index
    %162 = vector.load %arg13[%c1_94, %c0_95, %c0_96] : memref<2x1x256xf32, #tpu.memory_space<vmem>>, vector<1x1x256xf32>
    %163 = vector.shape_cast %162 : vector<1x1x256xf32> to vector<1x256xf32>
    %cst_97 = arith.constant dense<0.000000e+00> : vector<16xf32>
    %164 = vector.multi_reduction <add>, %139, %cst_97 [1] : vector<16x256xf32> to vector<16xf32>
    %165 = vector.shape_cast %164 : vector<16xf32> to vector<16x1xf32>
    %cst_98 = arith.constant 2.560000e+02 : f32
    %166 = vector.broadcast %cst_98 : f32 to vector<16x1xf32>
    %167 = arith.divf %165, %166 : vector<16x1xf32>
    %168 = vector.broadcast %167 : vector<16x1xf32> to vector<16x256xf32>
    %169 = arith.subf %139, %168 : vector<16x256xf32>
    %170 = arith.mulf %169, %169 : vector<16x256xf32>
    %cst_99 = arith.constant dense<0.000000e+00> : vector<16xf32>
    %171 = vector.multi_reduction <add>, %170, %cst_99 [1] : vector<16x256xf32> to vector<16xf32>
    %172 = vector.shape_cast %171 : vector<16xf32> to vector<16x1xf32>
    %cst_100 = arith.constant 2.560000e+02 : f32
    %173 = vector.broadcast %cst_100 : f32 to vector<16x1xf32>
    %174 = arith.divf %172, %173 : vector<16x1xf32>
    %175 = vector.broadcast %167 : vector<16x1xf32> to vector<16x256xf32>
    %176 = arith.subf %139, %175 : vector<16x256xf32>
    %cst_101 = arith.constant 9.99999974E-6 : f32
    %177 = vector.broadcast %cst_101 : f32 to vector<16x1xf32>
    %178 = arith.addf %174, %177 : vector<16x1xf32>
    %179 = math.rsqrt %178 : vector<16x1xf32>
    %180 = vector.broadcast %179 : vector<16x1xf32> to vector<16x256xf32>
    %181 = arith.mulf %176, %180 : vector<16x256xf32>
    %182 = vector.broadcast %149 : vector<1x256xf32> to vector<16x256xf32>
    %183 = arith.mulf %181, %182 : vector<16x256xf32>
    %184 = vector.broadcast %151 : vector<1x256xf32> to vector<16x256xf32>
    %185 = arith.addf %183, %184 : vector<16x256xf32>
    %186 = arith.truncf %185 : vector<16x256xf32> to vector<16x256xbf16>
    %cst_102 = arith.constant dense<0.000000e+00> : vector<16x768xf32>
    %187 = tpu.matmul %186, %141, %cst_102 {dimension_numbers = #tpu.dot_dimension_numbers<[1], [0], [0], [1], [0, 0, 1, 1], [], []>} : vector<16x256xbf16>, vector<256x768xbf16>, vector<16x768xf32> -> vector<16x768xf32>
    %188 = vector.broadcast %143 : vector<1x768xf32> to vector<16x768xf32>
    %189 = arith.addf %187, %188 : vector<16x768xf32>
    %190 = vector.extract_strided_slice %189 {offsets = [0, 0], sizes = [16, 128], strides = [1, 1]} : vector<16x768xf32> to vector<16x128xf32>
    %191 = vector.shape_cast %190 : vector<16x128xf32> to vector<2x8x128xf32>
    %192 = vector.extract_strided_slice %189 {offsets = [0, 128], sizes = [16, 128], strides = [1, 1]} : vector<16x768xf32> to vector<16x128xf32>
    %193 = vector.shape_cast %192 : vector<16x128xf32> to vector<2x8x128xf32>
    %194 = tpu.concatenate %191, %193 in 0 : vector<2x8x128xf32>, vector<2x8x128xf32> -> vector<4x8x128xf32>
    %195 = vector.extract_strided_slice %189 {offsets = [0, 256], sizes = [16, 128], strides = [1, 1]} : vector<16x768xf32> to vector<16x128xf32>
    %196 = vector.shape_cast %195 : vector<16x128xf32> to vector<2x8x128xf32>
    %197 = vector.extract_strided_slice %189 {offsets = [0, 384], sizes = [16, 128], strides = [1, 1]} : vector<16x768xf32> to vector<16x128xf32>
    %198 = vector.shape_cast %197 : vector<16x128xf32> to vector<2x8x128xf32>
    %199 = tpu.concatenate %196, %198 in 0 : vector<2x8x128xf32>, vector<2x8x128xf32> -> vector<4x8x128xf32>
    %200 = vector.extract_strided_slice %189 {offsets = [0, 512], sizes = [16, 128], strides = [1, 1]} : vector<16x768xf32> to vector<16x128xf32>
    %201 = vector.shape_cast %200 : vector<16x128xf32> to vector<2x8x128xf32>
    %202 = vector.extract_strided_slice %189 {offsets = [0, 640], sizes = [16, 128], strides = [1, 1]} : vector<16x768xf32> to vector<16x128xf32>
    %203 = vector.shape_cast %202 : vector<16x128xf32> to vector<2x8x128xf32>
    %204 = tpu.concatenate %201, %203 in 0 : vector<2x8x128xf32>, vector<2x8x128xf32> -> vector<4x8x128xf32>
    "tpu.trace_start"() <{level = 10 : i32, message = "bqd,bkd->bqk"}> : () -> ()
    %cst_103 = arith.constant dense<0.000000e+00> : vector<4x8x8xf32>
    %205 = tpu.matmul %194, %199, %cst_103 {dimension_numbers = #tpu.dot_dimension_numbers<[2], [2], [1], [1], [0, 0, 0, 1, 1, 1], [0], [0]>} : vector<4x8x128xf32>, vector<4x8x128xf32>, vector<4x8x8xf32> -> vector<4x8x8xf32>
    "tpu.trace_stop"() : () -> ()
    %cst_104 = arith.constant 0.0883883461 : f32
    %206 = vector.broadcast %cst_104 : f32 to vector<4x8x8xf32>
    %207 = arith.mulf %205, %206 : vector<4x8x8xf32>
    %208 = vector.broadcast %1 : vector<4x1x8xf32> to vector<4x8x8xf32>
    %209 = arith.addf %207, %208 : vector<4x8x8xf32>
    %cst_105 = arith.constant dense<0xFF800000> : vector<4x8xf32>
    %210 = vector.multi_reduction <maximumf>, %209, %cst_105 [2] : vector<4x8x8xf32> to vector<4x8xf32>
    %211 = vector.shape_cast %210 : vector<4x8xf32> to vector<4x8x1xf32>
    %212 = vector.broadcast %211 : vector<4x8x1xf32> to vector<4x8x8xf32>
    %213 = arith.subf %209, %212 : vector<4x8x8xf32>
    %214 = math.exp %213 : vector<4x8x8xf32>
    %cst_106 = arith.constant dense<0.000000e+00> : vector<4x8xf32>
    %215 = vector.multi_reduction <add>, %214, %cst_106 [2] : vector<4x8x8xf32> to vector<4x8xf32>
    %216 = vector.shape_cast %215 : vector<4x8xf32> to vector<4x8x1xf32>
    %217 = tpu.reciprocal %216 {approx = true} : vector<4x8x1xf32> -> vector<4x8x1xf32>
    %218 = vector.broadcast %217 : vector<4x8x1xf32> to vector<4x8x8xf32>
    %219 = arith.mulf %214, %218 : vector<4x8x8xf32>
    "tpu.trace_start"() <{level = 10 : i32, message = "bqk,bkd->bqd"}> : () -> ()
    %cst_107 = arith.constant dense<0.000000e+00> : vector<4x8x128xf32>
    %220 = tpu.matmul %219, %204, %cst_107 {dimension_numbers = #tpu.dot_dimension_numbers<[2], [1], [1], [2], [0, 0, 0, 1, 1, 2], [0], [0]>} : vector<4x8x8xf32>, vector<4x8x128xf32>, vector<4x8x128xf32> -> vector<4x8x128xf32>
    "tpu.trace_stop"() : () -> ()
    %221 = vector.shape_cast %220 : vector<4x8x128xf32> to vector<2x2x8x128xf32>
    %222 = vector.extract_strided_slice %221 {offsets = [0, 0, 0, 0], sizes = [1, 2, 8, 128], strides = [1, 1, 1, 1]} : vector<2x2x8x128xf32> to vector<1x2x8x128xf32>
    %223 = vector.shape_cast %222 : vector<1x2x8x128xf32> to vector<2x8x128xf32>
    %224 = vector.shape_cast %223 : vector<2x8x128xf32> to vector<16x128xf32>
    %225 = vector.extract_strided_slice %221 {offsets = [1, 0, 0, 0], sizes = [1, 2, 8, 128], strides = [1, 1, 1, 1]} : vector<2x2x8x128xf32> to vector<1x2x8x128xf32>
    %226 = vector.shape_cast %225 : vector<1x2x8x128xf32> to vector<2x8x128xf32>
    %227 = vector.shape_cast %226 : vector<2x8x128xf32> to vector<16x128xf32>
    %228 = tpu.concatenate %224, %227 in 1 : vector<16x128xf32>, vector<16x128xf32> -> vector<16x256xf32>
    %229 = arith.truncf %228 : vector<16x256xf32> to vector<16x256xbf16>
    %cst_108 = arith.constant dense<0.000000e+00> : vector<16x256xf32>
    %230 = tpu.matmul %229, %145, %cst_108 {dimension_numbers = #tpu.dot_dimension_numbers<[1], [0], [0], [1], [0, 0, 1, 1], [], []>} : vector<16x256xbf16>, vector<256x256xbf16>, vector<16x256xf32> -> vector<16x256xf32>
    %231 = vector.broadcast %147 : vector<1x256xf32> to vector<16x256xf32>
    %232 = arith.addf %230, %231 : vector<16x256xf32>
    %233 = arith.addf %139, %232 : vector<16x256xf32>
    %cst_109 = arith.constant dense<0.000000e+00> : vector<16xf32>
    %234 = vector.multi_reduction <add>, %233, %cst_109 [1] : vector<16x256xf32> to vector<16xf32>
    %235 = vector.shape_cast %234 : vector<16xf32> to vector<16x1xf32>
    %cst_110 = arith.constant 2.560000e+02 : f32
    %236 = vector.broadcast %cst_110 : f32 to vector<16x1xf32>
    %237 = arith.divf %235, %236 : vector<16x1xf32>
    %238 = vector.broadcast %237 : vector<16x1xf32> to vector<16x256xf32>
    %239 = arith.subf %233, %238 : vector<16x256xf32>
    %240 = arith.mulf %239, %239 : vector<16x256xf32>
    %cst_111 = arith.constant dense<0.000000e+00> : vector<16xf32>
    %241 = vector.multi_reduction <add>, %240, %cst_111 [1] : vector<16x256xf32> to vector<16xf32>
    %242 = vector.shape_cast %241 : vector<16xf32> to vector<16x1xf32>
    %cst_112 = arith.constant 2.560000e+02 : f32
    %243 = vector.broadcast %cst_112 : f32 to vector<16x1xf32>
    %244 = arith.divf %242, %243 : vector<16x1xf32>
    %245 = vector.broadcast %237 : vector<16x1xf32> to vector<16x256xf32>
    %246 = arith.subf %233, %245 : vector<16x256xf32>
    %cst_113 = arith.constant 9.99999974E-6 : f32
    %247 = vector.broadcast %cst_113 : f32 to vector<16x1xf32>
    %248 = arith.addf %244, %247 : vector<16x1xf32>
    %249 = math.rsqrt %248 : vector<16x1xf32>
    %250 = vector.broadcast %249 : vector<16x1xf32> to vector<16x256xf32>
    %251 = arith.mulf %246, %250 : vector<16x256xf32>
    %252 = vector.broadcast %153 : vector<1x256xf32> to vector<16x256xf32>
    %253 = arith.mulf %251, %252 : vector<16x256xf32>
    %254 = vector.broadcast %155 : vector<1x256xf32> to vector<16x256xf32>
    %255 = arith.addf %253, %254 : vector<16x256xf32>
    %256 = arith.truncf %255 : vector<16x256xf32> to vector<16x256xbf16>
    %cst_114 = arith.constant dense<0.000000e+00> : vector<16x512xf32>
    %257 = tpu.matmul %256, %157, %cst_114 {dimension_numbers = #tpu.dot_dimension_numbers<[1], [0], [0], [1], [0, 0, 1, 1], [], []>} : vector<16x256xbf16>, vector<256x512xbf16>, vector<16x512xf32> -> vector<16x512xf32>
    %258 = vector.broadcast %159 : vector<1x512xf32> to vector<16x512xf32>
    %259 = arith.addf %257, %258 : vector<16x512xf32>
    %cst_115 = arith.constant 5.000000e-01 : f32
    %260 = vector.broadcast %cst_115 : f32 to vector<16x512xf32>
    %261 = arith.mulf %260, %259 : vector<16x512xf32>
    %cst_116 = arith.constant 4.471500e-02 : f32
    %262 = vector.broadcast %cst_116 : f32 to vector<16x512xf32>
    %263 = arith.mulf %262, %259 : vector<16x512xf32>
    %264 = arith.mulf %263, %259 : vector<16x512xf32>
    %265 = arith.mulf %264, %259 : vector<16x512xf32>
    %266 = arith.addf %259, %265 : vector<16x512xf32>
    %cst_117 = arith.constant 0.797884583 : f32
    %267 = vector.broadcast %cst_117 : f32 to vector<16x512xf32>
    %268 = arith.mulf %267, %266 : vector<16x512xf32>
    %269 = math.tanh %268 : vector<16x512xf32>
    %cst_118 = arith.constant 1.000000e+00 : f32
    %270 = vector.broadcast %cst_118 : f32 to vector<16x512xf32>
    %271 = arith.addf %270, %269 : vector<16x512xf32>
    %272 = arith.mulf %261, %271 : vector<16x512xf32>
    %273 = arith.truncf %272 : vector<16x512xf32> to vector<16x512xbf16>
    %cst_119 = arith.constant dense<0.000000e+00> : vector<16x256xf32>
    %274 = tpu.matmul %273, %161, %cst_119 {dimension_numbers = #tpu.dot_dimension_numbers<[1], [0], [0], [1], [0, 0, 1, 1], [], []>} : vector<16x512xbf16>, vector<512x256xbf16>, vector<16x256xf32> -> vector<16x256xf32>
    %275 = vector.broadcast %163 : vector<1x256xf32> to vector<16x256xf32>
    %276 = arith.addf %274, %275 : vector<16x256xf32>
    %277 = arith.addf %233, %276 : vector<16x256xf32>
    %c0_120 = arith.constant 0 : index
    %c0_121 = arith.constant 0 : index
    %278 = vector.load %arg14[%c0_120, %c0_121] : memref<16x256xf32, #tpu.memory_space<vmem>>, vector<16x256xf32>
    tpu.vector_store %arg14[%c0_120, %c0_121], %277 {strides = array<i32>} : memref<16x256xf32, #tpu.memory_space<vmem>>, vector<16x256xf32>,
    return
  }
}

</mosaic_0001>

<llo_original>
// kernel: tpu_custom_call.1
$region0: #{tpu_custom_call.1}
  #allocation0 [shape = 'u32[]', space=smem, size = 0x4, offset = 0x4, fixed_abs, tag = 'smem constant byte address 0x4 - core index']
  #allocation1 [shape = 'u32[72,128]{1,0:T(1,128)}', space=vmem, size = 0x9000, scoped, tag = 'internal scratch']
  %s0 = inlined_call_operand.hbm [shape: f32[16,256], index: 0, kind: input, shape index: {}]
  %s1 = inlined_call_operand.hbm [shape: f32[4,1,8], index: 1, kind: input, shape index: {}]
  %s2 = inlined_call_operand.hbm [shape: bf16[2,256,768], index: 2, kind: input, shape index: {}]
  %s3 = inlined_call_operand.hbm [shape: f32[2,1,768], index: 3, kind: input, shape index: {}]
  %s4 = inlined_call_operand.hbm [shape: bf16[2,256,256], index: 4, kind: input, shape index: {}]
  %s5 = inlined_call_operand.hbm [shape: f32[2,1,256], index: 5, kind: input, shape index: {}]
  %s6 = inlined_call_operand.hbm [shape: f32[2,1,256], index: 6, kind: input, shape index: {}]
  %s7 = inlined_call_operand.hbm [shape: f32[2,1,256], index: 7, kind: input, shape index: {}]
  %s8 = inlined_call_operand.hbm [shape: f32[2,1,256], index: 8, kind: input, shape index: {}]
  %s9 = inlined_call_operand.hbm [shape: f32[2,1,256], index: 9, kind: input, shape index: {}]
  %s10 = inlined_call_operand.hbm [shape: bf16[2,256,512], index: 10, kind: input, shape index: {}]
  %s11 = inlined_call_operand.vmem [shape: f32[2,1,512], index: 11, kind: input, shape index: {}]
  %s12 = inlined_call_operand.hbm [shape: bf16[2,512,256], index: 12, kind: input, shape index: {}]
  %s13 = inlined_call_operand.vmem [shape: f32[2,1,256], index: 13, kind: input, shape index: {}]
  %s14 = inlined_call_operand.hbm [shape: f32[16,256], index: 14, kind: output, shape index: {}]
  %s15 = sld [smem:[#allocation0]]
  $region114: #{tpu_custom_call.1} parent=0
    _
  %s17 = ssub.s32 1, %s15
  %s18 = scalar_select 0, %s17, %s15
  $region1: #{tpu_custom_call.1} parent=0
    #allocation2 [shape = 'u8[16384]{0}', space=vmem, size = 0x4000, scoped, tag = 'input window, operand 0, single buffered']
    #allocation3 [shape = 's32[1]{0}', space=sflag, size = 0x4, scoped, tag = 'scoped memory for tpu_custom_call.1']
    #allocation4 [shape = 's32[1]{0}', space=sflag, size = 0x4, scoped, tag = 'scoped memory for tpu_custom_call.1']
    #allocation5 [shape = 'u8[2048]{0}', space=vmem, size = 0x800, scoped, tag = 'input window, operand 1, single buffered']
    #allocation6 [shape = 's32[1]{0}', space=sflag, size = 0x4, scoped, tag = 'scoped memory for tpu_custom_call.1']
    #allocation7 [shape = 'u8[786432]{0}', space=vmem, size = 0xc0000, scoped, tag = 'input window, operand 2, single buffered']
    #allocation8 [shape = 'u8[6144]{0}', space=vmem, size = 0x1800, scoped, tag = 'input window, operand 3, single buffered']
    #allocation9 [shape = 's32[1]{0}', space=sflag, size = 0x4, scoped, tag = 'scoped memory for tpu_custom_call.1']
    #allocation10 [shape = 'u8[262144]{0}', space=vmem, size = 0x40000, scoped, tag = 'input window, operand 4, single buffered']
    #allocation11 [shape = 'u8[2048]{0}', space=vmem, size = 0x800, scoped, tag = 'input window, operand 5, single buffered']
    #allocation12 [shape = 's32[1]{0}', space=sflag, size = 0x4, scoped, tag = 'scoped memory for tpu_custom_call.1']
    #allocation13 [shape = 'u8[2048]{0}', space=vmem, size = 0x800, scoped, tag = 'input window, operand 6, single buffered']
    #allocation14 [shape = 'u8[2048]{0}', space=vmem, size = 0x800, scoped, tag = 'input window, operand 7, single buffered']
    #allocation15 [shape = 's32[1]{0}', space=sflag, size = 0x4, scoped, tag = 'scoped memory for tpu_custom_call.1']
    #allocation16 [shape = 'u8[2048]{0}', space=vmem, size = 0x800, scoped, tag = 'input window, operand 8, single buffered']
    #allocation17 [shape = 'u8[2048]{0}', space=vmem, size = 0x800, scoped, tag = 'input window, operand 9, single buffered']
    #allocation18 [shape = 's32[1]{0}', space=sflag, size = 0x4, scoped, tag = 'scoped memory for tpu_custom_call.1']
    #allocation19 [shape = 'u8[524288]{0}', space=vmem, size = 0x80000, scoped, tag = 'input window, operand 10, single buffered']
    #allocation20 [shape = 'u8[524288]{0}', space=vmem, size = 0x80000, scoped, tag = 'input window, operand 12, single buffered']
    #allocation21 [shape = 's32[1]{0}', space=sflag, size = 0x4, scoped, tag = 'scoped memory for tpu_custom_call.1']
    #allocation22 [shape = 'u8[16384]{0}', space=vmem, size = 0x4000, scoped, tag = 'output window, operand 0, single buffered']
    %19 = vsyncpa [#allocation3], 0
    %20 = vsyncpa [#allocation6], 0
    %21 = vsyncpa [#allocation9], 0
    %22 = vsyncpa [#allocation12], 0
    %23 = vsyncpa [#allocation15], 0
    %24 = vsyncpa [#allocation18], 0
    %25 = vsyncpa [#allocation21], 0
    %26 = vsyncpa [#allocation4], 0
    // Predicated region
    $region2: #{tpu_custom_call.1} parent=1 // pred_check
      _
    $region3: #{tpu_custom_call.1} parent=1 // pred_check_branch
      %28 = sbr.rel (0) target = $region5
    $region4: #{tpu_custom_call.1} parent=1 // pred_region
      %30 = vsyncadd [#allocation3], 0
      %s31 = sshll.u32 %s0, 4
      %s32 = int_to_ptr.hbm [resolvable:$true] %s31
      %s33 = sshll.u32 [#allocation2], 4
      %s34 = int_to_ptr.vmem [resolvable:$true] %s33
      %39 = dma.hbm_to_vmem [thread:$0]  %s32, 512, %s34, [#allocation3], 256, 256, 16
    $region5: #{tpu_custom_call.1} parent=1 // pred_fallthru
      _
    // Predicated region
    $region6: #{tpu_custom_call.1} parent=1 // pred_check
      _
    $region7: #{tpu_custom_call.1} parent=1 // pred_check_branch
      %41 = sbr.rel (0) target = $region9
    $region8: #{tpu_custom_call.1} parent=1 // pred_region
      %43 = vsyncadd [#allocation6], 0
      %s44 = sshll.u32 %s1, 4
      %s45 = int_to_ptr.hbm [resolvable:$true] %s44
      %s46 = sshll.u32 [#allocation5], 4
      %s47 = int_to_ptr.vmem [resolvable:$true] %s46
      %52 = dma.hbm_to_vmem [thread:$0]  %s45, 64, %s47, [#allocation6], 16, 16, 1
    $region9: #{tpu_custom_call.1} parent=1 // pred_fallthru
      _
    // Predicated region
    $region10: #{tpu_custom_call.1} parent=1 // pred_check
      _
    $region11: #{tpu_custom_call.1} parent=1 // pred_check_branch
      %54 = sbr.rel (0) target = $region13
    $region12: #{tpu_custom_call.1} parent=1 // pred_region
      %56 = vsyncadd [#allocation6], 0
      %s57 = sshll.u32 %s2, 4
      %s58 = int_to_ptr.hbm [resolvable:$true] %s57
      %s59 = sshll.u32 [#allocation7], 4
      %s60 = int_to_ptr.vmem [resolvable:$true] %s59
      %65 = dma.hbm_to_vmem [thread:$0]  %s58, 24576, %s60, [#allocation6], 384, 384, 24
    $region13: #{tpu_custom_call.1} parent=1 // pred_fallthru
      _
    // Predicated region
    $region14: #{tpu_custom_call.1} parent=1 // pred_check
      _
    $region15: #{tpu_custom_call.1} parent=1 // pred_check_branch
      %67 = sbr.rel (0) target = $region17
    $region16: #{tpu_custom_call.1} parent=1 // pred_region
      %69 = vsyncadd [#allocation9], 0
      %s70 = sshll.u32 %s3, 4
      %s71 = int_to_ptr.hbm [resolvable:$true] %s70
      %s72 = sshll.u32 [#allocation8], 4
      %s73 = int_to_ptr.vmem [resolvable:$true] %s72
      %78 = dma.hbm_to_vmem [thread:$0]  %s71, 192, %s73, [#allocation9], 96, 96, 6
    $region17: #{tpu_custom_call.1} parent=1 // pred_fallthru
      _
    // Predicated region
    $region18: #{tpu_custom_call.1} parent=1 // pred_check
      _
    $region19: #{tpu_custom_call.1} parent=1 // pred_check_branch
      %80 = sbr.rel (0) target = $region21
    $region20: #{tpu_custom_call.1} parent=1 // pred_region
      %82 = vsyncadd [#allocation9], 0
      %s83 = sshll.u32 %s4, 4
      %s84 = int_to_ptr.hbm [resolvable:$true] %s83
      %s85 = sshll.u32 [#allocation10], 4
      %s86 = int_to_ptr.vmem [resolvable:$true] %s85
      %91 = dma.hbm_to_vmem [thread:$0]  %s84, 8192, %s86, [#allocation9], 128, 128, 8
    $region21: #{tpu_custom_call.1} parent=1 // pred_fallthru
      _
    // Predicated region
    $region22: #{tpu_custom_call.1} parent=1 // pred_check
      _
    $region23: #{tpu_custom_call.1} parent=1 // pred_check_branch
      %93 = sbr.rel (0) target = $region25
    $region24: #{tpu_custom_call.1} parent=1 // pred_region
      %95 = vsyncadd [#allocation12], 0
      %s96 = sshll.u32 %s5, 4
      %s97 = int_to_ptr.hbm [resolvable:$true] %s96
      %s98 = sshll.u32 [#allocation11], 4
      %s99 = int_to_ptr.vmem [resolvable:$true] %s98
      %104 = dma.hbm_to_vmem [thread:$0]  %s97, 64, %s99, [#allocation12], 32, 32, 2
    $region25: #{tpu_custom_call.1} parent=1 // pred_fallthru
      _
    // Predicated region
    $region26: #{tpu_custom_call.1} parent=1 // pred_check
      _
    $region27: #{tpu_custom_call.1} parent=1 // pred_check_branch
      %106 = sbr.rel (0) target = $region29
    $region28: #{tpu_custom_call.1} parent=1 // pred_region
      %108 = vsyncadd [#allocation12], 0
      %s109 = sshll.u32 %s6, 4
      %s110 = int_to_ptr.hbm [resolvable:$true] %s109
      %s111 = sshll.u32 [#allocation13], 4
      %s112 = int_to_ptr.vmem [resolvable:$true] %s111
      %117 = dma.hbm_to_vmem [thread:$0]  %s110, 64, %s112, [#allocation12], 32, 32, 2
    $region29: #{tpu_custom_call.1} parent=1 // pred_fallthru
      _
    // Predicated region
    $region30: #{tpu_custom_call.1} parent=1 // pred_check
      _
    $region31: #{tpu_custom_call.1} parent=1 // pred_check_branch
      %119 = sbr.rel (0) target = $region33
    $region32: #{tpu_custom_call.1} parent=1 // pred_region
      %121 = vsyncadd [#allocation15], 0
      %s122 = sshll.u32 %s7, 4
      %s123 = int_to_ptr.hbm [resolvable:$true] %s122
      %s124 = sshll.u32 [#allocation14], 4
      %s125 = int_to_ptr.vmem [resolvable:$true] %s124
      %130 = dma.hbm_to_vmem [thread:$0]  %s123, 64, %s125, [#allocation15], 32, 32, 2
    $region33: #{tpu_custom_call.1} parent=1 // pred_fallthru
      _
    // Predicated region
    $region34: #{tpu_custom_call.1} parent=1 // pred_check
      _
    $region35: #{tpu_custom_call.1} parent=1 // pred_check_branch
      %132 = sbr.rel (0) target = $region37
    $region36: #{tpu_custom_call.1} parent=1 // pred_region
      %134 = vsyncadd [#allocation15], 0
      %s135 = sshll.u32 %s8, 4
      %s136 = int_to_ptr.hbm [resolvable:$true] %s135
      %s137 = sshll.u32 [#allocation16], 4
      %s138 = int_to_ptr.vmem [resolvable:$true] %s137
      %143 = dma.hbm_to_vmem [thread:$0]  %s136, 64, %s138, [#allocation15], 32, 32, 2
    $region37: #{tpu_custom_call.1} parent=1 // pred_fallthru
      _
    // Predicated region
    $region38: #{tpu_custom_call.1} parent=1 // pred_check
      _
    $region39: #{tpu_custom_call.1} parent=1 // pred_check_branch
      %145 = sbr.rel (0) target = $region41
    $region40: #{tpu_custom_call.1} parent=1 // pred_region
      %147 = vsyncadd [#allocation18], 0
      %s148 = sshll.u32 %s9, 4
      %s149 = int_to_ptr.hbm [resolvable:$true] %s148
      %s150 = sshll.u32 [#allocation17], 4
      %s151 = int_to_ptr.vmem [resolvable:$true] %s150
      %156 = dma.hbm_to_vmem [thread:$0]  %s149, 64, %s151, [#allocation18], 32, 32, 2
    $region41: #{tpu_custom_call.1} parent=1 // pred_fallthru
      _
    // Predicated region
    $region42: #{tpu_custom_call.1} parent=1 // pred_check
      _
    $region43: #{tpu_custom_call.1} parent=1 // pred_check_branch
      %158 = sbr.rel (0) target = $region45
    $region44: #{tpu_custom_call.1} parent=1 // pred_region
      %160 = vsyncadd [#allocation18], 0
      %s161 = sshll.u32 %s10, 4
      %s162 = int_to_ptr.hbm [resolvable:$true] %s161
      %s163 = sshll.u32 [#allocation19], 4
      %s164 = int_to_ptr.vmem [resolvable:$true] %s163
      %169 = dma.hbm_to_vmem [thread:$0]  %s162, 16384, %s164, [#allocation18], 256, 256, 16
    $region45: #{tpu_custom_call.1} parent=1 // pred_fallthru
      _
    // Predicated region
    $region46: #{tpu_custom_call.1} parent=1 // pred_check
      _
    $region47: #{tpu_custom_call.1} parent=1 // pred_check_branch
      %171 = sbr.rel (0) target = $region49
    $region48: #{tpu_custom_call.1} parent=1 // pred_region
      _
    $region49: #{tpu_custom_call.1} parent=1 // pred_fallthru
      _
    // Predicated region
    $region50: #{tpu_custom_call.1} parent=1 // pred_check
      _
    $region51: #{tpu_custom_call.1} parent=1 // pred_check_branch
      %173 = sbr.rel (0) target = $region53
    $region52: #{tpu_custom_call.1} parent=1 // pred_region
      %175 = vsyncadd [#allocation21], 0
      %s176 = sshll.u32 %s12, 4
      %s177 = int_to_ptr.hbm [resolvable:$true] %s176
      %s178 = sshll.u32 [#allocation20], 4
      %s179 = int_to_ptr.vmem [resolvable:$true] %s178
      %184 = dma.hbm_to_vmem [thread:$0]  %s177, 16384, %s179, [#allocation21], 128, 128, 8
    $region53: #{tpu_custom_call.1} parent=1 // pred_fallthru
      _
    // Predicated region
    $region54: #{tpu_custom_call.1} parent=1 // pred_check
      _
    $region55: #{tpu_custom_call.1} parent=1 // pred_check_branch
      %186 = sbr.rel (0) target = $region57
    $region56: #{tpu_custom_call.1} parent=1 // pred_region
      _
    $region57: #{tpu_custom_call.1} parent=1 // pred_fallthru
      _
    // Predicated region
    $region58: #{tpu_custom_call.1} parent=1 // pred_check
      _
    $region59: #{tpu_custom_call.1} parent=1 // pred_check_branch
      %188 = sbr.rel (0) target = $region61
    $region60: #{tpu_custom_call.1} parent=1 // pred_region
      %190 = dma.done [#allocation3], 512
    $region61: #{tpu_custom_call.1} parent=1 // pred_fallthru
      _
    // Predicated region
    $region62: #{tpu_custom_call.1} parent=1 // pred_check
      _
    $region63: #{tpu_custom_call.1} parent=1 // pred_check_branch
      %192 = sbr.rel (0) target = $region65
    $region64: #{tpu_custom_call.1} parent=1 // pred_region
      %194 = dma.done [#allocation6], 64
    $region65: #{tpu_custom_call.1} parent=1 // pred_fallthru
      _
    // Predicated region
    $region66: #{tpu_custom_call.1} parent=1 // pred_check
      _
    $region67: #{tpu_custom_call.1} parent=1 // pred_check_branch
      %196 = sbr.rel (0) target = $region69
    $region68: #{tpu_custom_call.1} parent=1 // pred_region
      %198 = dma.done [#allocation6], 24576
    $region69: #{tpu_custom_call.1} parent=1 // pred_fallthru
      _
    // Predicated region
    $region70: #{tpu_custom_call.1} parent=1 // pred_check
      _
    $region71: #{tpu_custom_call.1} parent=1 // pred_check_branch
      %200 = sbr.rel (0) target = $region73
    $region72: #{tpu_custom_call.1} parent=1 // pred_region
      %202 = dma.done [#allocation9], 192
    $region73: #{tpu_custom_call.1} parent=1 // pred_fallthru
      _
    // Predicated region
    $region74: #{tpu_custom_call.1} parent=1 // pred_check
      _
    $region75: #{tpu_custom_call.1} parent=1 // pred_check_branch
      %204 = sbr.rel (0) target = $region77
    $region76: #{tpu_custom_call.1} parent=1 // pred_region
      %206 = dma.done [#allocation9], 8192
    $region77: #{tpu_custom_call.1} parent=1 // pred_fallthru
      _
    // Predicated region
    $region78: #{tpu_custom_call.1} parent=1 // pred_check
      _
    $region79: #{tpu_custom_call.1} parent=1 // pred_check_branch
      %208 = sbr.rel (0) target = $region81
    $region80: #{tpu_custom_call.1} parent=1 // pred_region
      %210 = dma.done [#allocation12], 64
    $region81: #{tpu_custom_call.1} parent=1 // pred_fallthru
      _
    // Predicated region
    $region82: #{tpu_custom_call.1} parent=1 // pred_check
      _
    $region83: #{tpu_custom_call.1} parent=1 // pred_check_branch
      %212 = sbr.rel (0) target = $region85
    $region84: #{tpu_custom_call.1} parent=1 // pred_region
      %214 = dma.done [#allocation12], 64
    $region85: #{tpu_custom_call.1} parent=1 // pred_fallthru
      _
    // Predicated region
    $region86: #{tpu_custom_call.1} parent=1 // pred_check
      _
    $region87: #{tpu_custom_call.1} parent=1 // pred_check_branch
      %216 = sbr.rel (0) target = $region89
    $region88: #{tpu_custom_call.1} parent=1 // pred_region
      %218 = dma.done [#allocation15], 64
    $region89: #{tpu_custom_call.1} parent=1 // pred_fallthru
      _
    // Predicated region
    $region90: #{tpu_custom_call.1} parent=1 // pred_check
      _
    $region91: #{tpu_custom_call.1} parent=1 // pred_check_branch
      %220 = sbr.rel (0) target = $region93
    $region92: #{tpu_custom_call.1} parent=1 // pred_region
      %222 = dma.done [#allocation15], 64
    $region93: #{tpu_custom_call.1} parent=1 // pred_fallthru
      _
    // Predicated region
    $region94: #{tpu_custom_call.1} parent=1 // pred_check
      _
    $region95: #{tpu_custom_call.1} parent=1 // pred_check_branch
      %224 = sbr.rel (0) target = $region97
    $region96: #{tpu_custom_call.1} parent=1 // pred_region
      %226 = dma.done [#allocation18], 64
    $region97: #{tpu_custom_call.1} parent=1 // pred_fallthru
      _
    // Predicated region
    $region98: #{tpu_custom_call.1} parent=1 // pred_check
      _
    $region99: #{tpu_custom_call.1} parent=1 // pred_check_branch
      %228 = sbr.rel (0) target = $region101
    $region100: #{tpu_custom_call.1} parent=1 // pred_region
      %230 = dma.done [#allocation18], 16384
    $region101: #{tpu_custom_call.1} parent=1 // pred_fallthru
      _
    // Predicated region
    $region102: #{tpu_custom_call.1} parent=1 // pred_check
      _
    $region103: #{tpu_custom_call.1} parent=1 // pred_check_branch
      %232 = sbr.rel (0) target = $region105
    $region104: #{tpu_custom_call.1} parent=1 // pred_region
      %234 = dma.done [#allocation21], 16384
    $region105: #{tpu_custom_call.1} parent=1 // pred_fallthru
      _
    %v235 = vld [vmem:[#allocation2] sm:$0xff]
    %v236 = vld [vmem:[#allocation2 + $0x8] sm:$0xff]
    %v237 = vld [vmem:[#allocation2 + $0x10] sm:$0xff]
    %v238 = vld [vmem:[#allocation2 + $0x18] sm:$0xff]
    %v239 = vld [vmem:[#allocation5] sm:$0x1]
    %v240 = vld [vmem:[#allocation5 + $0x1] sm:$0x1]
    %v241 = vld [vmem:[#allocation5 + $0x2] sm:$0x1]
    %v242 = vld [vmem:[#allocation5 + $0x3] sm:$0x1]
    %v243 = vld [vmem:[#allocation7] sm:$0xff]
    %v244 = vld [vmem:[#allocation7 + $0x8] sm:$0xff]
    %v245 = vld [vmem:[#allocation7 + $0x10] sm:$0xff]
    %v246 = vld [vmem:[#allocation7 + $0x18] sm:$0xff]
    %v247 = vld [vmem:[#allocation7 + $0x20] sm:$0xff]
    %v248 = vld [vmem:[#allocation7 + $0x28] sm:$0xff]
    %v249 = vld [vmem:[#allocation7 + $0x30] sm:$0xff]
    %v250 = vld [vmem:[#allocation7 + $0x38] sm:$0xff]
    %v251 = vld [vmem:[#allocation7 + $0x40] sm:$0xff]
    %v252 = vld [vmem:[#allocation7 + $0x48] sm:$0xff]
    %v253 = vld [vmem:[#allocation7 + $0x50] sm:$0xff]
    %v254 = vld [vmem:[#allocation7 + $0x58] sm:$0xff]
    %v255 = vld [vmem:[#allocation7 + $0x60] sm:$0xff]
    %v256 = vld [vmem:[#allocation7 + $0x68] sm:$0xff]
    %v257 = vld [vmem:[#allocation7 + $0x70] sm:$0xff]
    %v258 = vld [vmem:[#allocation7 + $0x78] sm:$0xff]
    %v259 = vld [vmem:[#allocation7 + $0x80] sm:$0xff]
    %v260 = vld [vmem:[#allocation7 + $0x88] sm:$0xff]
    %v261 = vld [vmem:[#allocation7 + $0x90] sm:$0xff]
    %v262 = vld [vmem:[#allocation7 + $0x98] sm:$0xff]
    %v263 = vld [vmem:[#allocation7 + $0xa0] sm:$0xff]
    %v264 = vld [vmem:[#allocation7 + $0xa8] sm:$0xff]
    %v265 = vld [vmem:[#allocation7 + $0xb0] sm:$0xff]
    %v266 = vld [vmem:[#allocation7 + $0xb8] sm:$0xff]
    %v267 = vld [vmem:[#allocation7 + $0xc0] sm:$0xff]
    %v268 = vld [vmem:[#allocation7 + $0xc8] sm:$0xff]
    %v269 = vld [vmem:[#allocation7 + $0xd0] sm:$0xff]
    %v270 = vld [vmem:[#allocation7 + $0xd8] sm:$0xff]
    %v271 = vld [vmem:[#allocation7 + $0xe0] sm:$0xff]
    %v272 = vld [vmem:[#allocation7 + $0xe8] sm:$0xff]
    %v273 = vld [vmem:[#allocation7 + $0xf0] sm:$0xff]
    %v274 = vld [vmem:[#allocation7 + $0xf8] sm:$0xff]
    %v275 = vld [vmem:[#allocation7 + $0x100] sm:$0xff]
    %v276 = vld [vmem:[#allocation7 + $0x108] sm:$0xff]
    %v277 = vld [vmem:[#allocation7 + $0x110] sm:$0xff]
    %v278 = vld [vmem:[#allocation7 + $0x118] sm:$0xff]
    %v279 = vld [vmem:[#allocation7 + $0x120] sm:$0xff]
    %v280 = vld [vmem:[#allocation7 + $0x128] sm:$0xff]
    %v281 = vld [vmem:[#allocation7 + $0x130] sm:$0xff]
    %v282 = vld [vmem:[#allocation7 + $0x138] sm:$0xff]
    %v283 = vld [vmem:[#allocation7 + $0x140] sm:$0xff]
    %v284 = vld [vmem:[#allocation7 + $0x148] sm:$0xff]
    %v285 = vld [vmem:[#allocation7 + $0x150] sm:$0xff]
    %v286 = vld [vmem:[#allocation7 + $0x158] sm:$0xff]
    %v287 = vld [vmem:[#allocation7 + $0x160] sm:$0xff]
    %v288 = vld [vmem:[#allocation7 + $0x168] sm:$0xff]
    %v289 = vld [vmem:[#allocation7 + $0x170] sm:$0xff]
    %v290 = vld [vmem:[#allocation7 + $0x178] sm:$0xff]
    %v291 = vld [vmem:[#allocation7 + $0x180] sm:$0xff]
    %v292 = vld [vmem:[#allocation7 + $0x188] sm:$0xff]
    %v293 = vld [vmem:[#allocation7 + $0x190] sm:$0xff]
    %v294 = vld [vmem:[#allocation7 + $0x198] sm:$0xff]
    %v295 = vld [vmem:[#allocation7 + $0x1a0] sm:$0xff]
    %v296 = vld [vmem:[#allocation7 + $0x1a8] sm:$0xff]
    %v297 = vld [vmem:[#allocation7 + $0x1b0] sm:$0xff]
    %v298 = vld [vmem:[#allocation7 + $0x1b8] sm:$0xff]
    %v299 = vld [vmem:[#allocation7 + $0x1c0] sm:$0xff]
    %v300 = vld [vmem:[#allocation7 + $0x1c8] sm:$0xff]
    %v301 = vld [vmem:[#allocation7 + $0x1d0] sm:$0xff]
    %v302 = vld [vmem:[#allocation7 + $0x1d8] sm:$0xff]
    %v303 = vld [vmem:[#allocation7 + $0x1e0] sm:$0xff]
    %v304 = vld [vmem:[#allocation7 + $0x1e8] sm:$0xff]
    %v305 = vld [vmem:[#allocation7 + $0x1f0] sm:$0xff]
    %v306 = vld [vmem:[#allocation7 + $0x1f8] sm:$0xff]
    %v307 = vld [vmem:[#allocation7 + $0x200] sm:$0xff]
    %v308 = vld [vmem:[#allocation7 + $0x208] sm:$0xff]
    %v309 = vld [vmem:[#allocation7 + $0x210] sm:$0xff]
    %v310 = vld [vmem:[#allocation7 + $0x218] sm:$0xff]
    %v311 = vld [vmem:[#allocation7 + $0x220] sm:$0xff]
    %v312 = vld [vmem:[#allocation7 + $0x228] sm:$0xff]
    %v313 = vld [vmem:[#allocation7 + $0x230] sm:$0xff]
    %v314 = vld [vmem:[#allocation7 + $0x238] sm:$0xff]
    %v315 = vld [vmem:[#allocation7 + $0x240] sm:$0xff]
    %v316 = vld [vmem:[#allocation7 + $0x248] sm:$0xff]
    %v317 = vld [vmem:[#allocation7 + $0x250] sm:$0xff]
    %v318 = vld [vmem:[#allocation7 + $0x258] sm:$0xff]
    %v319 = vld [vmem:[#allocation7 + $0x260] sm:$0xff]
    %v320 = vld [vmem:[#allocation7 + $0x268] sm:$0xff]
    %v321 = vld [vmem:[#allocation7 + $0x270] sm:$0xff]
    %v322 = vld [vmem:[#allocation7 + $0x278] sm:$0xff]
    %v323 = vld [vmem:[#allocation7 + $0x280] sm:$0xff]
    %v324 = vld [vmem:[#allocation7 + $0x288] sm:$0xff]
    %v325 = vld [vmem:[#allocation7 + $0x290] sm:$0xff]
    %v326 = vld [vmem:[#allocation7 + $0x298] sm:$0xff]
    %v327 = vld [vmem:[#allocation7 + $0x2a0] sm:$0xff]
    %v328 = vld [vmem:[#allocation7 + $0x2a8] sm:$0xff]
    %v329 = vld [vmem:[#allocation7 + $0x2b0] sm:$0xff]
    %v330 = vld [vmem:[#allocation7 + $0x2b8] sm:$0xff]
    %v331 = vld [vmem:[#allocation7 + $0x2c0] sm:$0xff]
    %v332 = vld [vmem:[#allocation7 + $0x2c8] sm:$0xff]
    %v333 = vld [vmem:[#allocation7 + $0x2d0] sm:$0xff]
    %v334 = vld [vmem:[#allocation7 + $0x2d8] sm:$0xff]
    %v335 = vld [vmem:[#allocation7 + $0x2e0] sm:$0xff]
    %v336 = vld [vmem:[#allocation7 + $0x2e8] sm:$0xff]
    %v337 = vld [vmem:[#allocation7 + $0x2f0] sm:$0xff]
    %v338 = vld [vmem:[#allocation7 + $0x2f8] sm:$0xff]
    %v339 = vld [vmem:[#allocation8] sm:$0x3f]
    %v340 = vld [vmem:[#allocation10] sm:$0xff]
    %v341 = vld [vmem:[#allocation10 + $0x8] sm:$0xff]
    %v342 = vld [vmem:[#allocation10 + $0x10] sm:$0xff]
    %v343 = vld [vmem:[#allocation10 + $0x18] sm:$0xff]
    %v344 = vld [vmem:[#allocation10 + $0x20] sm:$0xff]
    %v345 = vld [vmem:[#allocation10 + $0x28] sm:$0xff]
    %v346 = vld [vmem:[#allocation10 + $0x30] sm:$0xff]
    %v347 = vld [vmem:[#allocation10 + $0x38] sm:$0xff]
    %v348 = vld [vmem:[#allocation10 + $0x40] sm:$0xff]
    %v349 = vld [vmem:[#allocation10 + $0x48] sm:$0xff]
    %v350 = vld [vmem:[#allocation10 + $0x50] sm:$0xff]
    %v351 = vld [vmem:[#allocation10 + $0x58] sm:$0xff]
    %v352 = vld [vmem:[#allocation10 + $0x60] sm:$0xff]
    %v353 = vld [vmem:[#allocation10 + $0x68] sm:$0xff]
    %v354 = vld [vmem:[#allocation10 + $0x70] sm:$0xff]
    %v355 = vld [vmem:[#allocation10 + $0x78] sm:$0xff]
    %v356 = vld [vmem:[#allocation10 + $0x80] sm:$0xff]
    %v357 = vld [vmem:[#allocation10 + $0x88] sm:$0xff]
    %v358 = vld [vmem:[#allocation10 + $0x90] sm:$0xff]
    %v359 = vld [vmem:[#allocation10 + $0x98] sm:$0xff]
    %v360 = vld [vmem:[#allocation10 + $0xa0] sm:$0xff]
    %v361 = vld [vmem:[#allocation10 + $0xa8] sm:$0xff]
    %v362 = vld [vmem:[#allocation10 + $0xb0] sm:$0xff]
    %v363 = vld [vmem:[#allocation10 + $0xb8] sm:$0xff]
    %v364 = vld [vmem:[#allocation10 + $0xc0] sm:$0xff]
    %v365 = vld [vmem:[#allocation10 + $0xc8] sm:$0xff]
    %v366 = vld [vmem:[#allocation10 + $0xd0] sm:$0xff]
    %v367 = vld [vmem:[#allocation10 + $0xd8] sm:$0xff]
    %v368 = vld [vmem:[#allocation10 + $0xe0] sm:$0xff]
    %v369 = vld [vmem:[#allocation10 + $0xe8] sm:$0xff]
    %v370 = vld [vmem:[#allocation10 + $0xf0] sm:$0xff]
    %v371 = vld [vmem:[#allocation10 + $0xf8] sm:$0xff]
    %v372 = vld [vmem:[#allocation11] sm:$0x3]
    %v373 = vld [vmem:[#allocation13] sm:$0x3]
    %v374 = vld [vmem:[#allocation14] sm:$0x3]
    %v375 = vld [vmem:[#allocation16] sm:$0x3]
    %v376 = vld [vmem:[#allocation17] sm:$0x3]
    %v377 = vld [vmem:[#allocation19] sm:$0xff]
    %v378 = vld [vmem:[#allocation19 + $0x8] sm:$0xff]
    %v379 = vld [vmem:[#allocation19 + $0x10] sm:$0xff]
    %v380 = vld [vmem:[#allocation19 + $0x18] sm:$0xff]
    %v381 = vld [vmem:[#allocation19 + $0x20] sm:$0xff]
    %v382 = vld [vmem:[#allocation19 + $0x28] sm:$0xff]
    %v383 = vld [vmem:[#allocation19 + $0x30] sm:$0xff]
    %v384 = vld [vmem:[#allocation19 + $0x38] sm:$0xff]
    %v385 = vld [vmem:[#allocation19 + $0x40] sm:$0xff]
    %v386 = vld [vmem:[#allocation19 + $0x48] sm:$0xff]
    %v387 = vld [vmem:[#allocation19 + $0x50] sm:$0xff]
    %v388 = vld [vmem:[#allocation19 + $0x58] sm:$0xff]
    %v389 = vld [vmem:[#allocation19 + $0x60] sm:$0xff]
    %v390 = vld [vmem:[#allocation19 + $0x68] sm:$0xff]
    %v391 = vld [vmem:[#allocation19 + $0x70] sm:$0xff]
    %v392 = vld [vmem:[#allocation19 + $0x78] sm:$0xff]
    %v393 = vld [vmem:[#allocation19 + $0x80] sm:$0xff]
    %v394 = vld [vmem:[#allocation19 + $0x88] sm:$0xff]
    %v395 = vld [vmem:[#allocation19 + $0x90] sm:$0xff]
    %v396 = vld [vmem:[#allocation19 + $0x98] sm:$0xff]
    %v397 = vld [vmem:[#allocation19 + $0xa0] sm:$0xff]
    %v398 = vld [vmem:[#allocation19 + $0xa8] sm:$0xff]
    %v399 = vld [vmem:[#allocation19 + $0xb0] sm:$0xff]
    %v400 = vld [vmem:[#allocation19 + $0xb8] sm:$0xff]
    %v401 = vld [vmem:[#allocation19 + $0xc0] sm:$0xff]
    %v402 = vld [vmem:[#allocation19 + $0xc8] sm:$0xff]
    %v403 = vld [vmem:[#allocation19 + $0xd0] sm:$0xff]
    %v404 = vld [vmem:[#allocation19 + $0xd8] sm:$0xff]
    %v405 = vld [vmem:[#allocation19 + $0xe0] sm:$0xff]
    %v406 = vld [vmem:[#allocation19 + $0xe8] sm:$0xff]
    %v407 = vld [vmem:[#allocation19 + $0xf0] sm:$0xff]
    %v408 = vld [vmem:[#allocation19 + $0xf8] sm:$0xff]
    %v409 = vld [vmem:[#allocation19 + $0x100] sm:$0xff]
    %v410 = vld [vmem:[#allocation19 + $0x108] sm:$0xff]
    %v411 = vld [vmem:[#allocation19 + $0x110] sm:$0xff]
    %v412 = vld [vmem:[#allocation19 + $0x118] sm:$0xff]
    %v413 = vld [vmem:[#allocation19 + $0x120] sm:$0xff]
    %v414 = vld [vmem:[#allocation19 + $0x128] sm:$0xff]
    %v415 = vld [vmem:[#allocation19 + $0x130] sm:$0xff]
    %v416 = vld [vmem:[#allocation19 + $0x138] sm:$0xff]
    %v417 = vld [vmem:[#allocation19 + $0x140] sm:$0xff]
    %v418 = vld [vmem:[#allocation19 + $0x148] sm:$0xff]
    %v419 = vld [vmem:[#allocation19 + $0x150] sm:$0xff]
    %v420 = vld [vmem:[#allocation19 + $0x158] sm:$0xff]
    %v421 = vld [vmem:[#allocation19 + $0x160] sm:$0xff]
    %v422 = vld [vmem:[#allocation19 + $0x168] sm:$0xff]
    %v423 = vld [vmem:[#allocation19 + $0x170] sm:$0xff]
    %v424 = vld [vmem:[#allocation19 + $0x178] sm:$0xff]
    %v425 = vld [vmem:[#allocation19 + $0x180] sm:$0xff]
    %v426 = vld [vmem:[#allocation19 + $0x188] sm:$0xff]
    %v427 = vld [vmem:[#allocation19 + $0x190] sm:$0xff]
    %v428 = vld [vmem:[#allocation19 + $0x198] sm:$0xff]
    %v429 = vld [vmem:[#allocation19 + $0x1a0] sm:$0xff]
    %v430 = vld [vmem:[#allocation19 + $0x1a8] sm:$0xff]
    %v431 = vld [vmem:[#allocation19 + $0x1b0] sm:$0xff]
    %v432 = vld [vmem:[#allocation19 + $0x1b8] sm:$0xff]
    %v433 = vld [vmem:[#allocation19 + $0x1c0] sm:$0xff]
    %v434 = vld [vmem:[#allocation19 + $0x1c8] sm:$0xff]
    %v435 = vld [vmem:[#allocation19 + $0x1d0] sm:$0xff]
    %v436 = vld [vmem:[#allocation19 + $0x1d8] sm:$0xff]
    %v437 = vld [vmem:[#allocation19 + $0x1e0] sm:$0xff]
    %v438 = vld [vmem:[#allocation19 + $0x1e8] sm:$0xff]
    %v439 = vld [vmem:[#allocation19 + $0x1f0] sm:$0xff]
    %v440 = vld [vmem:[#allocation19 + $0x1f8] sm:$0xff]
    %v441 = vld [vmem:[%s11] sm:$0xf]
    %v442 = vld [vmem:[#allocation20] sm:$0xff]
    %v443 = vld [vmem:[#allocation20 + $0x8] sm:$0xff]
    %v444 = vld [vmem:[#allocation20 + $0x10] sm:$0xff]
    %v445 = vld [vmem:[#allocation20 + $0x18] sm:$0xff]
    %v446 = vld [vmem:[#allocation20 + $0x20] sm:$0xff]
    %v447 = vld [vmem:[#allocation20 + $0x28] sm:$0xff]
    %v448 = vld [vmem:[#allocation20 + $0x30] sm:$0xff]
    %v449 = vld [vmem:[#allocation20 + $0x38] sm:$0xff]
    %v450 = vld [vmem:[#allocation20 + $0x40] sm:$0xff]
    %v451 = vld [vmem:[#allocation20 + $0x48] sm:$0xff]
    %v452 = vld [vmem:[#allocation20 + $0x50] sm:$0xff]
    %v453 = vld [vmem:[#allocation20 + $0x58] sm:$0xff]
    %v454 = vld [vmem:[#allocation20 + $0x60] sm:$0xff]
    %v455 = vld [vmem:[#allocation20 + $0x68] sm:$0xff]
    %v456 = vld [vmem:[#allocation20 + $0x70] sm:$0xff]
    %v457 = vld [vmem:[#allocation20 + $0x78] sm:$0xff]
    %v458 = vld [vmem:[#allocation20 + $0x80] sm:$0xff]
    %v459 = vld [vmem:[#allocation20 + $0x88] sm:$0xff]
    %v460 = vld [vmem:[#allocation20 + $0x90] sm:$0xff]
    %v461 = vld [vmem:[#allocation20 + $0x98] sm:$0xff]
    %v462 = vld [vmem:[#allocation20 + $0xa0] sm:$0xff]
    %v463 = vld [vmem:[#allocation20 + $0xa8] sm:$0xff]
    %v464 = vld [vmem:[#allocation20 + $0xb0] sm:$0xff]
    %v465 = vld [vmem:[#allocation20 + $0xb8] sm:$0xff]
    %v466 = vld [vmem:[#allocation20 + $0xc0] sm:$0xff]
    %v467 = vld [vmem:[#allocation20 + $0xc8] sm:$0xff]
    %v468 = vld [vmem:[#allocation20 + $0xd0] sm:$0xff]
    %v469 = vld [vmem:[#allocation20 + $0xd8] sm:$0xff]
    %v470 = vld [vmem:[#allocation20 + $0xe0] sm:$0xff]
    %v471 = vld [vmem:[#allocation20 + $0xe8] sm:$0xff]
    %v472 = vld [vmem:[#allocation20 + $0xf0] sm:$0xff]
    %v473 = vld [vmem:[#allocation20 + $0xf8] sm:$0xff]
    %v474 = vld [vmem:[#allocation20 + $0x100] sm:$0xff]
    %v475 = vld [vmem:[#allocation20 + $0x108] sm:$0xff]
    %v476 = vld [vmem:[#allocation20 + $0x110] sm:$0xff]
    %v477 = vld [vmem:[#allocation20 + $0x118] sm:$0xff]
    %v478 = vld [vmem:[#allocation20 + $0x120] sm:$0xff]
    %v479 = vld [vmem:[#allocation20 + $0x128] sm:$0xff]
    %v480 = vld [vmem:[#allocation20 + $0x130] sm:$0xff]
    %v481 = vld [vmem:[#allocation20 + $0x138] sm:$0xff]
    %v482 = vld [vmem:[#allocation20 + $0x140] sm:$0xff]
    %v483 = vld [vmem:[#allocation20 + $0x148] sm:$0xff]
    %v484 = vld [vmem:[#allocation20 + $0x150] sm:$0xff]
    %v485 = vld [vmem:[#allocation20 + $0x158] sm:$0xff]
    %v486 = vld [vmem:[#allocation20 + $0x160] sm:$0xff]
    %v487 = vld [vmem:[#allocation20 + $0x168] sm:$0xff]
    %v488 = vld [vmem:[#allocation20 + $0x170] sm:$0xff]
    %v489 = vld [vmem:[#allocation20 + $0x178] sm:$0xff]
    %v490 = vld [vmem:[#allocation20 + $0x180] sm:$0xff]
    %v491 = vld [vmem:[#allocation20 + $0x188] sm:$0xff]
    %v492 = vld [vmem:[#allocation20 + $0x190] sm:$0xff]
    %v493 = vld [vmem:[#allocation20 + $0x198] sm:$0xff]
    %v494 = vld [vmem:[#allocation20 + $0x1a0] sm:$0xff]
    %v495 = vld [vmem:[#allocation20 + $0x1a8] sm:$0xff]
    %v496 = vld [vmem:[#allocation20 + $0x1b0] sm:$0xff]
    %v497 = vld [vmem:[#allocation20 + $0x1b8] sm:$0xff]
    %v498 = vld [vmem:[#allocation20 + $0x1c0] sm:$0xff]
    %v499 = vld [vmem:[#allocation20 + $0x1c8] sm:$0xff]
    %v500 = vld [vmem:[#allocation20 + $0x1d0] sm:$0xff]
    %v501 = vld [vmem:[#allocation20 + $0x1d8] sm:$0xff]
    %v502 = vld [vmem:[#allocation20 + $0x1e0] sm:$0xff]
    %v503 = vld [vmem:[#allocation20 + $0x1e8] sm:$0xff]
    %v504 = vld [vmem:[#allocation20 + $0x1f0] sm:$0xff]
    %v505 = vld [vmem:[#allocation20 + $0x1f8] sm:$0xff]
    %v506 = vld [vmem:[%s13] sm:$0x3]
    %v507 = vadd.f32 %v235, %v236
    %508 = vadd.xlane.f32.xlu0 %v507
    %v509 = vpop.xlane.xlu0 %508
    %v510 = vadd.f32 %v237, %v238
    %511 = vadd.xlane.f32.xlu0 %v510
    %v512 = vpop.xlane.xlu0 %511
    %v513 = vrcp.pop 256.0
    %v514 = vmul.f32 256.0, %v513
    %v515 = vsub.f32 1.0, %v514
    %v516 = vmul.f32 %v513, %v515
    %v517 = vadd.f32 %v513, %v516
    %vm518 = vweird.f32 %v513
    %v519 = vsel %vm518, %v513, %v517
    %v520 = vmul.f32 %v509, %v519
    %v521 = vmul.f32 %v512, %v519
    %v522 = vsub.f32 %v235, %v520
    %v523 = vsub.f32 %v236, %v520
    %v524 = vsub.f32 %v237, %v521
    %v525 = vsub.f32 %v238, %v521
    %v526 = vmul.f32 %v522, %v522
    %v527 = vmul.f32 %v523, %v523
    %v528 = vmul.f32 %v524, %v524
    %v529 = vmul.f32 %v525, %v525
    %v530 = vadd.f32 %v526, %v527
    %531 = vadd.xlane.f32.xlu0 %v530
    %v532 = vpop.xlane.xlu0 %531
    %v533 = vadd.f32 %v528, %v529
    %534 = vadd.xlane.f32.xlu0 %v533
    %v535 = vpop.xlane.xlu0 %534
    %v536 = vmul.f32 %v532, %v519
    %v537 = vmul.f32 %v535, %v519
    %v538 = vadd.f32 %v536, 1e-05
    %v539 = vadd.f32 %v537, 1e-05
    %v540 = vrsqrt.pop %v538
    %v541 = vmul.f32 %v540, %v538
    %v542 = vmul.f32 %v541, %v540
    %v543 = vmul.f32 0.5, %v542
    %v544 = vsub.f32 1.5, %v543
    %v545 = vmul.f32 %v540, %v544
    %vm546 = vweird.f32 %v538
    %vm547 = vweird.f32 %v540
    %vm548 = vmor %vm546, %vm547
    %v549 = vsel %vm548, %v540, %v545
    %v550 = vrsqrt.pop %v539
    %v551 = vmul.f32 %v550, %v539
    %v552 = vmul.f32 %v551, %v550
    %v553 = vmul.f32 0.5, %v552
    %v554 = vsub.f32 1.5, %v553
    %v555 = vmul.f32 %v550, %v554
    %vm556 = vweird.f32 %v539
    %vm557 = vweird.f32 %v550
    %vm558 = vmor %vm556, %vm557
    %v559 = vsel %vm558, %v550, %v555
    %v560 = vmul.f32 %v522, %v549
    %v561 = vmul.f32 %v523, %v549
    %v562 = vmul.f32 %v524, %v559
    %v563 = vmul.f32 %v525, %v559
    %v565 = vperm.slane %v373, 0
    %v566 = vperm.slane %v373, 1
    %v569 = vmul.f32 %v560, %v565
    %v570 = vmul.f32 %v561, %v566
    %v571 = vmul.f32 %v562, %v565
    %v572 = vmul.f32 %v563, %v566
    %v574 = vperm.slane %v374, 0
    %v575 = vperm.slane %v374, 1
    %v578 = vadd.f32 %v569, %v574
    %v579 = vadd.f32 %v570, %v575
    %v580 = vadd.f32 %v571, %v574
    %v581 = vadd.f32 %v572, %v575
    %v582 = vpack.c.bf16 %v580, %v578
    %v583 = vpack.c.bf16 %v581, %v579
    %v585 = vperm.slane %v339, 0
    %v586 = vperm.slane %v339, 1
    %v587 = vperm.slane %v339, 2
    %v588 = vperm.slane %v339, 3
    %v589 = vperm.slane %v339, 4
    %v590 = vperm.slane %v339, 5
    %v693 = vunpack.c.l.b16 %v243
    %v694 = vunpack.c.h.b16 %v243
    %v695 = vunpack.c.l.b16 %v244
    %v696 = vunpack.c.h.b16 %v244
    %v697 = vunpack.c.l.b16 %v245
    %v698 = vunpack.c.h.b16 %v245
    %v699 = vunpack.c.l.b16 %v246
    %v700 = vunpack.c.h.b16 %v246
    %v701 = vunpack.c.l.b16 %v247
    %v702 = vunpack.c.h.b16 %v247
    %v703 = vunpack.c.l.b16 %v248
    %v704 = vunpack.c.h.b16 %v248
    %v705 = vunpack.c.l.b16 %v249
    %v706 = vunpack.c.h.b16 %v249
    %v707 = vunpack.c.l.b16 %v250
    %v708 = vunpack.c.h.b16 %v250
    %v709 = vunpack.c.l.b16 %v251
    %v710 = vunpack.c.h.b16 %v251
    %v711 = vunpack.c.l.b16 %v252
    %v712 = vunpack.c.h.b16 %v252
    %v713 = vunpack.c.l.b16 %v253
    %v714 = vunpack.c.h.b16 %v253
    %v715 = vunpack.c.l.b16 %v254
    %v716 = vunpack.c.h.b16 %v254
    %v717 = vunpack.c.l.b16 %v255
    %v718 = vunpack.c.h.b16 %v255
    %v719 = vunpack.c.l.b16 %v256
    %v720 = vunpack.c.h.b16 %v256
    %v721 = vunpack.c.l.b16 %v257
    %v722 = vunpack.c.h.b16 %v257
    %v723 = vunpack.c.l.b16 %v258
    %v724 = vunpack.c.h.b16 %v258
    %v725 = vunpack.c.l.b16 %v259
    %v726 = vunpack.c.h.b16 %v259
    %v727 = vunpack.c.l.b16 %v260
    %v728 = vunpack.c.h.b16 %v260
    %v729 = vunpack.c.l.b16 %v261
    %v730 = vunpack.c.h.b16 %v261
    %v731 = vunpack.c.l.b16 %v262
    %v732 = vunpack.c.h.b16 %v262
    %v733 = vunpack.c.l.b16 %v263
    %v734 = vunpack.c.h.b16 %v263
    %v735 = vunpack.c.l.b16 %v264
    %v736 = vunpack.c.h.b16 %v264
    %v737 = vunpack.c.l.b16 %v265
    %v738 = vunpack.c.h.b16 %v265
    %v739 = vunpack.c.l.b16 %v266
    %v740 = vunpack.c.h.b16 %v266
    %v741 = vunpack.c.l.b16 %v267
    %v742 = vunpack.c.h.b16 %v267
    %v743 = vunpack.c.l.b16 %v268
    %v744 = vunpack.c.h.b16 %v268
    %v745 = vunpack.c.l.b16 %v269
    %v746 = vunpack.c.h.b16 %v269
    %v747 = vunpack.c.l.b16 %v270
    %v748 = vunpack.c.h.b16 %v270
    %v749 = vunpack.c.l.b16 %v271
    %v750 = vunpack.c.h.b16 %v271
    %v751 = vunpack.c.l.b16 %v272
    %v752 = vunpack.c.h.b16 %v272
    %v753 = vunpack.c.l.b16 %v273
    %v754 = vunpack.c.h.b16 %v273
    %v755 = vunpack.c.l.b16 %v274
    %v756 = vunpack.c.h.b16 %v274
    %v757 = vunpack.c.l.b16 %v275
    %v758 = vunpack.c.h.b16 %v275
    %v759 = vunpack.c.l.b16 %v276
    %v760 = vunpack.c.h.b16 %v276
    %v761 = vunpack.c.l.b16 %v277
    %v762 = vunpack.c.h.b16 %v277
    %v763 = vunpack.c.l.b16 %v278
    %v764 = vunpack.c.h.b16 %v278
    %v765 = vunpack.c.l.b16 %v279
    %v766 = vunpack.c.h.b16 %v279
    %v767 = vunpack.c.l.b16 %v280
    %v768 = vunpack.c.h.b16 %v280
    %v769 = vunpack.c.l.b16 %v281
    %v770 = vunpack.c.h.b16 %v281
    %v771 = vunpack.c.l.b16 %v282
    %v772 = vunpack.c.h.b16 %v282
    %v773 = vunpack.c.l.b16 %v283
    %v774 = vunpack.c.h.b16 %v283
    %v775 = vunpack.c.l.b16 %v284
    %v776 = vunpack.c.h.b16 %v284
    %v777 = vunpack.c.l.b16 %v285
    %v778 = vunpack.c.h.b16 %v285
    %v779 = vunpack.c.l.b16 %v286
    %v780 = vunpack.c.h.b16 %v286
    %v781 = vunpack.c.l.b16 %v287
    %v782 = vunpack.c.h.b16 %v287
    %v783 = vunpack.c.l.b16 %v288
    %v784 = vunpack.c.h.b16 %v288
    %v785 = vunpack.c.l.b16 %v289
    %v786 = vunpack.c.h.b16 %v289
    %v787 = vunpack.c.l.b16 %v290
    %v788 = vunpack.c.h.b16 %v290
    %v789 = vunpack.c.l.b16 %v291
    %v790 = vunpack.c.h.b16 %v291
    %v791 = vunpack.c.l.b16 %v292
    %v792 = vunpack.c.h.b16 %v292
    %v793 = vunpack.c.l.b16 %v293
    %v794 = vunpack.c.h.b16 %v293
    %v795 = vunpack.c.l.b16 %v294
    %v796 = vunpack.c.h.b16 %v294
    %v797 = vunpack.c.l.b16 %v295
    %v798 = vunpack.c.h.b16 %v295
    %v799 = vunpack.c.l.b16 %v296
    %v800 = vunpack.c.h.b16 %v296
    %v801 = vunpack.c.l.b16 %v297
    %v802 = vunpack.c.h.b16 %v297
    %v803 = vunpack.c.l.b16 %v298
    %v804 = vunpack.c.h.b16 %v298
    %v805 = vunpack.c.l.b16 %v299
    %v806 = vunpack.c.h.b16 %v299
    %v807 = vunpack.c.l.b16 %v300
    %v808 = vunpack.c.h.b16 %v300
    %v809 = vunpack.c.l.b16 %v301
    %v810 = vunpack.c.h.b16 %v301
    %v811 = vunpack.c.l.b16 %v302
    %v812 = vunpack.c.h.b16 %v302
    %v813 = vunpack.c.l.b16 %v303
    %v814 = vunpack.c.h.b16 %v303
    %v815 = vunpack.c.l.b16 %v304
    %v816 = vunpack.c.h.b16 %v304
    %v817 = vunpack.c.l.b16 %v305
    %v818 = vunpack.c.h.b16 %v305
    %v819 = vunpack.c.l.b16 %v306
    %v820 = vunpack.c.h.b16 %v306
    %v821 = vunpack.c.l.b16 %v307
    %v822 = vunpack.c.h.b16 %v307
    %v823 = vunpack.c.l.b16 %v308
    %v824 = vunpack.c.h.b16 %v308
    %v825 = vunpack.c.l.b16 %v309
    %v826 = vunpack.c.h.b16 %v309
    %v827 = vunpack.c.l.b16 %v310
    %v828 = vunpack.c.h.b16 %v310
    %v829 = vunpack.c.l.b16 %v311
    %v830 = vunpack.c.h.b16 %v311
    %v831 = vunpack.c.l.b16 %v312
    %v832 = vunpack.c.h.b16 %v312
    %v833 = vunpack.c.l.b16 %v313
    %v834 = vunpack.c.h.b16 %v313
    %v835 = vunpack.c.l.b16 %v314
    %v836 = vunpack.c.h.b16 %v314
    %v837 = vunpack.c.l.b16 %v315
    %v838 = vunpack.c.h.b16 %v315
    %v839 = vunpack.c.l.b16 %v316
    %v840 = vunpack.c.h.b16 %v316
    %v841 = vunpack.c.l.b16 %v317
    %v842 = vunpack.c.h.b16 %v317
    %v843 = vunpack.c.l.b16 %v318
    %v844 = vunpack.c.h.b16 %v318
    %v845 = vunpack.c.l.b16 %v319
    %v846 = vunpack.c.h.b16 %v319
    %v847 = vunpack.c.l.b16 %v320
    %v848 = vunpack.c.h.b16 %v320
    %v849 = vunpack.c.l.b16 %v321
    %v850 = vunpack.c.h.b16 %v321
    %v851 = vunpack.c.l.b16 %v322
    %v852 = vunpack.c.h.b16 %v322
    %v853 = vunpack.c.l.b16 %v323
    %v854 = vunpack.c.h.b16 %v323
    %v855 = vunpack.c.l.b16 %v324
    %v856 = vunpack.c.h.b16 %v324
    %v857 = vunpack.c.l.b16 %v325
    %v858 = vunpack.c.h.b16 %v325
    %v859 = vunpack.c.l.b16 %v326
    %v860 = vunpack.c.h.b16 %v326
    %v861 = vunpack.c.l.b16 %v327
    %v862 = vunpack.c.h.b16 %v327
    %v863 = vunpack.c.l.b16 %v328
    %v864 = vunpack.c.h.b16 %v328
    %v865 = vunpack.c.l.b16 %v329
    %v866 = vunpack.c.h.b16 %v329
    %v867 = vunpack.c.l.b16 %v330
    %v868 = vunpack.c.h.b16 %v330
    %v869 = vunpack.c.l.b16 %v331
    %v870 = vunpack.c.h.b16 %v331
    %v871 = vunpack.c.l.b16 %v332
    %v872 = vunpack.c.h.b16 %v332
    %v873 = vunpack.c.l.b16 %v333
    %v874 = vunpack.c.h.b16 %v333
    %v875 = vunpack.c.l.b16 %v334
    %v876 = vunpack.c.h.b16 %v334
    %v877 = vunpack.c.l.b16 %v335
    %v878 = vunpack.c.h.b16 %v335
    %v879 = vunpack.c.l.b16 %v336
    %v880 = vunpack.c.h.b16 %v336
    %v881 = vunpack.c.l.b16 %v337
    %v882 = vunpack.c.h.b16 %v337
    %v883 = vunpack.c.l.b16 %v338
    %v884 = vunpack.c.h.b16 %v338
    %v885 = vpack.c.b16 %v699, %v693
    %v886 = vpack.c.b16 %v700, %v694
    %v887 = vpack.c.b16 %v701, %v695
    %v888 = vpack.c.b16 %v702, %v696
    %v889 = vpack.c.b16 %v703, %v697
    %v890 = vpack.c.b16 %v704, %v698
    %v891 = vpack.c.b16 %v711, %v705
    %v892 = vpack.c.b16 %v712, %v706
    %v893 = vpack.c.b16 %v713, %v707
    %v894 = vpack.c.b16 %v714, %v708
    %v895 = vpack.c.b16 %v715, %v709
    %v896 = vpack.c.b16 %v716, %v710
    %v897 = vpack.c.b16 %v723, %v717
    %v898 = vpack.c.b16 %v724, %v718
    %v899 = vpack.c.b16 %v725, %v719
    %v900 = vpack.c.b16 %v726, %v720
    %v901 = vpack.c.b16 %v727, %v721
    %v902 = vpack.c.b16 %v728, %v722
    %v903 = vpack.c.b16 %v735, %v729
    %v904 = vpack.c.b16 %v736, %v730
    %v905 = vpack.c.b16 %v737, %v731
    %v906 = vpack.c.b16 %v738, %v732
    %v907 = vpack.c.b16 %v739, %v733
    %v908 = vpack.c.b16 %v740, %v734
    %v909 = vpack.c.b16 %v747, %v741
    %v910 = vpack.c.b16 %v748, %v742
    %v911 = vpack.c.b16 %v749, %v743
    %v912 = vpack.c.b16 %v750, %v744
    %v913 = vpack.c.b16 %v751, %v745
    %v914 = vpack.c.b16 %v752, %v746
    %v915 = vpack.c.b16 %v759, %v753
    %v916 = vpack.c.b16 %v760, %v754
    %v917 = vpack.c.b16 %v761, %v755
    %v918 = vpack.c.b16 %v762, %v756
    %v919 = vpack.c.b16 %v763, %v757
    %v920 = vpack.c.b16 %v764, %v758
    %v921 = vpack.c.b16 %v771, %v765
    %v922 = vpack.c.b16 %v772, %v766
    %v923 = vpack.c.b16 %v773, %v767
    %v924 = vpack.c.b16 %v774, %v768
    %v925 = vpack.c.b16 %v775, %v769
    %v926 = vpack.c.b16 %v776, %v770
    %v927 = vpack.c.b16 %v783, %v777
    %v928 = vpack.c.b16 %v784, %v778
    %v929 = vpack.c.b16 %v785, %v779
    %v930 = vpack.c.b16 %v786, %v780
    %v931 = vpack.c.b16 %v787, %v781
    %v932 = vpack.c.b16 %v788, %v782
    %v933 = vpack.c.b16 %v795, %v789
    %v934 = vpack.c.b16 %v796, %v790
    %v935 = vpack.c.b16 %v797, %v791
    %v936 = vpack.c.b16 %v798, %v792
    %v937 = vpack.c.b16 %v799, %v793
    %v938 = vpack.c.b16 %v800, %v794
    %v939 = vpack.c.b16 %v807, %v801
    %v940 = vpack.c.b16 %v808, %v802
    %v941 = vpack.c.b16 %v809, %v803
    %v942 = vpack.c.b16 %v810, %v804
    %v943 = vpack.c.b16 %v811, %v805
    %v944 = vpack.c.b16 %v812, %v806
    %v945 = vpack.c.b16 %v819, %v813
    %v946 = vpack.c.b16 %v820, %v814
    %v947 = vpack.c.b16 %v821, %v815
    %v948 = vpack.c.b16 %v822, %v816
    %v949 = vpack.c.b16 %v823, %v817
    %v950 = vpack.c.b16 %v824, %v818
    %v951 = vpack.c.b16 %v831, %v825
    %v952 = vpack.c.b16 %v832, %v826
    %v953 = vpack.c.b16 %v833, %v827
    %v954 = vpack.c.b16 %v834, %v828
    %v955 = vpack.c.b16 %v835, %v829
    %v956 = vpack.c.b16 %v836, %v830
    %v957 = vpack.c.b16 %v843, %v837
    %v958 = vpack.c.b16 %v844, %v838
    %v959 = vpack.c.b16 %v845, %v839
    %v960 = vpack.c.b16 %v846, %v840
    %v961 = vpack.c.b16 %v847, %v841
    %v962 = vpack.c.b16 %v848, %v842
    %v963 = vpack.c.b16 %v855, %v849
    %v964 = vpack.c.b16 %v856, %v850
    %v965 = vpack.c.b16 %v857, %v851
    %v966 = vpack.c.b16 %v858, %v852
    %v967 = vpack.c.b16 %v859, %v853
    %v968 = vpack.c.b16 %v860, %v854
    %v969 = vpack.c.b16 %v867, %v861
    %v970 = vpack.c.b16 %v868, %v862
    %v971 = vpack.c.b16 %v869, %v863
    %v972 = vpack.c.b16 %v870, %v864
    %v973 = vpack.c.b16 %v871, %v865
    %v974 = vpack.c.b16 %v872, %v866
    %v975 = vpack.c.b16 %v879, %v873
    %v976 = vpack.c.b16 %v880, %v874
    %v977 = vpack.c.b16 %v881, %v875
    %v978 = vpack.c.b16 %v882, %v876
    %v979 = vpack.c.b16 %v883, %v877
    %v980 = vpack.c.b16 %v884, %v878
    %1077 = vmatpush.bf16.msra.mxu0 %v927
    %1078 = vmatpush.bf16.msra.mxu0 %v921
    %1079 = vmatpush.bf16.msra.mxu0 %v915
    %1080 = vmatpush.bf16.msra.mxu0 %v909
    %1081 = vmatpush.bf16.msra.mxu0 %v903
    %1082 = vmatpush.bf16.msra.mxu0 %v897
    %1083 = vmatpush.bf16.msra.mxu0 %v891
    %1084 = vmatpush.bf16.msra.mxu0 %v885
    %1085 = vmatmul.bf16.gmra.mxu0 %v582
    %v1086 = vpop.f32.mrf.mxu0
    %v1087 = vadd.f32 %v585, %v1086
    %v1088 = vpop.f32.mrf.mxu0
    %v1089 = vadd.f32 %v585, %v1088
    %1090 = vdwg.mxu0
    %1091 = vmatpush.bf16.msra.mxu0 %v975
    %1092 = vmatpush.bf16.msra.mxu0 %v969
    %1093 = vmatpush.bf16.msra.mxu0 %v963
    %1094 = vmatpush.bf16.msra.mxu0 %v957
    %1095 = vmatpush.bf16.msra.mxu0 %v951
    %1096 = vmatpush.bf16.msra.mxu0 %v945
    %1097 = vmatpush.bf16.msra.mxu0 %v939
    %1098 = vmatpush.bf16.msra.mxu0 %v933
    %1099 = vmatmul.bf16.gmra.mxu0 %v583
    %v1100 = vpop.f32.mrf.mxu0
    %v1101 = vadd.f32 %v1087, %v1100
    %v1102 = vpop.f32.mrf.mxu0
    %v1103 = vadd.f32 %v1089, %v1102
    %1104 = vdwg.mxu0
    %1105 = vmatpush.bf16.msra.mxu0 %v928
    %1106 = vmatpush.bf16.msra.mxu0 %v922
    %1107 = vmatpush.bf16.msra.mxu0 %v916
    %1108 = vmatpush.bf16.msra.mxu0 %v910
    %1109 = vmatpush.bf16.msra.mxu0 %v904
    %1110 = vmatpush.bf16.msra.mxu0 %v898
    %1111 = vmatpush.bf16.msra.mxu0 %v892
    %1112 = vmatpush.bf16.msra.mxu0 %v886
    %1113 = vmatmul.bf16.gmra.mxu0 %v582
    %v1114 = vpop.f32.mrf.mxu0
    %v1115 = vadd.f32 %v586, %v1114
    %v1116 = vpop.f32.mrf.mxu0
    %v1117 = vadd.f32 %v586, %v1116
    %1118 = vdwg.mxu0
    %1119 = vmatpush.bf16.msra.mxu0 %v976
    %1120 = vmatpush.bf16.msra.mxu0 %v970
    %1121 = vmatpush.bf16.msra.mxu0 %v964
    %1122 = vmatpush.bf16.msra.mxu0 %v958
    %1123 = vmatpush.bf16.msra.mxu0 %v952
    %1124 = vmatpush.bf16.msra.mxu0 %v946
    %1125 = vmatpush.bf16.msra.mxu0 %v940
    %1126 = vmatpush.bf16.msra.mxu0 %v934
    %1127 = vmatmul.bf16.gmra.mxu0 %v583
    %v1128 = vpop.f32.mrf.mxu0
    %v1129 = vadd.f32 %v1115, %v1128
    %v1130 = vpop.f32.mrf.mxu0
    %v1131 = vadd.f32 %v1117, %v1130
    %1132 = vdwg.mxu0
    %1133 = vmatpush.bf16.msra.mxu0 %v929
    %1134 = vmatpush.bf16.msra.mxu0 %v923
    %1135 = vmatpush.bf16.msra.mxu0 %v917
    %1136 = vmatpush.bf16.msra.mxu0 %v911
    %1137 = vmatpush.bf16.msra.mxu0 %v905
    %1138 = vmatpush.bf16.msra.mxu0 %v899
    %1139 = vmatpush.bf16.msra.mxu0 %v893
    %1140 = vmatpush.bf16.msra.mxu0 %v887
    %1141 = vmatmul.bf16.gmra.mxu0 %v582
    %v1142 = vpop.f32.mrf.mxu0
    %v1143 = vadd.f32 %v587, %v1142
    %v1144 = vpop.f32.mrf.mxu0
    %v1145 = vadd.f32 %v587, %v1144
    %1146 = vdwg.mxu0
    %1147 = vmatpush.bf16.msra.mxu0 %v977
    %1148 = vmatpush.bf16.msra.mxu0 %v971
    %1149 = vmatpush.bf16.msra.mxu0 %v965
    %1150 = vmatpush.bf16.msra.mxu0 %v959
    %1151 = vmatpush.bf16.msra.mxu0 %v953
    %1152 = vmatpush.bf16.msra.mxu0 %v947
    %1153 = vmatpush.bf16.msra.mxu0 %v941
    %1154 = vmatpush.bf16.msra.mxu0 %v935
    %1155 = vmatmul.bf16.gmra.mxu0 %v583
    %v1156 = vpop.f32.mrf.mxu0
    %v1157 = vadd.f32 %v1143, %v1156
    %v1158 = vpop.f32.mrf.mxu0
    %v1159 = vadd.f32 %v1145, %v1158
    %1160 = vdwg.mxu0
    %1161 = vmatpush.bf16.msra.mxu0 %v930
    %1162 = vmatpush.bf16.msra.mxu0 %v924
    %1163 = vmatpush.bf16.msra.mxu0 %v918
    %1164 = vmatpush.bf16.msra.mxu0 %v912
    %1165 = vmatpush.bf16.msra.mxu0 %v906
    %1166 = vmatpush.bf16.msra.mxu0 %v900
    %1167 = vmatpush.bf16.msra.mxu0 %v894
    %1168 = vmatpush.bf16.msra.mxu0 %v888
    %1169 = vmatmul.bf16.gmra.mxu0 %v582
    %v1170 = vpop.f32.mrf.mxu0
    %v1171 = vadd.f32 %v588, %v1170
    %v1172 = vpop.f32.mrf.mxu0
    %v1173 = vadd.f32 %v588, %v1172
    %1174 = vdwg.mxu0
    %1175 = vmatpush.bf16.msra.mxu0 %v978
    %1176 = vmatpush.bf16.msra.mxu0 %v972
    %1177 = vmatpush.bf16.msra.mxu0 %v966
    %1178 = vmatpush.bf16.msra.mxu0 %v960
    %1179 = vmatpush.bf16.msra.mxu0 %v954
    %1180 = vmatpush.bf16.msra.mxu0 %v948
    %1181 = vmatpush.bf16.msra.mxu0 %v942
    %1182 = vmatpush.bf16.msra.mxu0 %v936
    %1183 = vmatmul.bf16.gmra.mxu0 %v583
    %v1184 = vpop.f32.mrf.mxu0
    %v1185 = vadd.f32 %v1171, %v1184
    %v1186 = vpop.f32.mrf.mxu0
    %v1187 = vadd.f32 %v1173, %v1186
    %1188 = vdwg.mxu0
    %1189 = vmatpush.bf16.msra.mxu0 %v931
    %1190 = vmatpush.bf16.msra.mxu0 %v925
    %1191 = vmatpush.bf16.msra.mxu0 %v919
    %1192 = vmatpush.bf16.msra.mxu0 %v913
    %1193 = vmatpush.bf16.msra.mxu0 %v907
    %1194 = vmatpush.bf16.msra.mxu0 %v901
    %1195 = vmatpush.bf16.msra.mxu0 %v895
    %1196 = vmatpush.bf16.msra.mxu0 %v889
    %1197 = vmatmul.bf16.gmra.mxu0 %v582
    %v1198 = vpop.f32.mrf.mxu0
    %v1199 = vadd.f32 %v589, %v1198
    %v1200 = vpop.f32.mrf.mxu0
    %v1201 = vadd.f32 %v589, %v1200
    %1202 = vdwg.mxu0
    %1203 = vmatpush.bf16.msra.mxu0 %v979
    %1204 = vmatpush.bf16.msra.mxu0 %v973
    %1205 = vmatpush.bf16.msra.mxu0 %v967
    %1206 = vmatpush.bf16.msra.mxu0 %v961
    %1207 = vmatpush.bf16.msra.mxu0 %v955
    %1208 = vmatpush.bf16.msra.mxu0 %v949
    %1209 = vmatpush.bf16.msra.mxu0 %v943
    %1210 = vmatpush.bf16.msra.mxu0 %v937
    %1211 = vmatmul.bf16.gmra.mxu0 %v583
    %v1212 = vpop.f32.mrf.mxu0
    %v1213 = vadd.f32 %v1199, %v1212
    %v1214 = vpop.f32.mrf.mxu0
    %v1215 = vadd.f32 %v1201, %v1214
    %1216 = vdwg.mxu0
    %1217 = vmatpush.bf16.msra.mxu0 %v932
    %1218 = vmatpush.bf16.msra.mxu0 %v926
    %1219 = vmatpush.bf16.msra.mxu0 %v920
    %1220 = vmatpush.bf16.msra.mxu0 %v914
    %1221 = vmatpush.bf16.msra.mxu0 %v908
    %1222 = vmatpush.bf16.msra.mxu0 %v902
    %1223 = vmatpush.bf16.msra.mxu0 %v896
    %1224 = vmatpush.bf16.msra.mxu0 %v890
    %1225 = vmatmul.bf16.gmra.mxu0 %v582
    %v1226 = vpop.f32.mrf.mxu0
    %v1227 = vadd.f32 %v590, %v1226
    %v1228 = vpop.f32.mrf.mxu0
    %v1229 = vadd.f32 %v590, %v1228
    %1230 = vdwg.mxu0
    %1231 = vmatpush.bf16.msra.mxu0 %v980
    %1232 = vmatpush.bf16.msra.mxu0 %v974
    %1233 = vmatpush.bf16.msra.mxu0 %v968
    %1234 = vmatpush.bf16.msra.mxu0 %v962
    %1235 = vmatpush.bf16.msra.mxu0 %v956
    %1236 = vmatpush.bf16.msra.mxu0 %v950
    %1237 = vmatpush.bf16.msra.mxu0 %v944
    %1238 = vmatpush.bf16.msra.mxu0 %v938
    %1239 = vmatmul.bf16.gmra.mxu0 %v583
    %v1240 = vpop.f32.mrf.mxu0
    %v1241 = vadd.f32 %v1227, %v1240
    %v1242 = vpop.f32.mrf.mxu0
    %v1243 = vadd.f32 %v1229, %v1242
    %1244 = vdwg.mxu0
    %1245 = vmatpush.xpose.msra.mxu0 0.0
    %1246 = vmatpush.xpose.msra.mxu0 0.0
    %1247 = vmatpush.xpose.msra.mxu0 0.0
    %1248 = vmatpush.xpose.msra.mxu0 0.0
    %1249 = vmatpush.xpose.msra.mxu0 0.0
    %1250 = vmatpush.xpose.msra.mxu0 0.0
    %1251 = vmatpush.xpose.msra.mxu0 0.0
    %1252 = vmatpush.xpose.msra.mxu0 0.0
    %1253 = vmatpush.xpose.msra.mxu0 0.0
    %1254 = vmatpush.xpose.msra.mxu0 0.0
    %1255 = vmatpush.xpose.msra.mxu0 0.0
    %1256 = vmatpush.xpose.msra.mxu0 0.0
    %1257 = vmatpush.xpose.msra.mxu0 0.0
    %1258 = vmatpush.xpose.msra.mxu0 0.0
    %1259 = vmatpush.xpose.msra.mxu0 0.0
    %1260 = vmatpush.xpose.msra.mxu0 %v1157
    %1261 = vmatmul.f32.gmra.mxu0 %v1101
    %v1262 = vpop.f32.mrf.mxu0
    %v1263 = vadd.f32 0.0, %v1262
    %1264 = vdwg.mxu0
    %1265 = vmatpush.xpose.msra.mxu0 0.0
    %1266 = vmatpush.xpose.msra.mxu0 0.0
    %1267 = vmatpush.xpose.msra.mxu0 0.0
    %1268 = vmatpush.xpose.msra.mxu0 0.0
    %1269 = vmatpush.xpose.msra.mxu0 0.0
    %1270 = vmatpush.xpose.msra.mxu0 0.0
    %1271 = vmatpush.xpose.msra.mxu0 0.0
    %1272 = vmatpush.xpose.msra.mxu0 0.0
    %1273 = vmatpush.xpose.msra.mxu0 0.0
    %1274 = vmatpush.xpose.msra.mxu0 0.0
    %1275 = vmatpush.xpose.msra.mxu0 0.0
    %1276 = vmatpush.xpose.msra.mxu0 0.0
    %1277 = vmatpush.xpose.msra.mxu0 0.0
    %1278 = vmatpush.xpose.msra.mxu0 0.0
    %1279 = vmatpush.xpose.msra.mxu0 0.0
    %1280 = vmatpush.xpose.msra.mxu0 %v1159
    %1281 = vmatmul.f32.gmra.mxu0 %v1103
    %v1282 = vpop.f32.mrf.mxu0
    %v1283 = vadd.f32 0.0, %v1282
    %1284 = vdwg.mxu0
    %1285 = vmatpush.xpose.msra.mxu0 0.0
    %1286 = vmatpush.xpose.msra.mxu0 0.0
    %1287 = vmatpush.xpose.msra.mxu0 0.0
    %1288 = vmatpush.xpose.msra.mxu0 0.0
    %1289 = vmatpush.xpose.msra.mxu0 0.0
    %1290 = vmatpush.xpose.msra.mxu0 0.0
    %1291 = vmatpush.xpose.msra.mxu0 0.0
    %1292 = vmatpush.xpose.msra.mxu0 0.0
    %1293 = vmatpush.xpose.msra.mxu0 0.0
    %1294 = vmatpush.xpose.msra.mxu0 0.0
    %1295 = vmatpush.xpose.msra.mxu0 0.0
    %1296 = vmatpush.xpose.msra.mxu0 0.0
    %1297 = vmatpush.xpose.msra.mxu0 0.0
    %1298 = vmatpush.xpose.msra.mxu0 0.0
    %1299 = vmatpush.xpose.msra.mxu0 0.0
    %1300 = vmatpush.xpose.msra.mxu0 %v1185
    %1301 = vmatmul.f32.gmra.mxu0 %v1129
    %v1302 = vpop.f32.mrf.mxu0
    %v1303 = vadd.f32 0.0, %v1302
    %1304 = vdwg.mxu0
    %1305 = vmatpush.xpose.msra.mxu0 0.0
    %1306 = vmatpush.xpose.msra.mxu0 0.0
    %1307 = vmatpush.xpose.msra.mxu0 0.0
    %1308 = vmatpush.xpose.msra.mxu0 0.0
    %1309 = vmatpush.xpose.msra.mxu0 0.0
    %1310 = vmatpush.xpose.msra.mxu0 0.0
    %1311 = vmatpush.xpose.msra.mxu0 0.0
    %1312 = vmatpush.xpose.msra.mxu0 0.0
    %1313 = vmatpush.xpose.msra.mxu0 0.0
    %1314 = vmatpush.xpose.msra.mxu0 0.0
    %1315 = vmatpush.xpose.msra.mxu0 0.0
    %1316 = vmatpush.xpose.msra.mxu0 0.0
    %1317 = vmatpush.xpose.msra.mxu0 0.0
    %1318 = vmatpush.xpose.msra.mxu0 0.0
    %1319 = vmatpush.xpose.msra.mxu0 0.0
    %1320 = vmatpush.xpose.msra.mxu0 %v1187
    %1321 = vmatmul.f32.gmra.mxu0 %v1131
    %v1322 = vpop.f32.mrf.mxu0
    %v1323 = vadd.f32 0.0, %v1322
    %1324 = vdwg.mxu0
    %v1325 = vmul.f32 %v1263, 0.088388346
    %v1326 = vmul.f32 %v1283, 0.088388346
    %v1327 = vmul.f32 %v1303, 0.088388346
    %v1328 = vmul.f32 %v1323, 0.088388346
    %v1333 = vperm.slane %v239, 0
    %v1334 = vperm.slane %v240, 0
    %v1335 = vperm.slane %v241, 0
    %v1336 = vperm.slane %v242, 0
    %v1341 = vadd.f32 %v1325, %v1333
    %v1342 = vadd.f32 %v1326, %v1334
    %v1343 = vadd.f32 %v1327, %v1335
    %v1344 = vadd.f32 %v1328, %v1336
    %vm1345 = vcmask 64512
    %v1346 = vsel %vm1345, %v1341, -inf
    %1347 = vmax.xlane.f32.xlu0 %v1346
    %v1348 = vpop.xlane.xlu0 %1347
    %v1349 = vsel %vm1345, %v1342, -inf
    %1350 = vmax.xlane.f32.xlu0 %v1349
    %v1351 = vpop.xlane.xlu0 %1350
    %v1352 = vsel %vm1345, %v1343, -inf
    %1353 = vmax.xlane.f32.xlu0 %v1352
    %v1354 = vpop.xlane.xlu0 %1353
    %v1355 = vsel %vm1345, %v1344, -inf
    %1356 = vmax.xlane.f32.xlu0 %v1355
    %v1357 = vpop.xlane.xlu0 %1356
    %v1358 = vsub.f32 %v1341, %v1348
    %v1359 = vsub.f32 %v1342, %v1351
    %v1360 = vsub.f32 %v1343, %v1354
    %v1361 = vsub.f32 %v1344, %v1357
    %v1362 = vmul.f32 %v1358, 1.442695
    %v1363 = vpow.pop %v1362
    %v1364 = vmul.f32 %v1359, 1.442695
    %v1365 = vpow.pop %v1364
    %v1366 = vmul.f32 %v1360, 1.442695
    %v1367 = vpow.pop %v1366
    %v1368 = vmul.f32 %v1361, 1.442695
    %v1369 = vpow.pop %v1368
    %v1370 = vsel %vm1345, %v1363, 0.0
    %1371 = vadd.xlane.f32.xlu0 %v1370
    %v1372 = vpop.xlane.xlu0 %1371
    %v1373 = vsel %vm1345, %v1365, 0.0
    %1374 = vadd.xlane.f32.xlu0 %v1373
    %v1375 = vpop.xlane.xlu0 %1374
    %v1376 = vsel %vm1345, %v1367, 0.0
    %1377 = vadd.xlane.f32.xlu0 %v1376
    %v1378 = vpop.xlane.xlu0 %1377
    %v1379 = vsel %vm1345, %v1369, 0.0
    %1380 = vadd.xlane.f32.xlu0 %v1379
    %v1381 = vpop.xlane.xlu0 %1380
    %v1382 = vrcp.pop %v1372
    %v1383 = vrcp.pop %v1375
    %v1384 = vrcp.pop %v1378
    %v1385 = vrcp.pop %v1381
    %v1386 = vmul.f32 %v1363, %v1382
    %v1387 = vmul.f32 %v1365, %v1383
    %v1388 = vmul.f32 %v1367, %v1384
    %v1389 = vmul.f32 %v1369, %v1385
    %v1391 = vsel %vm1345, %v1386, 0
    %1393 = vmatpush.msra.mxu0 0.0
    %1394 = vmatpush.msra.mxu0 0.0
    %1395 = vmatpush.msra.mxu0 0.0
    %1396 = vmatpush.msra.mxu0 0.0
    %1397 = vmatpush.msra.mxu0 0.0
    %1398 = vmatpush.msra.mxu0 0.0
    %1399 = vmatpush.msra.mxu0 0.0
    %1400 = vmatpush.msra.mxu0 0.0
    %1401 = vmatpush.msra.mxu0 0.0
    %1402 = vmatpush.msra.mxu0 0.0
    %1403 = vmatpush.msra.mxu0 0.0
    %1404 = vmatpush.msra.mxu0 0.0
    %1405 = vmatpush.msra.mxu0 0.0
    %1406 = vmatpush.msra.mxu0 0.0
    %1407 = vmatpush.msra.mxu0 0.0
    %1408 = vmatpush.msra.mxu0 %v1213
    %1409 = vmatmul.f32.gmra.mxu0 %v1391
    %v1410 = vpop.f32.mrf.mxu0
    %v1411 = vadd.f32 0.0, %v1410
    %1412 = vdwg.mxu0
    %v1414 = vsel %vm1345, %v1387, 0
    %1416 = vmatpush.msra.mxu0 0.0
    %1417 = vmatpush.msra.mxu0 0.0
    %1418 = vmatpush.msra.mxu0 0.0
    %1419 = vmatpush.msra.mxu0 0.0
    %1420 = vmatpush.msra.mxu0 0.0
    %1421 = vmatpush.msra.mxu0 0.0
    %1422 = vmatpush.msra.mxu0 0.0
    %1423 = vmatpush.msra.mxu0 0.0
    %1424 = vmatpush.msra.mxu0 0.0
    %1425 = vmatpush.msra.mxu0 0.0
    %1426 = vmatpush.msra.mxu0 0.0
    %1427 = vmatpush.msra.mxu0 0.0
    %1428 = vmatpush.msra.mxu0 0.0
    %1429 = vmatpush.msra.mxu0 0.0
    %1430 = vmatpush.msra.mxu0 0.0
    %1431 = vmatpush.msra.mxu0 %v1215
    %1432 = vmatmul.f32.gmra.mxu0 %v1414
    %v1433 = vpop.f32.mrf.mxu0
    %v1434 = vadd.f32 0.0, %v1433
    %1435 = vdwg.mxu0
    %v1437 = vsel %vm1345, %v1388, 0
    %1439 = vmatpush.msra.mxu0 0.0
    %1440 = vmatpush.msra.mxu0 0.0
    %1441 = vmatpush.msra.mxu0 0.0
    %1442 = vmatpush.msra.mxu0 0.0
    %1443 = vmatpush.msra.mxu0 0.0
    %1444 = vmatpush.msra.mxu0 0.0
    %1445 = vmatpush.msra.mxu0 0.0
    %1446 = vmatpush.msra.mxu0 0.0
    %1447 = vmatpush.msra.mxu0 0.0
    %1448 = vmatpush.msra.mxu0 0.0
    %1449 = vmatpush.msra.mxu0 0.0
    %1450 = vmatpush.msra.mxu0 0.0
    %1451 = vmatpush.msra.mxu0 0.0
    %1452 = vmatpush.msra.mxu0 0.0
    %1453 = vmatpush.msra.mxu0 0.0
    %1454 = vmatpush.msra.mxu0 %v1241
    %1455 = vmatmul.f32.gmra.mxu0 %v1437
    %v1456 = vpop.f32.mrf.mxu0
    %v1457 = vadd.f32 0.0, %v1456
    %1458 = vdwg.mxu0
    %v1460 = vsel %vm1345, %v1389, 0
    %1462 = vmatpush.msra.mxu0 0.0
    %1463 = vmatpush.msra.mxu0 0.0
    %1464 = vmatpush.msra.mxu0 0.0
    %1465 = vmatpush.msra.mxu0 0.0
    %1466 = vmatpush.msra.mxu0 0.0
    %1467 = vmatpush.msra.mxu0 0.0
    %1468 = vmatpush.msra.mxu0 0.0
    %1469 = vmatpush.msra.mxu0 0.0
    %1470 = vmatpush.msra.mxu0 0.0
    %1471 = vmatpush.msra.mxu0 0.0
    %1472 = vmatpush.msra.mxu0 0.0
    %1473 = vmatpush.msra.mxu0 0.0
    %1474 = vmatpush.msra.mxu0 0.0
    %1475 = vmatpush.msra.mxu0 0.0
    %1476 = vmatpush.msra.mxu0 0.0
    %1477 = vmatpush.msra.mxu0 %v1243
    %1478 = vmatmul.f32.gmra.mxu0 %v1460
    %v1479 = vpop.f32.mrf.mxu0
    %v1480 = vadd.f32 0.0, %v1479
    %1481 = vdwg.mxu0
    %v1482 = vpack.c.bf16 %v1434, %v1411
    %v1483 = vpack.c.bf16 %v1480, %v1457
    %v1485 = vperm.slane %v372, 0
    %v1486 = vperm.slane %v372, 1
    %v1521 = vunpack.c.l.b16 %v340
    %v1522 = vunpack.c.h.b16 %v340
    %v1523 = vunpack.c.l.b16 %v341
    %v1524 = vunpack.c.h.b16 %v341
    %v1525 = vunpack.c.l.b16 %v342
    %v1526 = vunpack.c.h.b16 %v342
    %v1527 = vunpack.c.l.b16 %v343
    %v1528 = vunpack.c.h.b16 %v343
    %v1529 = vunpack.c.l.b16 %v344
    %v1530 = vunpack.c.h.b16 %v344
    %v1531 = vunpack.c.l.b16 %v345
    %v1532 = vunpack.c.h.b16 %v345
    %v1533 = vunpack.c.l.b16 %v346
    %v1534 = vunpack.c.h.b16 %v346
    %v1535 = vunpack.c.l.b16 %v347
    %v1536 = vunpack.c.h.b16 %v347
    %v1537 = vunpack.c.l.b16 %v348
    %v1538 = vunpack.c.h.b16 %v348
    %v1539 = vunpack.c.l.b16 %v349
    %v1540 = vunpack.c.h.b16 %v349
    %v1541 = vunpack.c.l.b16 %v350
    %v1542 = vunpack.c.h.b16 %v350
    %v1543 = vunpack.c.l.b16 %v351
    %v1544 = vunpack.c.h.b16 %v351
    %v1545 = vunpack.c.l.b16 %v352
    %v1546 = vunpack.c.h.b16 %v352
    %v1547 = vunpack.c.l.b16 %v353
    %v1548 = vunpack.c.h.b16 %v353
    %v1549 = vunpack.c.l.b16 %v354
    %v1550 = vunpack.c.h.b16 %v354
    %v1551 = vunpack.c.l.b16 %v355
    %v1552 = vunpack.c.h.b16 %v355
    %v1553 = vunpack.c.l.b16 %v356
    %v1554 = vunpack.c.h.b16 %v356
    %v1555 = vunpack.c.l.b16 %v357
    %v1556 = vunpack.c.h.b16 %v357
    %v1557 = vunpack.c.l.b16 %v358
    %v1558 = vunpack.c.h.b16 %v358
    %v1559 = vunpack.c.l.b16 %v359
    %v1560 = vunpack.c.h.b16 %v359
    %v1561 = vunpack.c.l.b16 %v360
    %v1562 = vunpack.c.h.b16 %v360
    %v1563 = vunpack.c.l.b16 %v361
    %v1564 = vunpack.c.h.b16 %v361
    %v1565 = vunpack.c.l.b16 %v362
    %v1566 = vunpack.c.h.b16 %v362
    %v1567 = vunpack.c.l.b16 %v363
    %v1568 = vunpack.c.h.b16 %v363
    %v1569 = vunpack.c.l.b16 %v364
    %v1570 = vunpack.c.h.b16 %v364
    %v1571 = vunpack.c.l.b16 %v365
    %v1572 = vunpack.c.h.b16 %v365
    %v1573 = vunpack.c.l.b16 %v366
    %v1574 = vunpack.c.h.b16 %v366
    %v1575 = vunpack.c.l.b16 %v367
    %v1576 = vunpack.c.h.b16 %v367
    %v1577 = vunpack.c.l.b16 %v368
    %v1578 = vunpack.c.h.b16 %v368
    %v1579 = vunpack.c.l.b16 %v369
    %v1580 = vunpack.c.h.b16 %v369
    %v1581 = vunpack.c.l.b16 %v370
    %v1582 = vunpack.c.h.b16 %v370
    %v1583 = vunpack.c.l.b16 %v371
    %v1584 = vunpack.c.h.b16 %v371
    %v1585 = vpack.c.b16 %v1523, %v1521
    %v1586 = vpack.c.b16 %v1524, %v1522
    %v1587 = vpack.c.b16 %v1527, %v1525
    %v1588 = vpack.c.b16 %v1528, %v1526
    %v1589 = vpack.c.b16 %v1531, %v1529
    %v1590 = vpack.c.b16 %v1532, %v1530
    %v1591 = vpack.c.b16 %v1535, %v1533
    %v1592 = vpack.c.b16 %v1536, %v1534
    %v1593 = vpack.c.b16 %v1539, %v1537
    %v1594 = vpack.c.b16 %v1540, %v1538
    %v1595 = vpack.c.b16 %v1543, %v1541
    %v1596 = vpack.c.b16 %v1544, %v1542
    %v1597 = vpack.c.b16 %v1547, %v1545
    %v1598 = vpack.c.b16 %v1548, %v1546
    %v1599 = vpack.c.b16 %v1551, %v1549
    %v1600 = vpack.c.b16 %v1552, %v1550
    %v1601 = vpack.c.b16 %v1555, %v1553
    %v1602 = vpack.c.b16 %v1556, %v1554
    %v1603 = vpack.c.b16 %v1559, %v1557
    %v1604 = vpack.c.b16 %v1560, %v1558
    %v1605 = vpack.c.b16 %v1563, %v1561
    %v1606 = vpack.c.b16 %v1564, %v1562
    %v1607 = vpack.c.b16 %v1567, %v1565
    %v1608 = vpack.c.b16 %v1568, %v1566
    %v1609 = vpack.c.b16 %v1571, %v1569
    %v1610 = vpack.c.b16 %v1572, %v1570
    %v1611 = vpack.c.b16 %v1575, %v1573
    %v1612 = vpack.c.b16 %v1576, %v1574
    %v1613 = vpack.c.b16 %v1579, %v1577
    %v1614 = vpack.c.b16 %v1580, %v1578
    %v1615 = vpack.c.b16 %v1583, %v1581
    %v1616 = vpack.c.b16 %v1584, %v1582
    %1649 = vmatpush.bf16.msra.mxu0 %v1599
    %1650 = vmatpush.bf16.msra.mxu0 %v1597
    %1651 = vmatpush.bf16.msra.mxu0 %v1595
    %1652 = vmatpush.bf16.msra.mxu0 %v1593
    %1653 = vmatpush.bf16.msra.mxu0 %v1591
    %1654 = vmatpush.bf16.msra.mxu0 %v1589
    %1655 = vmatpush.bf16.msra.mxu0 %v1587
    %1656 = vmatpush.bf16.msra.mxu0 %v1585
    %1657 = vmatmul.bf16.gmra.mxu0 %v1482
    %v1658 = vpop.f32.mrf.mxu0
    %v1659 = vadd.f32 %v1485, %v1658
    %v1660 = vpop.f32.mrf.mxu0
    %v1661 = vadd.f32 %v1485, %v1660
    %1662 = vdwg.mxu0
    %1663 = vmatpush.bf16.msra.mxu0 %v1615
    %1664 = vmatpush.bf16.msra.mxu0 %v1613
    %1665 = vmatpush.bf16.msra.mxu0 %v1611
    %1666 = vmatpush.bf16.msra.mxu0 %v1609
    %1667 = vmatpush.bf16.msra.mxu0 %v1607
    %1668 = vmatpush.bf16.msra.mxu0 %v1605
    %1669 = vmatpush.bf16.msra.mxu0 %v1603
    %1670 = vmatpush.bf16.msra.mxu0 %v1601
    %1671 = vmatmul.bf16.gmra.mxu0 %v1483
    %v1672 = vpop.f32.mrf.mxu0
    %v1673 = vadd.f32 %v1659, %v1672
    %v1674 = vpop.f32.mrf.mxu0
    %v1675 = vadd.f32 %v1661, %v1674
    %1676 = vdwg.mxu0
    %1677 = vmatpush.bf16.msra.mxu0 %v1600
    %1678 = vmatpush.bf16.msra.mxu0 %v1598
    %1679 = vmatpush.bf16.msra.mxu0 %v1596
    %1680 = vmatpush.bf16.msra.mxu0 %v1594
    %1681 = vmatpush.bf16.msra.mxu0 %v1592
    %1682 = vmatpush.bf16.msra.mxu0 %v1590
    %1683 = vmatpush.bf16.msra.mxu0 %v1588
    %1684 = vmatpush.bf16.msra.mxu0 %v1586
    %1685 = vmatmul.bf16.gmra.mxu0 %v1482
    %v1686 = vpop.f32.mrf.mxu0
    %v1687 = vadd.f32 %v1486, %v1686
    %v1688 = vpop.f32.mrf.mxu0
    %v1689 = vadd.f32 %v1486, %v1688
    %1690 = vdwg.mxu0
    %1691 = vmatpush.bf16.msra.mxu0 %v1616
    %1692 = vmatpush.bf16.msra.mxu0 %v1614
    %1693 = vmatpush.bf16.msra.mxu0 %v1612
    %1694 = vmatpush.bf16.msra.mxu0 %v1610
    %1695 = vmatpush.bf16.msra.mxu0 %v1608
    %1696 = vmatpush.bf16.msra.mxu0 %v1606
    %1697 = vmatpush.bf16.msra.mxu0 %v1604
    %1698 = vmatpush.bf16.msra.mxu0 %v1602
    %1699 = vmatmul.bf16.gmra.mxu0 %v1483
    %v1700 = vpop.f32.mrf.mxu0
    %v1701 = vadd.f32 %v1687, %v1700
    %v1702 = vpop.f32.mrf.mxu0
    %v1703 = vadd.f32 %v1689, %v1702
    %1704 = vdwg.mxu0
    %v1705 = vadd.f32 %v235, %v1673
    %v1706 = vadd.f32 %v236, %v1701
    %v1707 = vadd.f32 %v237, %v1675
    %v1708 = vadd.f32 %v238, %v1703
    %v1709 = vadd.f32 %v1705, %v1706
    %1710 = vadd.xlane.f32.xlu0 %v1709
    %v1711 = vpop.xlane.xlu0 %1710
    %v1712 = vadd.f32 %v1707, %v1708
    %1713 = vadd.xlane.f32.xlu0 %v1712
    %v1714 = vpop.xlane.xlu0 %1713
    %v1715 = vmul.f32 %v1711, %v519
    %v1716 = vmul.f32 %v1714, %v519
    %v1717 = vsub.f32 %v1705, %v1715
    %v1718 = vsub.f32 %v1706, %v1715
    %v1719 = vsub.f32 %v1707, %v1716
    %v1720 = vsub.f32 %v1708, %v1716
    %v1721 = vmul.f32 %v1717, %v1717
    %v1722 = vmul.f32 %v1718, %v1718
    %v1723 = vmul.f32 %v1719, %v1719
    %v1724 = vmul.f32 %v1720, %v1720
    %v1725 = vadd.f32 %v1721, %v1722
    %1726 = vadd.xlane.f32.xlu0 %v1725
    %v1727 = vpop.xlane.xlu0 %1726
    %v1728 = vadd.f32 %v1723, %v1724
    %1729 = vadd.xlane.f32.xlu0 %v1728
    %v1730 = vpop.xlane.xlu0 %1729
    %v1731 = vmul.f32 %v1727, %v519
    %v1732 = vmul.f32 %v1730, %v519
    %v1733 = vadd.f32 %v1731, 1e-05
    %v1734 = vadd.f32 %v1732, 1e-05
    %v1735 = vrsqrt.pop %v1733
    %v1736 = vmul.f32 %v1735, %v1733
    %v1737 = vmul.f32 %v1736, %v1735
    %v1738 = vmul.f32 0.5, %v1737
    %v1739 = vsub.f32 1.5, %v1738
    %v1740 = vmul.f32 %v1735, %v1739
    %vm1741 = vweird.f32 %v1733
    %vm1742 = vweird.f32 %v1735
    %vm1743 = vmor %vm1741, %vm1742
    %v1744 = vsel %vm1743, %v1735, %v1740
    %v1745 = vrsqrt.pop %v1734
    %v1746 = vmul.f32 %v1745, %v1734
    %v1747 = vmul.f32 %v1746, %v1745
    %v1748 = vmul.f32 0.5, %v1747
    %v1749 = vsub.f32 1.5, %v1748
    %v1750 = vmul.f32 %v1745, %v1749
    %vm1751 = vweird.f32 %v1734
    %vm1752 = vweird.f32 %v1745
    %vm1753 = vmor %vm1751, %vm1752
    %v1754 = vsel %vm1753, %v1745, %v1750
    %v1755 = vmul.f32 %v1717, %v1744
    %v1756 = vmul.f32 %v1718, %v1744
    %v1757 = vmul.f32 %v1719, %v1754
    %v1758 = vmul.f32 %v1720, %v1754
    %v1760 = vperm.slane %v375, 0
    %v1761 = vperm.slane %v375, 1
    %v1764 = vmul.f32 %v1755, %v1760
    %v1765 = vmul.f32 %v1756, %v1761
    %v1766 = vmul.f32 %v1757, %v1760
    %v1767 = vmul.f32 %v1758, %v1761
    %v1769 = vperm.slane %v376, 0
    %v1770 = vperm.slane %v376, 1
    %v1773 = vadd.f32 %v1764, %v1769
    %v1774 = vadd.f32 %v1765, %v1770
    %v1775 = vadd.f32 %v1766, %v1769
    %v1776 = vadd.f32 %v1767, %v1770
    %v1777 = vpack.c.bf16 %v1775, %v1773
    %v1778 = vpack.c.bf16 %v1776, %v1774
    %v1780 = vperm.slane %v441, 0
    %v1781 = vperm.slane %v441, 1
    %v1782 = vperm.slane %v441, 2
    %v1783 = vperm.slane %v441, 3
    %v1852 = vunpack.c.l.b16 %v377
    %v1853 = vunpack.c.h.b16 %v377
    %v1854 = vunpack.c.l.b16 %v378
    %v1855 = vunpack.c.h.b16 %v378
    %v1856 = vunpack.c.l.b16 %v379
    %v1857 = vunpack.c.h.b16 %v379
    %v1858 = vunpack.c.l.b16 %v380
    %v1859 = vunpack.c.h.b16 %v380
    %v1860 = vunpack.c.l.b16 %v381
    %v1861 = vunpack.c.h.b16 %v381
    %v1862 = vunpack.c.l.b16 %v382
    %v1863 = vunpack.c.h.b16 %v382
    %v1864 = vunpack.c.l.b16 %v383
    %v1865 = vunpack.c.h.b16 %v383
    %v1866 = vunpack.c.l.b16 %v384
    %v1867 = vunpack.c.h.b16 %v384
    %v1868 = vunpack.c.l.b16 %v385
    %v1869 = vunpack.c.h.b16 %v385
    %v1870 = vunpack.c.l.b16 %v386
    %v1871 = vunpack.c.h.b16 %v386
    %v1872 = vunpack.c.l.b16 %v387
    %v1873 = vunpack.c.h.b16 %v387
    %v1874 = vunpack.c.l.b16 %v388
    %v1875 = vunpack.c.h.b16 %v388
    %v1876 = vunpack.c.l.b16 %v389
    %v1877 = vunpack.c.h.b16 %v389
    %v1878 = vunpack.c.l.b16 %v390
    %v1879 = vunpack.c.h.b16 %v390
    %v1880 = vunpack.c.l.b16 %v391
    %v1881 = vunpack.c.h.b16 %v391
    %v1882 = vunpack.c.l.b16 %v392
    %v1883 = vunpack.c.h.b16 %v392
    %v1884 = vunpack.c.l.b16 %v393
    %v1885 = vunpack.c.h.b16 %v393
    %v1886 = vunpack.c.l.b16 %v394
    %v1887 = vunpack.c.h.b16 %v394
    %v1888 = vunpack.c.l.b16 %v395
    %v1889 = vunpack.c.h.b16 %v395
    %v1890 = vunpack.c.l.b16 %v396
    %v1891 = vunpack.c.h.b16 %v396
    %v1892 = vunpack.c.l.b16 %v397
    %v1893 = vunpack.c.h.b16 %v397
    %v1894 = vunpack.c.l.b16 %v398
    %v1895 = vunpack.c.h.b16 %v398
    %v1896 = vunpack.c.l.b16 %v399
    %v1897 = vunpack.c.h.b16 %v399
    %v1898 = vunpack.c.l.b16 %v400
    %v1899 = vunpack.c.h.b16 %v400
    %v1900 = vunpack.c.l.b16 %v401
    %v1901 = vunpack.c.h.b16 %v401
    %v1902 = vunpack.c.l.b16 %v402
    %v1903 = vunpack.c.h.b16 %v402
    %v1904 = vunpack.c.l.b16 %v403
    %v1905 = vunpack.c.h.b16 %v403
    %v1906 = vunpack.c.l.b16 %v404
    %v1907 = vunpack.c.h.b16 %v404
    %v1908 = vunpack.c.l.b16 %v405
    %v1909 = vunpack.c.h.b16 %v405
    %v1910 = vunpack.c.l.b16 %v406
    %v1911 = vunpack.c.h.b16 %v406
    %v1912 = vunpack.c.l.b16 %v407
    %v1913 = vunpack.c.h.b16 %v407
    %v1914 = vunpack.c.l.b16 %v408
    %v1915 = vunpack.c.h.b16 %v408
    %v1916 = vunpack.c.l.b16 %v409
    %v1917 = vunpack.c.h.b16 %v409
    %v1918 = vunpack.c.l.b16 %v410
    %v1919 = vunpack.c.h.b16 %v410
    %v1920 = vunpack.c.l.b16 %v411
    %v1921 = vunpack.c.h.b16 %v411
    %v1922 = vunpack.c.l.b16 %v412
    %v1923 = vunpack.c.h.b16 %v412
    %v1924 = vunpack.c.l.b16 %v413
    %v1925 = vunpack.c.h.b16 %v413
    %v1926 = vunpack.c.l.b16 %v414
    %v1927 = vunpack.c.h.b16 %v414
    %v1928 = vunpack.c.l.b16 %v415
    %v1929 = vunpack.c.h.b16 %v415
    %v1930 = vunpack.c.l.b16 %v416
    %v1931 = vunpack.c.h.b16 %v416
    %v1932 = vunpack.c.l.b16 %v417
    %v1933 = vunpack.c.h.b16 %v417
    %v1934 = vunpack.c.l.b16 %v418
    %v1935 = vunpack.c.h.b16 %v418
    %v1936 = vunpack.c.l.b16 %v419
    %v1937 = vunpack.c.h.b16 %v419
    %v1938 = vunpack.c.l.b16 %v420
    %v1939 = vunpack.c.h.b16 %v420
    %v1940 = vunpack.c.l.b16 %v421
    %v1941 = vunpack.c.h.b16 %v421
    %v1942 = vunpack.c.l.b16 %v422
    %v1943 = vunpack.c.h.b16 %v422
    %v1944 = vunpack.c.l.b16 %v423
    %v1945 = vunpack.c.h.b16 %v423
    %v1946 = vunpack.c.l.b16 %v424
    %v1947 = vunpack.c.h.b16 %v424
    %v1948 = vunpack.c.l.b16 %v425
    %v1949 = vunpack.c.h.b16 %v425
    %v1950 = vunpack.c.l.b16 %v426
    %v1951 = vunpack.c.h.b16 %v426
    %v1952 = vunpack.c.l.b16 %v427
    %v1953 = vunpack.c.h.b16 %v427
    %v1954 = vunpack.c.l.b16 %v428
    %v1955 = vunpack.c.h.b16 %v428
    %v1956 = vunpack.c.l.b16 %v429
    %v1957 = vunpack.c.h.b16 %v429
    %v1958 = vunpack.c.l.b16 %v430
    %v1959 = vunpack.c.h.b16 %v430
    %v1960 = vunpack.c.l.b16 %v431
    %v1961 = vunpack.c.h.b16 %v431
    %v1962 = vunpack.c.l.b16 %v432
    %v1963 = vunpack.c.h.b16 %v432
    %v1964 = vunpack.c.l.b16 %v433
    %v1965 = vunpack.c.h.b16 %v433
    %v1966 = vunpack.c.l.b16 %v434
    %v1967 = vunpack.c.h.b16 %v434
    %v1968 = vunpack.c.l.b16 %v435
    %v1969 = vunpack.c.h.b16 %v435
    %v1970 = vunpack.c.l.b16 %v436
    %v1971 = vunpack.c.h.b16 %v436
    %v1972 = vunpack.c.l.b16 %v437
    %v1973 = vunpack.c.h.b16 %v437
    %v1974 = vunpack.c.l.b16 %v438
    %v1975 = vunpack.c.h.b16 %v438
    %v1976 = vunpack.c.l.b16 %v439
    %v1977 = vunpack.c.h.b16 %v439
    %v1978 = vunpack.c.l.b16 %v440
    %v1979 = vunpack.c.h.b16 %v440
    %v1980 = vpack.c.b16 %v1856, %v1852
    %v1981 = vpack.c.b16 %v1857, %v1853
    %v1982 = vpack.c.b16 %v1858, %v1854
    %v1983 = vpack.c.b16 %v1859, %v1855
    %v1984 = vpack.c.b16 %v1864, %v1860
    %v1985 = vpack.c.b16 %v1865, %v1861
    %v1986 = vpack.c.b16 %v1866, %v1862
    %v1987 = vpack.c.b16 %v1867, %v1863
    %v1988 = vpack.c.b16 %v1872, %v1868
    %v1989 = vpack.c.b16 %v1873, %v1869
    %v1990 = vpack.c.b16 %v1874, %v1870
    %v1991 = vpack.c.b16 %v1875, %v1871
    %v1992 = vpack.c.b16 %v1880, %v1876
    %v1993 = vpack.c.b16 %v1881, %v1877
    %v1994 = vpack.c.b16 %v1882, %v1878
    %v1995 = vpack.c.b16 %v1883, %v1879
    %v1996 = vpack.c.b16 %v1888, %v1884
    %v1997 = vpack.c.b16 %v1889, %v1885
    %v1998 = vpack.c.b16 %v1890, %v1886
    %v1999 = vpack.c.b16 %v1891, %v1887
    %v2000 = vpack.c.b16 %v1896, %v1892
    %v2001 = vpack.c.b16 %v1897, %v1893
    %v2002 = vpack.c.b16 %v1898, %v1894
    %v2003 = vpack.c.b16 %v1899, %v1895
    %v2004 = vpack.c.b16 %v1904, %v1900
    %v2005 = vpack.c.b16 %v1905, %v1901
    %v2006 = vpack.c.b16 %v1906, %v1902
    %v2007 = vpack.c.b16 %v1907, %v1903
    %v2008 = vpack.c.b16 %v1912, %v1908
    %v2009 = vpack.c.b16 %v1913, %v1909
    %v2010 = vpack.c.b16 %v1914, %v1910
    %v2011 = vpack.c.b16 %v1915, %v1911
    %v2012 = vpack.c.b16 %v1920, %v1916
    %v2013 = vpack.c.b16 %v1921, %v1917
    %v2014 = vpack.c.b16 %v1922, %v1918
    %v2015 = vpack.c.b16 %v1923, %v1919
    %v2016 = vpack.c.b16 %v1928, %v1924
    %v2017 = vpack.c.b16 %v1929, %v1925
    %v2018 = vpack.c.b16 %v1930, %v1926
    %v2019 = vpack.c.b16 %v1931, %v1927
    %v2020 = vpack.c.b16 %v1936, %v1932
    %v2021 = vpack.c.b16 %v1937, %v1933
    %v2022 = vpack.c.b16 %v1938, %v1934
    %v2023 = vpack.c.b16 %v1939, %v1935
    %v2024 = vpack.c.b16 %v1944, %v1940
    %v2025 = vpack.c.b16 %v1945, %v1941
    %v2026 = vpack.c.b16 %v1946, %v1942
    %v2027 = vpack.c.b16 %v1947, %v1943
    %v2028 = vpack.c.b16 %v1952, %v1948
    %v2029 = vpack.c.b16 %v1953, %v1949
    %v2030 = vpack.c.b16 %v1954, %v1950
    %v2031 = vpack.c.b16 %v1955, %v1951
    %v2032 = vpack.c.b16 %v1960, %v1956
    %v2033 = vpack.c.b16 %v1961, %v1957
    %v2034 = vpack.c.b16 %v1962, %v1958
    %v2035 = vpack.c.b16 %v1963, %v1959
    %v2036 = vpack.c.b16 %v1968, %v1964
    %v2037 = vpack.c.b16 %v1969, %v1965
    %v2038 = vpack.c.b16 %v1970, %v1966
    %v2039 = vpack.c.b16 %v1971, %v1967
    %v2040 = vpack.c.b16 %v1976, %v1972
    %v2041 = vpack.c.b16 %v1977, %v1973
    %v2042 = vpack.c.b16 %v1978, %v1974
    %v2043 = vpack.c.b16 %v1979, %v1975
    %2108 = vmatpush.bf16.msra.mxu0 %v2008
    %2109 = vmatpush.bf16.msra.mxu0 %v2004
    %2110 = vmatpush.bf16.msra.mxu0 %v2000
    %2111 = vmatpush.bf16.msra.mxu0 %v1996
    %2112 = vmatpush.bf16.msra.mxu0 %v1992
    %2113 = vmatpush.bf16.msra.mxu0 %v1988
    %2114 = vmatpush.bf16.msra.mxu0 %v1984
    %2115 = vmatpush.bf16.msra.mxu0 %v1980
    %2116 = vmatmul.bf16.gmra.mxu0 %v1777
    %v2117 = vpop.f32.mrf.mxu0
    %v2118 = vadd.f32 %v1780, %v2117
    %v2119 = vpop.f32.mrf.mxu0
    %v2120 = vadd.f32 %v1780, %v2119
    %2121 = vdwg.mxu0
    %2122 = vmatpush.bf16.msra.mxu0 %v2040
    %2123 = vmatpush.bf16.msra.mxu0 %v2036
    %2124 = vmatpush.bf16.msra.mxu0 %v2032
    %2125 = vmatpush.bf16.msra.mxu0 %v2028
    %2126 = vmatpush.bf16.msra.mxu0 %v2024
    %2127 = vmatpush.bf16.msra.mxu0 %v2020
    %2128 = vmatpush.bf16.msra.mxu0 %v2016
    %2129 = vmatpush.bf16.msra.mxu0 %v2012
    %2130 = vmatmul.bf16.gmra.mxu0 %v1778
    %v2131 = vpop.f32.mrf.mxu0
    %v2132 = vadd.f32 %v2118, %v2131
    %v2133 = vpop.f32.mrf.mxu0
    %v2134 = vadd.f32 %v2120, %v2133
    %2135 = vdwg.mxu0
    %2136 = vmatpush.bf16.msra.mxu0 %v2009
    %2137 = vmatpush.bf16.msra.mxu0 %v2005
    %2138 = vmatpush.bf16.msra.mxu0 %v2001
    %2139 = vmatpush.bf16.msra.mxu0 %v1997
    %2140 = vmatpush.bf16.msra.mxu0 %v1993
    %2141 = vmatpush.bf16.msra.mxu0 %v1989
    %2142 = vmatpush.bf16.msra.mxu0 %v1985
    %2143 = vmatpush.bf16.msra.mxu0 %v1981
    %2144 = vmatmul.bf16.gmra.mxu0 %v1777
    %v2145 = vpop.f32.mrf.mxu0
    %v2146 = vadd.f32 %v1781, %v2145
    %v2147 = vpop.f32.mrf.mxu0
    %v2148 = vadd.f32 %v1781, %v2147
    %2149 = vdwg.mxu0
    %2150 = vmatpush.bf16.msra.mxu0 %v2041
    %2151 = vmatpush.bf16.msra.mxu0 %v2037
    %2152 = vmatpush.bf16.msra.mxu0 %v2033
    %2153 = vmatpush.bf16.msra.mxu0 %v2029
    %2154 = vmatpush.bf16.msra.mxu0 %v2025
    %2155 = vmatpush.bf16.msra.mxu0 %v2021
    %2156 = vmatpush.bf16.msra.mxu0 %v2017
    %2157 = vmatpush.bf16.msra.mxu0 %v2013
    %2158 = vmatmul.bf16.gmra.mxu0 %v1778
    %v2159 = vpop.f32.mrf.mxu0
    %v2160 = vadd.f32 %v2146, %v2159
    %v2161 = vpop.f32.mrf.mxu0
    %v2162 = vadd.f32 %v2148, %v2161
    %2163 = vdwg.mxu0
    %2164 = vmatpush.bf16.msra.mxu0 %v2010
    %2165 = vmatpush.bf16.msra.mxu0 %v2006
    %2166 = vmatpush.bf16.msra.mxu0 %v2002
    %2167 = vmatpush.bf16.msra.mxu0 %v1998
    %2168 = vmatpush.bf16.msra.mxu0 %v1994
    %2169 = vmatpush.bf16.msra.mxu0 %v1990
    %2170 = vmatpush.bf16.msra.mxu0 %v1986
    %2171 = vmatpush.bf16.msra.mxu0 %v1982
    %2172 = vmatmul.bf16.gmra.mxu0 %v1777
    %v2173 = vpop.f32.mrf.mxu0
    %v2174 = vadd.f32 %v1782, %v2173
    %v2175 = vpop.f32.mrf.mxu0
    %v2176 = vadd.f32 %v1782, %v2175
    %2177 = vdwg.mxu0
    %2178 = vmatpush.bf16.msra.mxu0 %v2042
    %2179 = vmatpush.bf16.msra.mxu0 %v2038
    %2180 = vmatpush.bf16.msra.mxu0 %v2034
    %2181 = vmatpush.bf16.msra.mxu0 %v2030
    %2182 = vmatpush.bf16.msra.mxu0 %v2026
    %2183 = vmatpush.bf16.msra.mxu0 %v2022
    %2184 = vmatpush.bf16.msra.mxu0 %v2018
    %2185 = vmatpush.bf16.msra.mxu0 %v2014
    %2186 = vmatmul.bf16.gmra.mxu0 %v1778
    %v2187 = vpop.f32.mrf.mxu0
    %v2188 = vadd.f32 %v2174, %v2187
    %v2189 = vpop.f32.mrf.mxu0
    %v2190 = vadd.f32 %v2176, %v2189
    %2191 = vdwg.mxu0
    %2192 = vmatpush.bf16.msra.mxu0 %v2011
    %2193 = vmatpush.bf16.msra.mxu0 %v2007
    %2194 = vmatpush.bf16.msra.mxu0 %v2003
    %2195 = vmatpush.bf16.msra.mxu0 %v1999
    %2196 = vmatpush.bf16.msra.mxu0 %v1995
    %2197 = vmatpush.bf16.msra.mxu0 %v1991
    %2198 = vmatpush.bf16.msra.mxu0 %v1987
    %2199 = vmatpush.bf16.msra.mxu0 %v1983
    %2200 = vmatmul.bf16.gmra.mxu0 %v1777
    %v2201 = vpop.f32.mrf.mxu0
    %v2202 = vadd.f32 %v1783, %v2201
    %v2203 = vpop.f32.mrf.mxu0
    %v2204 = vadd.f32 %v1783, %v2203
    %2205 = vdwg.mxu0
    %2206 = vmatpush.bf16.msra.mxu0 %v2043
    %2207 = vmatpush.bf16.msra.mxu0 %v2039
    %2208 = vmatpush.bf16.msra.mxu0 %v2035
    %2209 = vmatpush.bf16.msra.mxu0 %v2031
    %2210 = vmatpush.bf16.msra.mxu0 %v2027
    %2211 = vmatpush.bf16.msra.mxu0 %v2023
    %2212 = vmatpush.bf16.msra.mxu0 %v2019
    %2213 = vmatpush.bf16.msra.mxu0 %v2015
    %2214 = vmatmul.bf16.gmra.mxu0 %v1778
    %v2215 = vpop.f32.mrf.mxu0
    %v2216 = vadd.f32 %v2202, %v2215
    %v2217 = vpop.f32.mrf.mxu0
    %v2218 = vadd.f32 %v2204, %v2217
    %2219 = vdwg.mxu0
    %v2220 = vmul.f32 %v2132, 0.5
    %v2221 = vmul.f32 %v2160, 0.5
    %v2222 = vmul.f32 %v2188, 0.5
    %v2223 = vmul.f32 %v2216, 0.5
    %v2224 = vmul.f32 %v2134, 0.5
    %v2225 = vmul.f32 %v2162, 0.5
    %v2226 = vmul.f32 %v2190, 0.5
    %v2227 = vmul.f32 %v2218, 0.5
    %v2228 = vmul.f32 %v2132, 0.044715
    %v2229 = vmul.f32 %v2160, 0.044715
    %v2230 = vmul.f32 %v2188, 0.044715
    %v2231 = vmul.f32 %v2216, 0.044715
    %v2232 = vmul.f32 %v2134, 0.044715
    %v2233 = vmul.f32 %v2162, 0.044715
    %v2234 = vmul.f32 %v2190, 0.044715
    %v2235 = vmul.f32 %v2218, 0.044715
    %v2236 = vmul.f32 %v2228, %v2132
    %v2237 = vmul.f32 %v2229, %v2160
    %v2238 = vmul.f32 %v2230, %v2188
    %v2239 = vmul.f32 %v2231, %v2216
    %v2240 = vmul.f32 %v2232, %v2134
    %v2241 = vmul.f32 %v2233, %v2162
    %v2242 = vmul.f32 %v2234, %v2190
    %v2243 = vmul.f32 %v2235, %v2218
    %v2244 = vmul.f32 %v2236, %v2132
    %v2245 = vmul.f32 %v2237, %v2160
    %v2246 = vmul.f32 %v2238, %v2188
    %v2247 = vmul.f32 %v2239, %v2216
    %v2248 = vmul.f32 %v2240, %v2134
    %v2249 = vmul.f32 %v2241, %v2162
    %v2250 = vmul.f32 %v2242, %v2190
    %v2251 = vmul.f32 %v2243, %v2218
    %v2252 = vadd.f32 %v2132, %v2244
    %v2253 = vadd.f32 %v2160, %v2245
    %v2254 = vadd.f32 %v2188, %v2246
    %v2255 = vadd.f32 %v2216, %v2247
    %v2256 = vadd.f32 %v2134, %v2248
    %v2257 = vadd.f32 %v2162, %v2249
    %v2258 = vadd.f32 %v2190, %v2250
    %v2259 = vadd.f32 %v2218, %v2251
    %v2260 = vmul.f32 %v2252, 0.7978846
    %v2261 = vmul.f32 %v2253, 0.7978846
    %v2262 = vmul.f32 %v2254, 0.7978846
    %v2263 = vmul.f32 %v2255, 0.7978846
    %v2264 = vmul.f32 %v2256, 0.7978846
    %v2265 = vmul.f32 %v2257, 0.7978846
    %v2266 = vmul.f32 %v2258, 0.7978846
    %v2267 = vmul.f32 %v2259, 0.7978846
    %v2268 = vtanh.pop %v2260
    %v2269 = vtanh.pop %v2261
    %v2270 = vtanh.pop %v2262
    %v2271 = vtanh.pop %v2263
    %v2272 = vtanh.pop %v2264
    %v2273 = vtanh.pop %v2265
    %v2274 = vtanh.pop %v2266
    %v2275 = vtanh.pop %v2267
    %v2276 = vadd.f32 %v2268, 1.0
    %v2277 = vadd.f32 %v2269, 1.0
    %v2278 = vadd.f32 %v2270, 1.0
    %v2279 = vadd.f32 %v2271, 1.0
    %v2280 = vadd.f32 %v2272, 1.0
    %v2281 = vadd.f32 %v2273, 1.0
    %v2282 = vadd.f32 %v2274, 1.0
    %v2283 = vadd.f32 %v2275, 1.0
    %v2284 = vmul.f32 %v2220, %v2276
    %v2285 = vmul.f32 %v2221, %v2277
    %v2286 = vmul.f32 %v2222, %v2278
    %v2287 = vmul.f32 %v2223, %v2279
    %v2288 = vmul.f32 %v2224, %v2280
    %v2289 = vmul.f32 %v2225, %v2281
    %v2290 = vmul.f32 %v2226, %v2282
    %v2291 = vmul.f32 %v2227, %v2283
    %v2292 = vpack.c.bf16 %v2288, %v2284
    %v2293 = vpack.c.bf16 %v2289, %v2285
    %v2294 = vpack.c.bf16 %v2290, %v2286
    %v2295 = vpack.c.bf16 %v2291, %v2287
    %v2297 = vperm.slane %v506, 0
    %v2298 = vperm.slane %v506, 1
    %v2365 = vunpack.c.l.b16 %v442
    %v2366 = vunpack.c.h.b16 %v442
    %v2367 = vunpack.c.l.b16 %v443
    %v2368 = vunpack.c.h.b16 %v443
    %v2369 = vunpack.c.l.b16 %v444
    %v2370 = vunpack.c.h.b16 %v444
    %v2371 = vunpack.c.l.b16 %v445
    %v2372 = vunpack.c.h.b16 %v445
    %v2373 = vunpack.c.l.b16 %v446
    %v2374 = vunpack.c.h.b16 %v446
    %v2375 = vunpack.c.l.b16 %v447
    %v2376 = vunpack.c.h.b16 %v447
    %v2377 = vunpack.c.l.b16 %v448
    %v2378 = vunpack.c.h.b16 %v448
    %v2379 = vunpack.c.l.b16 %v449
    %v2380 = vunpack.c.h.b16 %v449
    %v2381 = vunpack.c.l.b16 %v450
    %v2382 = vunpack.c.h.b16 %v450
    %v2383 = vunpack.c.l.b16 %v451
    %v2384 = vunpack.c.h.b16 %v451
    %v2385 = vunpack.c.l.b16 %v452
    %v2386 = vunpack.c.h.b16 %v452
    %v2387 = vunpack.c.l.b16 %v453
    %v2388 = vunpack.c.h.b16 %v453
    %v2389 = vunpack.c.l.b16 %v454
    %v2390 = vunpack.c.h.b16 %v454
    %v2391 = vunpack.c.l.b16 %v455
    %v2392 = vunpack.c.h.b16 %v455
    %v2393 = vunpack.c.l.b16 %v456
    %v2394 = vunpack.c.h.b16 %v456
    %v2395 = vunpack.c.l.b16 %v457
    %v2396 = vunpack.c.h.b16 %v457
    %v2397 = vunpack.c.l.b16 %v458
    %v2398 = vunpack.c.h.b16 %v458
    %v2399 = vunpack.c.l.b16 %v459
    %v2400 = vunpack.c.h.b16 %v459
    %v2401 = vunpack.c.l.b16 %v460
    %v2402 = vunpack.c.h.b16 %v460
    %v2403 = vunpack.c.l.b16 %v461
    %v2404 = vunpack.c.h.b16 %v461
    %v2405 = vunpack.c.l.b16 %v462
    %v2406 = vunpack.c.h.b16 %v462
    %v2407 = vunpack.c.l.b16 %v463
    %v2408 = vunpack.c.h.b16 %v463
    %v2409 = vunpack.c.l.b16 %v464
    %v2410 = vunpack.c.h.b16 %v464
    %v2411 = vunpack.c.l.b16 %v465
    %v2412 = vunpack.c.h.b16 %v465
    %v2413 = vunpack.c.l.b16 %v466
    %v2414 = vunpack.c.h.b16 %v466
    %v2415 = vunpack.c.l.b16 %v467
    %v2416 = vunpack.c.h.b16 %v467
    %v2417 = vunpack.c.l.b16 %v468
    %v2418 = vunpack.c.h.b16 %v468
    %v2419 = vunpack.c.l.b16 %v469
    %v2420 = vunpack.c.h.b16 %v469
    %v2421 = vunpack.c.l.b16 %v470
    %v2422 = vunpack.c.h.b16 %v470
    %v2423 = vunpack.c.l.b16 %v471
    %v2424 = vunpack.c.h.b16 %v471
    %v2425 = vunpack.c.l.b16 %v472
    %v2426 = vunpack.c.h.b16 %v472
    %v2427 = vunpack.c.l.b16 %v473
    %v2428 = vunpack.c.h.b16 %v473
    %v2429 = vunpack.c.l.b16 %v474
    %v2430 = vunpack.c.h.b16 %v474
    %v2431 = vunpack.c.l.b16 %v475
    %v2432 = vunpack.c.h.b16 %v475
    %v2433 = vunpack.c.l.b16 %v476
    %v2434 = vunpack.c.h.b16 %v476
    %v2435 = vunpack.c.l.b16 %v477
    %v2436 = vunpack.c.h.b16 %v477
    %v2437 = vunpack.c.l.b16 %v478
    %v2438 = vunpack.c.h.b16 %v478
    %v2439 = vunpack.c.l.b16 %v479
    %v2440 = vunpack.c.h.b16 %v479
    %v2441 = vunpack.c.l.b16 %v480
    %v2442 = vunpack.c.h.b16 %v480
    %v2443 = vunpack.c.l.b16 %v481
    %v2444 = vunpack.c.h.b16 %v481
    %v2445 = vunpack.c.l.b16 %v482
    %v2446 = vunpack.c.h.b16 %v482
    %v2447 = vunpack.c.l.b16 %v483
    %v2448 = vunpack.c.h.b16 %v483
    %v2449 = vunpack.c.l.b16 %v484
    %v2450 = vunpack.c.h.b16 %v484
    %v2451 = vunpack.c.l.b16 %v485
    %v2452 = vunpack.c.h.b16 %v485
    %v2453 = vunpack.c.l.b16 %v486
    %v2454 = vunpack.c.h.b16 %v486
    %v2455 = vunpack.c.l.b16 %v487
    %v2456 = vunpack.c.h.b16 %v487
    %v2457 = vunpack.c.l.b16 %v488
    %v2458 = vunpack.c.h.b16 %v488
    %v2459 = vunpack.c.l.b16 %v489
    %v2460 = vunpack.c.h.b16 %v489
    %v2461 = vunpack.c.l.b16 %v490
    %v2462 = vunpack.c.h.b16 %v490
    %v2463 = vunpack.c.l.b16 %v491
    %v2464 = vunpack.c.h.b16 %v491
    %v2465 = vunpack.c.l.b16 %v492
    %v2466 = vunpack.c.h.b16 %v492
    %v2467 = vunpack.c.l.b16 %v493
    %v2468 = vunpack.c.h.b16 %v493
    %v2469 = vunpack.c.l.b16 %v494
    %v2470 = vunpack.c.h.b16 %v494
    %v2471 = vunpack.c.l.b16 %v495
    %v2472 = vunpack.c.h.b16 %v495
    %v2473 = vunpack.c.l.b16 %v496
    %v2474 = vunpack.c.h.b16 %v496
    %v2475 = vunpack.c.l.b16 %v497
    %v2476 = vunpack.c.h.b16 %v497
    %v2477 = vunpack.c.l.b16 %v498
    %v2478 = vunpack.c.h.b16 %v498
    %v2479 = vunpack.c.l.b16 %v499
    %v2480 = vunpack.c.h.b16 %v499
    %v2481 = vunpack.c.l.b16 %v500
    %v2482 = vunpack.c.h.b16 %v500
    %v2483 = vunpack.c.l.b16 %v501
    %v2484 = vunpack.c.h.b16 %v501
    %v2485 = vunpack.c.l.b16 %v502
    %v2486 = vunpack.c.h.b16 %v502
    %v2487 = vunpack.c.l.b16 %v503
    %v2488 = vunpack.c.h.b16 %v503
    %v2489 = vunpack.c.l.b16 %v504
    %v2490 = vunpack.c.h.b16 %v504
    %v2491 = vunpack.c.l.b16 %v505
    %v2492 = vunpack.c.h.b16 %v505
    %v2493 = vpack.c.b16 %v2367, %v2365
    %v2494 = vpack.c.b16 %v2368, %v2366
    %v2495 = vpack.c.b16 %v2371, %v2369
    %v2496 = vpack.c.b16 %v2372, %v2370
    %v2497 = vpack.c.b16 %v2375, %v2373
    %v2498 = vpack.c.b16 %v2376, %v2374
    %v2499 = vpack.c.b16 %v2379, %v2377
    %v2500 = vpack.c.b16 %v2380, %v2378
    %v2501 = vpack.c.b16 %v2383, %v2381
    %v2502 = vpack.c.b16 %v2384, %v2382
    %v2503 = vpack.c.b16 %v2387, %v2385
    %v2504 = vpack.c.b16 %v2388, %v2386
    %v2505 = vpack.c.b16 %v2391, %v2389
    %v2506 = vpack.c.b16 %v2392, %v2390
    %v2507 = vpack.c.b16 %v2395, %v2393
    %v2508 = vpack.c.b16 %v2396, %v2394
    %v2509 = vpack.c.b16 %v2399, %v2397
    %v2510 = vpack.c.b16 %v2400, %v2398
    %v2511 = vpack.c.b16 %v2403, %v2401
    %v2512 = vpack.c.b16 %v2404, %v2402
    %v2513 = vpack.c.b16 %v2407, %v2405
    %v2514 = vpack.c.b16 %v2408, %v2406
    %v2515 = vpack.c.b16 %v2411, %v2409
    %v2516 = vpack.c.b16 %v2412, %v2410
    %v2517 = vpack.c.b16 %v2415, %v2413
    %v2518 = vpack.c.b16 %v2416, %v2414
    %v2519 = vpack.c.b16 %v2419, %v2417
    %v2520 = vpack.c.b16 %v2420, %v2418
    %v2521 = vpack.c.b16 %v2423, %v2421
    %v2522 = vpack.c.b16 %v2424, %v2422
    %v2523 = vpack.c.b16 %v2427, %v2425
    %v2524 = vpack.c.b16 %v2428, %v2426
    %v2525 = vpack.c.b16 %v2431, %v2429
    %v2526 = vpack.c.b16 %v2432, %v2430
    %v2527 = vpack.c.b16 %v2435, %v2433
    %v2528 = vpack.c.b16 %v2436, %v2434
    %v2529 = vpack.c.b16 %v2439, %v2437
    %v2530 = vpack.c.b16 %v2440, %v2438
    %v2531 = vpack.c.b16 %v2443, %v2441
    %v2532 = vpack.c.b16 %v2444, %v2442
    %v2533 = vpack.c.b16 %v2447, %v2445
    %v2534 = vpack.c.b16 %v2448, %v2446
    %v2535 = vpack.c.b16 %v2451, %v2449
    %v2536 = vpack.c.b16 %v2452, %v2450
    %v2537 = vpack.c.b16 %v2455, %v2453
    %v2538 = vpack.c.b16 %v2456, %v2454
    %v2539 = vpack.c.b16 %v2459, %v2457
    %v2540 = vpack.c.b16 %v2460, %v2458
    %v2541 = vpack.c.b16 %v2463, %v2461
    %v2542 = vpack.c.b16 %v2464, %v2462
    %v2543 = vpack.c.b16 %v2467, %v2465
    %v2544 = vpack.c.b16 %v2468, %v2466
    %v2545 = vpack.c.b16 %v2471, %v2469
    %v2546 = vpack.c.b16 %v2472, %v2470
    %v2547 = vpack.c.b16 %v2475, %v2473
    %v2548 = vpack.c.b16 %v2476, %v2474
    %v2549 = vpack.c.b16 %v2479, %v2477
    %v2550 = vpack.c.b16 %v2480, %v2478
    %v2551 = vpack.c.b16 %v2483, %v2481
    %v2552 = vpack.c.b16 %v2484, %v2482
    %v2553 = vpack.c.b16 %v2487, %v2485
    %v2554 = vpack.c.b16 %v2488, %v2486
    %v2555 = vpack.c.b16 %v2491, %v2489
    %v2556 = vpack.c.b16 %v2492, %v2490
    %2621 = vmatpush.bf16.msra.mxu0 %v2507
    %2622 = vmatpush.bf16.msra.mxu0 %v2505
    %2623 = vmatpush.bf16.msra.mxu0 %v2503
    %2624 = vmatpush.bf16.msra.mxu0 %v2501
    %2625 = vmatpush.bf16.msra.mxu0 %v2499
    %2626 = vmatpush.bf16.msra.mxu0 %v2497
    %2627 = vmatpush.bf16.msra.mxu0 %v2495
    %2628 = vmatpush.bf16.msra.mxu0 %v2493
    %2629 = vmatmul.bf16.gmra.mxu0 %v2292
    %v2630 = vpop.f32.mrf.mxu0
    %v2631 = vadd.f32 %v2297, %v2630
    %v2632 = vpop.f32.mrf.mxu0
    %v2633 = vadd.f32 %v2297, %v2632
    %2634 = vdwg.mxu0
    %2635 = vmatpush.bf16.msra.mxu0 %v2523
    %2636 = vmatpush.bf16.msra.mxu0 %v2521
    %2637 = vmatpush.bf16.msra.mxu0 %v2519
    %2638 = vmatpush.bf16.msra.mxu0 %v2517
    %2639 = vmatpush.bf16.msra.mxu0 %v2515
    %2640 = vmatpush.bf16.msra.mxu0 %v2513
    %2641 = vmatpush.bf16.msra.mxu0 %v2511
    %2642 = vmatpush.bf16.msra.mxu0 %v2509
    %2643 = vmatmul.bf16.gmra.mxu0 %v2293
    %v2644 = vpop.f32.mrf.mxu0
    %v2645 = vadd.f32 %v2631, %v2644
    %v2646 = vpop.f32.mrf.mxu0
    %v2647 = vadd.f32 %v2633, %v2646
    %2648 = vdwg.mxu0
    %2649 = vmatpush.bf16.msra.mxu0 %v2539
    %2650 = vmatpush.bf16.msra.mxu0 %v2537
    %2651 = vmatpush.bf16.msra.mxu0 %v2535
    %2652 = vmatpush.bf16.msra.mxu0 %v2533
    %2653 = vmatpush.bf16.msra.mxu0 %v2531
    %2654 = vmatpush.bf16.msra.mxu0 %v2529
    %2655 = vmatpush.bf16.msra.mxu0 %v2527
    %2656 = vmatpush.bf16.msra.mxu0 %v2525
    %2657 = vmatmul.bf16.gmra.mxu0 %v2294
    %v2658 = vpop.f32.mrf.mxu0
    %v2659 = vadd.f32 %v2645, %v2658
    %v2660 = vpop.f32.mrf.mxu0
    %v2661 = vadd.f32 %v2647, %v2660
    %2662 = vdwg.mxu0
    %2663 = vmatpush.bf16.msra.mxu0 %v2555
    %2664 = vmatpush.bf16.msra.mxu0 %v2553
    %2665 = vmatpush.bf16.msra.mxu0 %v2551
    %2666 = vmatpush.bf16.msra.mxu0 %v2549
    %2667 = vmatpush.bf16.msra.mxu0 %v2547
    %2668 = vmatpush.bf16.msra.mxu0 %v2545
    %2669 = vmatpush.bf16.msra.mxu0 %v2543
    %2670 = vmatpush.bf16.msra.mxu0 %v2541
    %2671 = vmatmul.bf16.gmra.mxu0 %v2295
    %v2672 = vpop.f32.mrf.mxu0
    %v2673 = vadd.f32 %v2659, %v2672
    %v2674 = vpop.f32.mrf.mxu0
    %v2675 = vadd.f32 %v2661, %v2674
    %2676 = vdwg.mxu0
    %2677 = vmatpush.bf16.msra.mxu0 %v2508
    %2678 = vmatpush.bf16.msra.mxu0 %v2506
    %2679 = vmatpush.bf16.msra.mxu0 %v2504
    %2680 = vmatpush.bf16.msra.mxu0 %v2502
    %2681 = vmatpush.bf16.msra.mxu0 %v2500
    %2682 = vmatpush.bf16.msra.mxu0 %v2498
    %2683 = vmatpush.bf16.msra.mxu0 %v2496
    %2684 = vmatpush.bf16.msra.mxu0 %v2494
    %2685 = vmatmul.bf16.gmra.mxu0 %v2292
    %v2686 = vpop.f32.mrf.mxu0
    %v2687 = vadd.f32 %v2298, %v2686
    %v2688 = vpop.f32.mrf.mxu0
    %v2689 = vadd.f32 %v2298, %v2688
    %2690 = vdwg.mxu0
    %2691 = vmatpush.bf16.msra.mxu0 %v2524
    %2692 = vmatpush.bf16.msra.mxu0 %v2522
    %2693 = vmatpush.bf16.msra.mxu0 %v2520
    %2694 = vmatpush.bf16.msra.mxu0 %v2518
    %2695 = vmatpush.bf16.msra.mxu0 %v2516
    %2696 = vmatpush.bf16.msra.mxu0 %v2514
    %2697 = vmatpush.bf16.msra.mxu0 %v2512
    %2698 = vmatpush.bf16.msra.mxu0 %v2510
    %2699 = vmatmul.bf16.gmra.mxu0 %v2293
    %v2700 = vpop.f32.mrf.mxu0
    %v2701 = vadd.f32 %v2687, %v2700
    %v2702 = vpop.f32.mrf.mxu0
    %v2703 = vadd.f32 %v2689, %v2702
    %2704 = vdwg.mxu0
    %2705 = vmatpush.bf16.msra.mxu0 %v2540
    %2706 = vmatpush.bf16.msra.mxu0 %v2538
    %2707 = vmatpush.bf16.msra.mxu0 %v2536
    %2708 = vmatpush.bf16.msra.mxu0 %v2534
    %2709 = vmatpush.bf16.msra.mxu0 %v2532
    %2710 = vmatpush.bf16.msra.mxu0 %v2530
    %2711 = vmatpush.bf16.msra.mxu0 %v2528
    %2712 = vmatpush.bf16.msra.mxu0 %v2526
    %2713 = vmatmul.bf16.gmra.mxu0 %v2294
    %v2714 = vpop.f32.mrf.mxu0
    %v2715 = vadd.f32 %v2701, %v2714
    %v2716 = vpop.f32.mrf.mxu0
    %v2717 = vadd.f32 %v2703, %v2716
    %2718 = vdwg.mxu0
    %2719 = vmatpush.bf16.msra.mxu0 %v2556
    %2720 = vmatpush.bf16.msra.mxu0 %v2554
    %2721 = vmatpush.bf16.msra.mxu0 %v2552
    %2722 = vmatpush.bf16.msra.mxu0 %v2550
    %2723 = vmatpush.bf16.msra.mxu0 %v2548
    %2724 = vmatpush.bf16.msra.mxu0 %v2546
    %2725 = vmatpush.bf16.msra.mxu0 %v2544
    %2726 = vmatpush.bf16.msra.mxu0 %v2542
    %2727 = vmatmul.bf16.gmra.mxu0 %v2295
    %v2728 = vpop.f32.mrf.mxu0
    %v2729 = vadd.f32 %v2715, %v2728
    %v2730 = vpop.f32.mrf.mxu0
    %v2731 = vadd.f32 %v2717, %v2730
    %2732 = vdwg.mxu0
    %v2733 = vadd.f32 %v1705, %v2673
    %v2734 = vadd.f32 %v1706, %v2729
    %v2735 = vadd.f32 %v1707, %v2675
    %v2736 = vadd.f32 %v1708, %v2731
    %s2737 = scalar_lea.vmem [#allocation7], 768
    %v2738 = vld [vmem:[%s2737] sm:$0xff]
    %v2739 = vld [vmem:[%s2737 + $0x8] sm:$0xff]
    %v2740 = vld [vmem:[%s2737 + $0x10] sm:$0xff]
    %v2741 = vld [vmem:[%s2737 + $0x18] sm:$0xff]
    %v2742 = vld [vmem:[%s2737 + $0x20] sm:$0xff]
    %v2743 = vld [vmem:[%s2737 + $0x28] sm:$0xff]
    %v2744 = vld [vmem:[%s2737 + $0x30] sm:$0xff]
    %v2745 = vld [vmem:[%s2737 + $0x38] sm:$0xff]
    %v2746 = vld [vmem:[%s2737 + $0x40] sm:$0xff]
    %v2747 = vld [vmem:[%s2737 + $0x48] sm:$0xff]
    %v2748 = vld [vmem:[%s2737 + $0x50] sm:$0xff]
    %v2749 = vld [vmem:[%s2737 + $0x58] sm:$0xff]
    %v2750 = vld [vmem:[%s2737 + $0x60] sm:$0xff]
    %v2751 = vld [vmem:[%s2737 + $0x68] sm:$0xff]
    %v2752 = vld [vmem:[%s2737 + $0x70] sm:$0xff]
    %v2753 = vld [vmem:[%s2737 + $0x78] sm:$0xff]
    %v2754 = vld [vmem:[%s2737 + $0x80] sm:$0xff]
    %v2755 = vld [vmem:[%s2737 + $0x88] sm:$0xff]
    %v2756 = vld [vmem:[%s2737 + $0x90] sm:$0xff]
    %v2757 = vld [vmem:[%s2737 + $0x98] sm:$0xff]
    %v2758 = vld [vmem:[%s2737 + $0xa0] sm:$0xff]
    %v2759 = vld [vmem:[%s2737 + $0xa8] sm:$0xff]
    %v2760 = vld [vmem:[%s2737 + $0xb0] sm:$0xff]
    %v2761 = vld [vmem:[%s2737 + $0xb8] sm:$0xff]
    %v2762 = vld [vmem:[%s2737 + $0xc0] sm:$0xff]
    %v2763 = vld [vmem:[%s2737 + $0xc8] sm:$0xff]
    %v2764 = vld [vmem:[%s2737 + $0xd0] sm:$0xff]
    %v2765 = vld [vmem:[%s2737 + $0xd8] sm:$0xff]
    %v2766 = vld [vmem:[%s2737 + $0xe0] sm:$0xff]
    %v2767 = vld [vmem:[%s2737 + $0xe8] sm:$0xff]
    %v2768 = vld [vmem:[%s2737 + $0xf0] sm:$0xff]
    %v2769 = vld [vmem:[%s2737 + $0xf8] sm:$0xff]
    %v2770 = vld [vmem:[%s2737 + $0x100] sm:$0xff]
    %v2771 = vld [vmem:[%s2737 + $0x108] sm:$0xff]
    %v2772 = vld [vmem:[%s2737 + $0x110] sm:$0xff]
    %v2773 = vld [vmem:[%s2737 + $0x118] sm:$0xff]
    %v2774 = vld [vmem:[%s2737 + $0x120] sm:$0xff]
    %v2775 = vld [vmem:[%s2737 + $0x128] sm:$0xff]
    %v2776 = vld [vmem:[%s2737 + $0x130] sm:$0xff]
    %v2777 = vld [vmem:[%s2737 + $0x138] sm:$0xff]
    %v2778 = vld [vmem:[%s2737 + $0x140] sm:$0xff]
    %v2779 = vld [vmem:[%s2737 + $0x148] sm:$0xff]
    %v2780 = vld [vmem:[%s2737 + $0x150] sm:$0xff]
    %v2781 = vld [vmem:[%s2737 + $0x158] sm:$0xff]
    %v2782 = vld [vmem:[%s2737 + $0x160] sm:$0xff]
    %v2783 = vld [vmem:[%s2737 + $0x168] sm:$0xff]
    %v2784 = vld [vmem:[%s2737 + $0x170] sm:$0xff]
    %v2785 = vld [vmem:[%s2737 + $0x178] sm:$0xff]
    %v2786 = vld [vmem:[%s2737 + $0x180] sm:$0xff]
    %v2787 = vld [vmem:[%s2737 + $0x188] sm:$0xff]
    %v2788 = vld [vmem:[%s2737 + $0x190] sm:$0xff]
    %v2789 = vld [vmem:[%s2737 + $0x198] sm:$0xff]
    %v2790 = vld [vmem:[%s2737 + $0x1a0] sm:$0xff]
    %v2791 = vld [vmem:[%s2737 + $0x1a8] sm:$0xff]
    %v2792 = vld [vmem:[%s2737 + $0x1b0] sm:$0xff]
    %v2793 = vld [vmem:[%s2737 + $0x1b8] sm:$0xff]
    %v2794 = vld [vmem:[%s2737 + $0x1c0] sm:$0xff]
    %v2795 = vld [vmem:[%s2737 + $0x1c8] sm:$0xff]
    %v2796 = vld [vmem:[%s2737 + $0x1d0] sm:$0xff]
    %v2797 = vld [vmem:[%s2737 + $0x1d8] sm:$0xff]
    %v2798 = vld [vmem:[%s2737 + $0x1e0] sm:$0xff]
    %v2799 = vld [vmem:[%s2737 + $0x1e8] sm:$0xff]
    %v2800 = vld [vmem:[%s2737 + $0x1f0] sm:$0xff]
    %v2801 = vld [vmem:[%s2737 + $0x1f8] sm:$0xff]
    %v2802 = vld [vmem:[%s2737 + $0x200] sm:$0xff]
    %v2803 = vld [vmem:[%s2737 + $0x208] sm:$0xff]
    %v2804 = vld [vmem:[%s2737 + $0x210] sm:$0xff]
    %v2805 = vld [vmem:[%s2737 + $0x218] sm:$0xff]
    %v2806 = vld [vmem:[%s2737 + $0x220] sm:$0xff]
    %v2807 = vld [vmem:[%s2737 + $0x228] sm:$0xff]
    %v2808 = vld [vmem:[%s2737 + $0x230] sm:$0xff]
    %v2809 = vld [vmem:[%s2737 + $0x238] sm:$0xff]
    %v2810 = vld [vmem:[%s2737 + $0x240] sm:$0xff]
    %v2811 = vld [vmem:[%s2737 + $0x248] sm:$0xff]
    %v2812 = vld [vmem:[%s2737 + $0x250] sm:$0xff]
    %v2813 = vld [vmem:[%s2737 + $0x258] sm:$0xff]
    %v2814 = vld [vmem:[%s2737 + $0x260] sm:$0xff]
    %v2815 = vld [vmem:[%s2737 + $0x268] sm:$0xff]
    %v2816 = vld [vmem:[%s2737 + $0x270] sm:$0xff]
    %v2817 = vld [vmem:[%s2737 + $0x278] sm:$0xff]
    %v2818 = vld [vmem:[%s2737 + $0x280] sm:$0xff]
    %v2819 = vld [vmem:[%s2737 + $0x288] sm:$0xff]
    %v2820 = vld [vmem:[%s2737 + $0x290] sm:$0xff]
    %v2821 = vld [vmem:[%s2737 + $0x298] sm:$0xff]
    %v2822 = vld [vmem:[%s2737 + $0x2a0] sm:$0xff]
    %v2823 = vld [vmem:[%s2737 + $0x2a8] sm:$0xff]
    %v2824 = vld [vmem:[%s2737 + $0x2b0] sm:$0xff]
    %v2825 = vld [vmem:[%s2737 + $0x2b8] sm:$0xff]
    %v2826 = vld [vmem:[%s2737 + $0x2c0] sm:$0xff]
    %v2827 = vld [vmem:[%s2737 + $0x2c8] sm:$0xff]
    %v2828 = vld [vmem:[%s2737 + $0x2d0] sm:$0xff]
    %v2829 = vld [vmem:[%s2737 + $0x2d8] sm:$0xff]
    %v2830 = vld [vmem:[%s2737 + $0x2e0] sm:$0xff]
    %v2831 = vld [vmem:[%s2737 + $0x2e8] sm:$0xff]
    %v2832 = vld [vmem:[%s2737 + $0x2f0] sm:$0xff]
    %v2833 = vld [vmem:[%s2737 + $0x2f8] sm:$0xff]
    %s2834 = scalar_lea.vmem [#allocation8], 6
    %v2835 = vld [vmem:[%s2834] sm:$0x3f]
    %s2836 = scalar_lea.vmem [#allocation10], 256
    %v2837 = vld [vmem:[%s2836] sm:$0xff]
    %v2838 = vld [vmem:[%s2836 + $0x8] sm:$0xff]
    %v2839 = vld [vmem:[%s2836 + $0x10] sm:$0xff]
    %v2840 = vld [vmem:[%s2836 + $0x18] sm:$0xff]
    %v2841 = vld [vmem:[%s2836 + $0x20] sm:$0xff]
    %v2842 = vld [vmem:[%s2836 + $0x28] sm:$0xff]
    %v2843 = vld [vmem:[%s2836 + $0x30] sm:$0xff]
    %v2844 = vld [vmem:[%s2836 + $0x38] sm:$0xff]
    %v2845 = vld [vmem:[%s2836 + $0x40] sm:$0xff]
    %v2846 = vld [vmem:[%s2836 + $0x48] sm:$0xff]
    %v2847 = vld [vmem:[%s2836 + $0x50] sm:$0xff]
    %v2848 = vld [vmem:[%s2836 + $0x58] sm:$0xff]
    %v2849 = vld [vmem:[%s2836 + $0x60] sm:$0xff]
    %v2850 = vld [vmem:[%s2836 + $0x68] sm:$0xff]
    %v2851 = vld [vmem:[%s2836 + $0x70] sm:$0xff]
    %v2852 = vld [vmem:[%s2836 + $0x78] sm:$0xff]
    %v2853 = vld [vmem:[%s2836 + $0x80] sm:$0xff]
    %v2854 = vld [vmem:[%s2836 + $0x88] sm:$0xff]
    %v2855 = vld [vmem:[%s2836 + $0x90] sm:$0xff]
    %v2856 = vld [vmem:[%s2836 + $0x98] sm:$0xff]
    %v2857 = vld [vmem:[%s2836 + $0xa0] sm:$0xff]
    %v2858 = vld [vmem:[%s2836 + $0xa8] sm:$0xff]
    %v2859 = vld [vmem:[%s2836 + $0xb0] sm:$0xff]
    %v2860 = vld [vmem:[%s2836 + $0xb8] sm:$0xff]
    %v2861 = vld [vmem:[%s2836 + $0xc0] sm:$0xff]
    %v2862 = vld [vmem:[%s2836 + $0xc8] sm:$0xff]
    %v2863 = vld [vmem:[%s2836 + $0xd0] sm:$0xff]
    %v2864 = vld [vmem:[%s2836 + $0xd8] sm:$0xff]
    %v2865 = vld [vmem:[%s2836 + $0xe0] sm:$0xff]
    %v2866 = vld [vmem:[%s2836 + $0xe8] sm:$0xff]
    %v2867 = vld [vmem:[%s2836 + $0xf0] sm:$0xff]
    %v2868 = vld [vmem:[%s2836 + $0xf8] sm:$0xff]
    %s2869 = scalar_lea.vmem [#allocation11], 2
    %v2870 = vld [vmem:[%s2869] sm:$0x3]
    %s2871 = scalar_lea.vmem [#allocation13], 2
    %v2872 = vld [vmem:[%s2871] sm:$0x3]
    %s2873 = scalar_lea.vmem [#allocation14], 2
    %v2874 = vld [vmem:[%s2873] sm:$0x3]
    %s2875 = scalar_lea.vmem [#allocation16], 2
    %v2876 = vld [vmem:[%s2875] sm:$0x3]
    %s2877 = scalar_lea.vmem [#allocation17], 2
    %v2878 = vld [vmem:[%s2877] sm:$0x3]
    %s2879 = scalar_lea.vmem [#allocation19], 512
    %v2880 = vld [vmem:[%s2879] sm:$0xff]
    %v2881 = vld [vmem:[%s2879 + $0x8] sm:$0xff]
    %v2882 = vld [vmem:[%s2879 + $0x10] sm:$0xff]
    %v2883 = vld [vmem:[%s2879 + $0x18] sm:$0xff]
    %v2884 = vld [vmem:[%s2879 + $0x20] sm:$0xff]
    %v2885 = vld [vmem:[%s2879 + $0x28] sm:$0xff]
    %v2886 = vld [vmem:[%s2879 + $0x30] sm:$0xff]
    %v2887 = vld [vmem:[%s2879 + $0x38] sm:$0xff]
    %v2888 = vld [vmem:[%s2879 + $0x40] sm:$0xff]
    %v2889 = vld [vmem:[%s2879 + $0x48] sm:$0xff]
    %v2890 = vld [vmem:[%s2879 + $0x50] sm:$0xff]
    %v2891 = vld [vmem:[%s2879 + $0x58] sm:$0xff]
    %v2892 = vld [vmem:[%s2879 + $0x60] sm:$0xff]
    %v2893 = vld [vmem:[%s2879 + $0x68] sm:$0xff]
    %v2894 = vld [vmem:[%s2879 + $0x70] sm:$0xff]
    %v2895 = vld [vmem:[%s2879 + $0x78] sm:$0xff]
    %v2896 = vld [vmem:[%s2879 + $0x80] sm:$0xff]
    %v2897 = vld [vmem:[%s2879 + $0x88] sm:$0xff]
    %v2898 = vld [vmem:[%s2879 + $0x90] sm:$0xff]
    %v2899 = vld [vmem:[%s2879 + $0x98] sm:$0xff]
    %v2900 = vld [vmem:[%s2879 + $0xa0] sm:$0xff]
    %v2901 = vld [vmem:[%s2879 + $0xa8] sm:$0xff]
    %v2902 = vld [vmem:[%s2879 + $0xb0] sm:$0xff]
    %v2903 = vld [vmem:[%s2879 + $0xb8] sm:$0xff]
    %v2904 = vld [vmem:[%s2879 + $0xc0] sm:$0xff]
    %v2905 = vld [vmem:[%s2879 + $0xc8] sm:$0xff]
    %v2906 = vld [vmem:[%s2879 + $0xd0] sm:$0xff]
    %v2907 = vld [vmem:[%s2879 + $0xd8] sm:$0xff]
    %v2908 = vld [vmem:[%s2879 + $0xe0] sm:$0xff]
    %v2909 = vld [vmem:[%s2879 + $0xe8] sm:$0xff]
    %v2910 = vld [vmem:[%s2879 + $0xf0] sm:$0xff]
    %v2911 = vld [vmem:[%s2879 + $0xf8] sm:$0xff]
    %v2912 = vld [vmem:[%s2879 + $0x100] sm:$0xff]
    %v2913 = vld [vmem:[%s2879 + $0x108] sm:$0xff]
    %v2914 = vld [vmem:[%s2879 + $0x110] sm:$0xff]
    %v2915 = vld [vmem:[%s2879 + $0x118] sm:$0xff]
    %v2916 = vld [vmem:[%s2879 + $0x120] sm:$0xff]
    %v2917 = vld [vmem:[%s2879 + $0x128] sm:$0xff]
    %v2918 = vld [vmem:[%s2879 + $0x130] sm:$0xff]
    %v2919 = vld [vmem:[%s2879 + $0x138] sm:$0xff]
    %v2920 = vld [vmem:[%s2879 + $0x140] sm:$0xff]
    %v2921 = vld [vmem:[%s2879 + $0x148] sm:$0xff]
    %v2922 = vld [vmem:[%s2879 + $0x150] sm:$0xff]
    %v2923 = vld [vmem:[%s2879 + $0x158] sm:$0xff]
    %v2924 = vld [vmem:[%s2879 + $0x160] sm:$0xff]
    %v2925 = vld [vmem:[%s2879 + $0x168] sm:$0xff]
    %v2926 = vld [vmem:[%s2879 + $0x170] sm:$0xff]
    %v2927 = vld [vmem:[%s2879 + $0x178] sm:$0xff]
    %v2928 = vld [vmem:[%s2879 + $0x180] sm:$0xff]
    %v2929 = vld [vmem:[%s2879 + $0x188] sm:$0xff]
    %v2930 = vld [vmem:[%s2879 + $0x190] sm:$0xff]
    %v2931 = vld [vmem:[%s2879 + $0x198] sm:$0xff]
    %v2932 = vld [vmem:[%s2879 + $0x1a0] sm:$0xff]
    %v2933 = vld [vmem:[%s2879 + $0x1a8] sm:$0xff]
    %v2934 = vld [vmem:[%s2879 + $0x1b0] sm:$0xff]
    %v2935 = vld [vmem:[%s2879 + $0x1b8] sm:$0xff]
    %v2936 = vld [vmem:[%s2879 + $0x1c0] sm:$0xff]
    %v2937 = vld [vmem:[%s2879 + $0x1c8] sm:$0xff]
    %v2938 = vld [vmem:[%s2879 + $0x1d0] sm:$0xff]
    %v2939 = vld [vmem:[%s2879 + $0x1d8] sm:$0xff]
    %v2940 = vld [vmem:[%s2879 + $0x1e0] sm:$0xff]
    %v2941 = vld [vmem:[%s2879 + $0x1e8] sm:$0xff]
    %v2942 = vld [vmem:[%s2879 + $0x1f0] sm:$0xff]
    %v2943 = vld [vmem:[%s2879 + $0x1f8] sm:$0xff]
    %s2944 = scalar_lea.vmem %s11, 4
    %v2945 = vld [vmem:[%s2944] sm:$0xf]
    %s2946 = scalar_lea.vmem [#allocation20], 512
    %v2947 = vld [vmem:[%s2946] sm:$0xff]
    %v2948 = vld [vmem:[%s2946 + $0x8] sm:$0xff]
    %v2949 = vld [vmem:[%s2946 + $0x10] sm:$0xff]
    %v2950 = vld [vmem:[%s2946 + $0x18] sm:$0xff]
    %v2951 = vld [vmem:[%s2946 + $0x20] sm:$0xff]
    %v2952 = vld [vmem:[%s2946 + $0x28] sm:$0xff]
    %v2953 = vld [vmem:[%s2946 + $0x30] sm:$0xff]
    %v2954 = vld [vmem:[%s2946 + $0x38] sm:$0xff]
    %v2955 = vld [vmem:[%s2946 + $0x40] sm:$0xff]
    %v2956 = vld [vmem:[%s2946 + $0x48] sm:$0xff]
    %v2957 = vld [vmem:[%s2946 + $0x50] sm:$0xff]
    %v2958 = vld [vmem:[%s2946 + $0x58] sm:$0xff]
    %v2959 = vld [vmem:[%s2946 + $0x60] sm:$0xff]
    %v2960 = vld [vmem:[%s2946 + $0x68] sm:$0xff]
    %v2961 = vld [vmem:[%s2946 + $0x70] sm:$0xff]
    %v2962 = vld [vmem:[%s2946 + $0x78] sm:$0xff]
    %v2963 = vld [vmem:[%s2946 + $0x80] sm:$0xff]
    %v2964 = vld [vmem:[%s2946 + $0x88] sm:$0xff]
    %v2965 = vld [vmem:[%s2946 + $0x90] sm:$0xff]
    %v2966 = vld [vmem:[%s2946 + $0x98] sm:$0xff]
    %v2967 = vld [vmem:[%s2946 + $0xa0] sm:$0xff]
    %v2968 = vld [vmem:[%s2946 + $0xa8] sm:$0xff]
    %v2969 = vld [vmem:[%s2946 + $0xb0] sm:$0xff]
    %v2970 = vld [vmem:[%s2946 + $0xb8] sm:$0xff]
    %v2971 = vld [vmem:[%s2946 + $0xc0] sm:$0xff]
    %v2972 = vld [vmem:[%s2946 + $0xc8] sm:$0xff]
    %v2973 = vld [vmem:[%s2946 + $0xd0] sm:$0xff]
    %v2974 = vld [vmem:[%s2946 + $0xd8] sm:$0xff]
    %v2975 = vld [vmem:[%s2946 + $0xe0] sm:$0xff]
    %v2976 = vld [vmem:[%s2946 + $0xe8] sm:$0xff]
    %v2977 = vld [vmem:[%s2946 + $0xf0] sm:$0xff]
    %v2978 = vld [vmem:[%s2946 + $0xf8] sm:$0xff]
    %v2979 = vld [vmem:[%s2946 + $0x100] sm:$0xff]
    %v2980 = vld [vmem:[%s2946 + $0x108] sm:$0xff]
    %v2981 = vld [vmem:[%s2946 + $0x110] sm:$0xff]
    %v2982 = vld [vmem:[%s2946 + $0x118] sm:$0xff]
    %v2983 = vld [vmem:[%s2946 + $0x120] sm:$0xff]
    %v2984 = vld [vmem:[%s2946 + $0x128] sm:$0xff]
    %v2985 = vld [vmem:[%s2946 + $0x130] sm:$0xff]
    %v2986 = vld [vmem:[%s2946 + $0x138] sm:$0xff]
    %v2987 = vld [vmem:[%s2946 + $0x140] sm:$0xff]
    %v2988 = vld [vmem:[%s2946 + $0x148] sm:$0xff]
    %v2989 = vld [vmem:[%s2946 + $0x150] sm:$0xff]
    %v2990 = vld [vmem:[%s2946 + $0x158] sm:$0xff]
    %v2991 = vld [vmem:[%s2946 + $0x160] sm:$0xff]
    %v2992 = vld [vmem:[%s2946 + $0x168] sm:$0xff]
    %v2993 = vld [vmem:[%s2946 + $0x170] sm:$0xff]
    %v2994 = vld [vmem:[%s2946 + $0x178] sm:$0xff]
    %v2995 = vld [vmem:[%s2946 + $0x180] sm:$0xff]
    %v2996 = vld [vmem:[%s2946 + $0x188] sm:$0xff]
    %v2997 = vld [vmem:[%s2946 + $0x190] sm:$0xff]
    %v2998 = vld [vmem:[%s2946 + $0x198] sm:$0xff]
    %v2999 = vld [vmem:[%s2946 + $0x1a0] sm:$0xff]
    %v3000 = vld [vmem:[%s2946 + $0x1a8] sm:$0xff]
    %v3001 = vld [vmem:[%s2946 + $0x1b0] sm:$0xff]
    %v3002 = vld [vmem:[%s2946 + $0x1b8] sm:$0xff]
    %v3003 = vld [vmem:[%s2946 + $0x1c0] sm:$0xff]
    %v3004 = vld [vmem:[%s2946 + $0x1c8] sm:$0xff]
    %v3005 = vld [vmem:[%s2946 + $0x1d0] sm:$0xff]
    %v3006 = vld [vmem:[%s2946 + $0x1d8] sm:$0xff]
    %v3007 = vld [vmem:[%s2946 + $0x1e0] sm:$0xff]
    %v3008 = vld [vmem:[%s2946 + $0x1e8] sm:$0xff]
    %v3009 = vld [vmem:[%s2946 + $0x1f0] sm:$0xff]
    %v3010 = vld [vmem:[%s2946 + $0x1f8] sm:$0xff]
    %s3011 = scalar_lea.vmem %s13, 2
    %v3012 = vld [vmem:[%s3011] sm:$0x3]
    %v3013 = vadd.f32 %v2733, %v2734
    %3014 = vadd.xlane.f32.xlu0 %v3013
    %v3015 = vpop.xlane.xlu0 %3014
    %v3016 = vadd.f32 %v2735, %v2736
    %3017 = vadd.xlane.f32.xlu0 %v3016
    %v3018 = vpop.xlane.xlu0 %3017
    %v3019 = vmul.f32 %v3015, %v519
    %v3020 = vmul.f32 %v3018, %v519
    %v3021 = vsub.f32 %v2733, %v3019
    %v3022 = vsub.f32 %v2734, %v3019
    %v3023 = vsub.f32 %v2735, %v3020
    %v3024 = vsub.f32 %v2736, %v3020
    %v3025 = vmul.f32 %v3021, %v3021
    %v3026 = vmul.f32 %v3022, %v3022
    %v3027 = vmul.f32 %v3023, %v3023
    %v3028 = vmul.f32 %v3024, %v3024
    %v3029 = vadd.f32 %v3025, %v3026
    %3030 = vadd.xlane.f32.xlu0 %v3029
    %v3031 = vpop.xlane.xlu0 %3030
    %v3032 = vadd.f32 %v3027, %v3028
    %3033 = vadd.xlane.f32.xlu0 %v3032
    %v3034 = vpop.xlane.xlu0 %3033
    %v3035 = vmul.f32 %v3031, %v519
    %v3036 = vmul.f32 %v3034, %v519
    %v3037 = vadd.f32 %v3035, 1e-05
    %v3038 = vadd.f32 %v3036, 1e-05
    %v3039 = vrsqrt.pop %v3037
    %v3040 = vmul.f32 %v3039, %v3037
    %v3041 = vmul.f32 %v3040, %v3039
    %v3042 = vmul.f32 0.5, %v3041
    %v3043 = vsub.f32 1.5, %v3042
    %v3044 = vmul.f32 %v3039, %v3043
    %vm3045 = vweird.f32 %v3037
    %vm3046 = vweird.f32 %v3039
    %vm3047 = vmor %vm3045, %vm3046
    %v3048 = vsel %vm3047, %v3039, %v3044
    %v3049 = vrsqrt.pop %v3038
    %v3050 = vmul.f32 %v3049, %v3038
    %v3051 = vmul.f32 %v3050, %v3049
    %v3052 = vmul.f32 0.5, %v3051
    %v3053 = vsub.f32 1.5, %v3052
    %v3054 = vmul.f32 %v3049, %v3053
    %vm3055 = vweird.f32 %v3038
    %vm3056 = vweird.f32 %v3049
    %vm3057 = vmor %vm3055, %vm3056
    %v3058 = vsel %vm3057, %v3049, %v3054
    %v3059 = vmul.f32 %v3021, %v3048
    %v3060 = vmul.f32 %v3022, %v3048
    %v3061 = vmul.f32 %v3023, %v3058
    %v3062 = vmul.f32 %v3024, %v3058
    %v3064 = vperm.slane %v2872, 0
    %v3065 = vperm.slane %v2872, 1
    %v3068 = vmul.f32 %v3059, %v3064
    %v3069 = vmul.f32 %v3060, %v3065
    %v3070 = vmul.f32 %v3061, %v3064
    %v3071 = vmul.f32 %v3062, %v3065
    %v3073 = vperm.slane %v2874, 0
    %v3074 = vperm.slane %v2874, 1
    %v3077 = vadd.f32 %v3068, %v3073
    %v3078 = vadd.f32 %v3069, %v3074
    %v3079 = vadd.f32 %v3070, %v3073
    %v3080 = vadd.f32 %v3071, %v3074
    %v3081 = vpack.c.bf16 %v3079, %v3077
    %v3082 = vpack.c.bf16 %v3080, %v3078
    %v3084 = vperm.slane %v2835, 0
    %v3085 = vperm.slane %v2835, 1
    %v3086 = vperm.slane %v2835, 2
    %v3087 = vperm.slane %v2835, 3
    %v3088 = vperm.slane %v2835, 4
    %v3089 = vperm.slane %v2835, 5
    %v3192 = vunpack.c.l.b16 %v2738
    %v3193 = vunpack.c.h.b16 %v2738
    %v3194 = vunpack.c.l.b16 %v2739
    %v3195 = vunpack.c.h.b16 %v2739
    %v3196 = vunpack.c.l.b16 %v2740
    %v3197 = vunpack.c.h.b16 %v2740
    %v3198 = vunpack.c.l.b16 %v2741
    %v3199 = vunpack.c.h.b16 %v2741
    %v3200 = vunpack.c.l.b16 %v2742
    %v3201 = vunpack.c.h.b16 %v2742
    %v3202 = vunpack.c.l.b16 %v2743
    %v3203 = vunpack.c.h.b16 %v2743
    %v3204 = vunpack.c.l.b16 %v2744
    %v3205 = vunpack.c.h.b16 %v2744
    %v3206 = vunpack.c.l.b16 %v2745
    %v3207 = vunpack.c.h.b16 %v2745
    %v3208 = vunpack.c.l.b16 %v2746
    %v3209 = vunpack.c.h.b16 %v2746
    %v3210 = vunpack.c.l.b16 %v2747
    %v3211 = vunpack.c.h.b16 %v2747
    %v3212 = vunpack.c.l.b16 %v2748
    %v3213 = vunpack.c.h.b16 %v2748
    %v3214 = vunpack.c.l.b16 %v2749
    %v3215 = vunpack.c.h.b16 %v2749
    %v3216 = vunpack.c.l.b16 %v2750
    %v3217 = vunpack.c.h.b16 %v2750
    %v3218 = vunpack.c.l.b16 %v2751
    %v3219 = vunpack.c.h.b16 %v2751
    %v3220 = vunpack.c.l.b16 %v2752
    %v3221 = vunpack.c.h.b16 %v2752
    %v3222 = vunpack.c.l.b16 %v2753
    %v3223 = vunpack.c.h.b16 %v2753
    %v3224 = vunpack.c.l.b16 %v2754
    %v3225 = vunpack.c.h.b16 %v2754
    %v3226 = vunpack.c.l.b16 %v2755
    %v3227 = vunpack.c.h.b16 %v2755
    %v3228 = vunpack.c.l.b16 %v2756
    %v3229 = vunpack.c.h.b16 %v2756
    %v3230 = vunpack.c.l.b16 %v2757
    %v3231 = vunpack.c.h.b16 %v2757
    %v3232 = vunpack.c.l.b16 %v2758
    %v3233 = vunpack.c.h.b16 %v2758
    %v3234 = vunpack.c.l.b16 %v2759
    %v3235 = vunpack.c.h.b16 %v2759
    %v3236 = vunpack.c.l.b16 %v2760
    %v3237 = vunpack.c.h.b16 %v2760
    %v3238 = vunpack.c.l.b16 %v2761
    %v3239 = vunpack.c.h.b16 %v2761
    %v3240 = vunpack.c.l.b16 %v2762
    %v3241 = vunpack.c.h.b16 %v2762
    %v3242 = vunpack.c.l.b16 %v2763
    %v3243 = vunpack.c.h.b16 %v2763
    %v3244 = vunpack.c.l.b16 %v2764
    %v3245 = vunpack.c.h.b16 %v2764
    %v3246 = vunpack.c.l.b16 %v2765
    %v3247 = vunpack.c.h.b16 %v2765
    %v3248 = vunpack.c.l.b16 %v2766
    %v3249 = vunpack.c.h.b16 %v2766
    %v3250 = vunpack.c.l.b16 %v2767
    %v3251 = vunpack.c.h.b16 %v2767
    %v3252 = vunpack.c.l.b16 %v2768
    %v3253 = vunpack.c.h.b16 %v2768
    %v3254 = vunpack.c.l.b16 %v2769
    %v3255 = vunpack.c.h.b16 %v2769
    %v3256 = vunpack.c.l.b16 %v2770
    %v3257 = vunpack.c.h.b16 %v2770
    %v3258 = vunpack.c.l.b16 %v2771
    %v3259 = vunpack.c.h.b16 %v2771
    %v3260 = vunpack.c.l.b16 %v2772
    %v3261 = vunpack.c.h.b16 %v2772
    %v3262 = vunpack.c.l.b16 %v2773
    %v3263 = vunpack.c.h.b16 %v2773
    %v3264 = vunpack.c.l.b16 %v2774
    %v3265 = vunpack.c.h.b16 %v2774
    %v3266 = vunpack.c.l.b16 %v2775
    %v3267 = vunpack.c.h.b16 %v2775
    %v3268 = vunpack.c.l.b16 %v2776
    %v3269 = vunpack.c.h.b16 %v2776
    %v3270 = vunpack.c.l.b16 %v2777
    %v3271 = vunpack.c.h.b16 %v2777
    %v3272 = vunpack.c.l.b16 %v2778
    %v3273 = vunpack.c.h.b16 %v2778
    %v3274 = vunpack.c.l.b16 %v2779
    %v3275 = vunpack.c.h.b16 %v2779
    %v3276 = vunpack.c.l.b16 %v2780
    %v3277 = vunpack.c.h.b16 %v2780
    %v3278 = vunpack.c.l.b16 %v2781
    %v3279 = vunpack.c.h.b16 %v2781
    %v3280 = vunpack.c.l.b16 %v2782
    %v3281 = vunpack.c.h.b16 %v2782
    %v3282 = vunpack.c.l.b16 %v2783
    %v3283 = vunpack.c.h.b16 %v2783
    %v3284 = vunpack.c.l.b16 %v2784
    %v3285 = vunpack.c.h.b16 %v2784
    %v3286 = vunpack.c.l.b16 %v2785
    %v3287 = vunpack.c.h.b16 %v2785
    %v3288 = vunpack.c.l.b16 %v2786
    %v3289 = vunpack.c.h.b16 %v2786
    %v3290 = vunpack.c.l.b16 %v2787
    %v3291 = vunpack.c.h.b16 %v2787
    %v3292 = vunpack.c.l.b16 %v2788
    %v3293 = vunpack.c.h.b16 %v2788
    %v3294 = vunpack.c.l.b16 %v2789
    %v3295 = vunpack.c.h.b16 %v2789
    %v3296 = vunpack.c.l.b16 %v2790
    %v3297 = vunpack.c.h.b16 %v2790
    %v3298 = vunpack.c.l.b16 %v2791
    %v3299 = vunpack.c.h.b16 %v2791
    %v3300 = vunpack.c.l.b16 %v2792
    %v3301 = vunpack.c.h.b16 %v2792
    %v3302 = vunpack.c.l.b16 %v2793
    %v3303 = vunpack.c.h.b16 %v2793
    %v3304 = vunpack.c.l.b16 %v2794
    %v3305 = vunpack.c.h.b16 %v2794
    %v3306 = vunpack.c.l.b16 %v2795
    %v3307 = vunpack.c.h.b16 %v2795
    %v3308 = vunpack.c.l.b16 %v2796
    %v3309 = vunpack.c.h.b16 %v2796
    %v3310 = vunpack.c.l.b16 %v2797
    %v3311 = vunpack.c.h.b16 %v2797
    %v3312 = vunpack.c.l.b16 %v2798
    %v3313 = vunpack.c.h.b16 %v2798
    %v3314 = vunpack.c.l.b16 %v2799
    %v3315 = vunpack.c.h.b16 %v2799
    %v3316 = vunpack.c.l.b16 %v2800
    %v3317 = vunpack.c.h.b16 %v2800
    %v3318 = vunpack.c.l.b16 %v2801
    %v3319 = vunpack.c.h.b16 %v2801
    %v3320 = vunpack.c.l.b16 %v2802
    %v3321 = vunpack.c.h.b16 %v2802
    %v3322 = vunpack.c.l.b16 %v2803
    %v3323 = vunpack.c.h.b16 %v2803
    %v3324 = vunpack.c.l.b16 %v2804
    %v3325 = vunpack.c.h.b16 %v2804
    %v3326 = vunpack.c.l.b16 %v2805
    %v3327 = vunpack.c.h.b16 %v2805
    %v3328 = vunpack.c.l.b16 %v2806
    %v3329 = vunpack.c.h.b16 %v2806
    %v3330 = vunpack.c.l.b16 %v2807
    %v3331 = vunpack.c.h.b16 %v2807
    %v3332 = vunpack.c.l.b16 %v2808
    %v3333 = vunpack.c.h.b16 %v2808
    %v3334 = vunpack.c.l.b16 %v2809
    %v3335 = vunpack.c.h.b16 %v2809
    %v3336 = vunpack.c.l.b16 %v2810
    %v3337 = vunpack.c.h.b16 %v2810
    %v3338 = vunpack.c.l.b16 %v2811
    %v3339 = vunpack.c.h.b16 %v2811
    %v3340 = vunpack.c.l.b16 %v2812
    %v3341 = vunpack.c.h.b16 %v2812
    %v3342 = vunpack.c.l.b16 %v2813
    %v3343 = vunpack.c.h.b16 %v2813
    %v3344 = vunpack.c.l.b16 %v2814
    %v3345 = vunpack.c.h.b16 %v2814
    %v3346 = vunpack.c.l.b16 %v2815
    %v3347 = vunpack.c.h.b16 %v2815
    %v3348 = vunpack.c.l.b16 %v2816
    %v3349 = vunpack.c.h.b16 %v2816
    %v3350 = vunpack.c.l.b16 %v2817
    %v3351 = vunpack.c.h.b16 %v2817
    %v3352 = vunpack.c.l.b16 %v2818
    %v3353 = vunpack.c.h.b16 %v2818
    %v3354 = vunpack.c.l.b16 %v2819
    %v3355 = vunpack.c.h.b16 %v2819
    %v3356 = vunpack.c.l.b16 %v2820
    %v3357 = vunpack.c.h.b16 %v2820
    %v3358 = vunpack.c.l.b16 %v2821
    %v3359 = vunpack.c.h.b16 %v2821
    %v3360 = vunpack.c.l.b16 %v2822
    %v3361 = vunpack.c.h.b16 %v2822
    %v3362 = vunpack.c.l.b16 %v2823
    %v3363 = vunpack.c.h.b16 %v2823
    %v3364 = vunpack.c.l.b16 %v2824
    %v3365 = vunpack.c.h.b16 %v2824
    %v3366 = vunpack.c.l.b16 %v2825
    %v3367 = vunpack.c.h.b16 %v2825
    %v3368 = vunpack.c.l.b16 %v2826
    %v3369 = vunpack.c.h.b16 %v2826
    %v3370 = vunpack.c.l.b16 %v2827
    %v3371 = vunpack.c.h.b16 %v2827
    %v3372 = vunpack.c.l.b16 %v2828
    %v3373 = vunpack.c.h.b16 %v2828
    %v3374 = vunpack.c.l.b16 %v2829
    %v3375 = vunpack.c.h.b16 %v2829
    %v3376 = vunpack.c.l.b16 %v2830
    %v3377 = vunpack.c.h.b16 %v2830
    %v3378 = vunpack.c.l.b16 %v2831
    %v3379 = vunpack.c.h.b16 %v2831
    %v3380 = vunpack.c.l.b16 %v2832
    %v3381 = vunpack.c.h.b16 %v2832
    %v3382 = vunpack.c.l.b16 %v2833
    %v3383 = vunpack.c.h.b16 %v2833
    %v3384 = vpack.c.b16 %v3198, %v3192
    %v3385 = vpack.c.b16 %v3199, %v3193
    %v3386 = vpack.c.b16 %v3200, %v3194
    %v3387 = vpack.c.b16 %v3201, %v3195
    %v3388 = vpack.c.b16 %v3202, %v3196
    %v3389 = vpack.c.b16 %v3203, %v3197
    %v3390 = vpack.c.b16 %v3210, %v3204
    %v3391 = vpack.c.b16 %v3211, %v3205
    %v3392 = vpack.c.b16 %v3212, %v3206
    %v3393 = vpack.c.b16 %v3213, %v3207
    %v3394 = vpack.c.b16 %v3214, %v3208
    %v3395 = vpack.c.b16 %v3215, %v3209
    %v3396 = vpack.c.b16 %v3222, %v3216
    %v3397 = vpack.c.b16 %v3223, %v3217
    %v3398 = vpack.c.b16 %v3224, %v3218
    %v3399 = vpack.c.b16 %v3225, %v3219
    %v3400 = vpack.c.b16 %v3226, %v3220
    %v3401 = vpack.c.b16 %v3227, %v3221
    %v3402 = vpack.c.b16 %v3234, %v3228
    %v3403 = vpack.c.b16 %v3235, %v3229
    %v3404 = vpack.c.b16 %v3236, %v3230
    %v3405 = vpack.c.b16 %v3237, %v3231
    %v3406 = vpack.c.b16 %v3238, %v3232
    %v3407 = vpack.c.b16 %v3239, %v3233
    %v3408 = vpack.c.b16 %v3246, %v3240
    %v3409 = vpack.c.b16 %v3247, %v3241
    %v3410 = vpack.c.b16 %v3248, %v3242
    %v3411 = vpack.c.b16 %v3249, %v3243
    %v3412 = vpack.c.b16 %v3250, %v3244
    %v3413 = vpack.c.b16 %v3251, %v3245
    %v3414 = vpack.c.b16 %v3258, %v3252
    %v3415 = vpack.c.b16 %v3259, %v3253
    %v3416 = vpack.c.b16 %v3260, %v3254
    %v3417 = vpack.c.b16 %v3261, %v3255
    %v3418 = vpack.c.b16 %v3262, %v3256
    %v3419 = vpack.c.b16 %v3263, %v3257
    %v3420 = vpack.c.b16 %v3270, %v3264
    %v3421 = vpack.c.b16 %v3271, %v3265
    %v3422 = vpack.c.b16 %v3272, %v3266
    %v3423 = vpack.c.b16 %v3273, %v3267
    %v3424 = vpack.c.b16 %v3274, %v3268
    %v3425 = vpack.c.b16 %v3275, %v3269
    %v3426 = vpack.c.b16 %v3282, %v3276
    %v3427 = vpack.c.b16 %v3283, %v3277
    %v3428 = vpack.c.b16 %v3284, %v3278
    %v3429 = vpack.c.b16 %v3285, %v3279
    %v3430 = vpack.c.b16 %v3286, %v3280
    %v3431 = vpack.c.b16 %v3287, %v3281
    %v3432 = vpack.c.b16 %v3294, %v3288
    %v3433 = vpack.c.b16 %v3295, %v3289
    %v3434 = vpack.c.b16 %v3296, %v3290
    %v3435 = vpack.c.b16 %v3297, %v3291
    %v3436 = vpack.c.b16 %v3298, %v3292
    %v3437 = vpack.c.b16 %v3299, %v3293
    %v3438 = vpack.c.b16 %v3306, %v3300
    %v3439 = vpack.c.b16 %v3307, %v3301
    %v3440 = vpack.c.b16 %v3308, %v3302
    %v3441 = vpack.c.b16 %v3309, %v3303
    %v3442 = vpack.c.b16 %v3310, %v3304
    %v3443 = vpack.c.b16 %v3311, %v3305
    %v3444 = vpack.c.b16 %v3318, %v3312
    %v3445 = vpack.c.b16 %v3319, %v3313
    %v3446 = vpack.c.b16 %v3320, %v3314
    %v3447 = vpack.c.b16 %v3321, %v3315
    %v3448 = vpack.c.b16 %v3322, %v3316
    %v3449 = vpack.c.b16 %v3323, %v3317
    %v3450 = vpack.c.b16 %v3330, %v3324
    %v3451 = vpack.c.b16 %v3331, %v3325
    %v3452 = vpack.c.b16 %v3332, %v3326
    %v3453 = vpack.c.b16 %v3333, %v3327
    %v3454 = vpack.c.b16 %v3334, %v3328
    %v3455 = vpack.c.b16 %v3335, %v3329
    %v3456 = vpack.c.b16 %v3342, %v3336
    %v3457 = vpack.c.b16 %v3343, %v3337
    %v3458 = vpack.c.b16 %v3344, %v3338
    %v3459 = vpack.c.b16 %v3345, %v3339
    %v3460 = vpack.c.b16 %v3346, %v3340
    %v3461 = vpack.c.b16 %v3347, %v3341
    %v3462 = vpack.c.b16 %v3354, %v3348
    %v3463 = vpack.c.b16 %v3355, %v3349
    %v3464 = vpack.c.b16 %v3356, %v3350
    %v3465 = vpack.c.b16 %v3357, %v3351
    %v3466 = vpack.c.b16 %v3358, %v3352
    %v3467 = vpack.c.b16 %v3359, %v3353
    %v3468 = vpack.c.b16 %v3366, %v3360
    %v3469 = vpack.c.b16 %v3367, %v3361
    %v3470 = vpack.c.b16 %v3368, %v3362
    %v3471 = vpack.c.b16 %v3369, %v3363
    %v3472 = vpack.c.b16 %v3370, %v3364
    %v3473 = vpack.c.b16 %v3371, %v3365
    %v3474 = vpack.c.b16 %v3378, %v3372
    %v3475 = vpack.c.b16 %v3379, %v3373
    %v3476 = vpack.c.b16 %v3380, %v3374
    %v3477 = vpack.c.b16 %v3381, %v3375
    %v3478 = vpack.c.b16 %v3382, %v3376
    %v3479 = vpack.c.b16 %v3383, %v3377
    %3576 = vmatpush.bf16.msra.mxu0 %v3426
    %3577 = vmatpush.bf16.msra.mxu0 %v3420
    %3578 = vmatpush.bf16.msra.mxu0 %v3414
    %3579 = vmatpush.bf16.msra.mxu0 %v3408
    %3580 = vmatpush.bf16.msra.mxu0 %v3402
    %3581 = vmatpush.bf16.msra.mxu0 %v3396
    %3582 = vmatpush.bf16.msra.mxu0 %v3390
    %3583 = vmatpush.bf16.msra.mxu0 %v3384
    %3584 = vmatmul.bf16.gmra.mxu0 %v3081
    %v3585 = vpop.f32.mrf.mxu0
    %v3586 = vadd.f32 %v3084, %v3585
    %v3587 = vpop.f32.mrf.mxu0
    %v3588 = vadd.f32 %v3084, %v3587
    %3589 = vdwg.mxu0
    %3590 = vmatpush.bf16.msra.mxu0 %v3474
    %3591 = vmatpush.bf16.msra.mxu0 %v3468
    %3592 = vmatpush.bf16.msra.mxu0 %v3462
    %3593 = vmatpush.bf16.msra.mxu0 %v3456
    %3594 = vmatpush.bf16.msra.mxu0 %v3450
    %3595 = vmatpush.bf16.msra.mxu0 %v3444
    %3596 = vmatpush.bf16.msra.mxu0 %v3438
    %3597 = vmatpush.bf16.msra.mxu0 %v3432
    %3598 = vmatmul.bf16.gmra.mxu0 %v3082
    %v3599 = vpop.f32.mrf.mxu0
    %v3600 = vadd.f32 %v3586, %v3599
    %v3601 = vpop.f32.mrf.mxu0
    %v3602 = vadd.f32 %v3588, %v3601
    %3603 = vdwg.mxu0
    %3604 = vmatpush.bf16.msra.mxu0 %v3427
    %3605 = vmatpush.bf16.msra.mxu0 %v3421
    %3606 = vmatpush.bf16.msra.mxu0 %v3415
    %3607 = vmatpush.bf16.msra.mxu0 %v3409
    %3608 = vmatpush.bf16.msra.mxu0 %v3403
    %3609 = vmatpush.bf16.msra.mxu0 %v3397
    %3610 = vmatpush.bf16.msra.mxu0 %v3391
    %3611 = vmatpush.bf16.msra.mxu0 %v3385
    %3612 = vmatmul.bf16.gmra.mxu0 %v3081
    %v3613 = vpop.f32.mrf.mxu0
    %v3614 = vadd.f32 %v3085, %v3613
    %v3615 = vpop.f32.mrf.mxu0
    %v3616 = vadd.f32 %v3085, %v3615
    %3617 = vdwg.mxu0
    %3618 = vmatpush.bf16.msra.mxu0 %v3475
    %3619 = vmatpush.bf16.msra.mxu0 %v3469
    %3620 = vmatpush.bf16.msra.mxu0 %v3463
    %3621 = vmatpush.bf16.msra.mxu0 %v3457
    %3622 = vmatpush.bf16.msra.mxu0 %v3451
    %3623 = vmatpush.bf16.msra.mxu0 %v3445
    %3624 = vmatpush.bf16.msra.mxu0 %v3439
    %3625 = vmatpush.bf16.msra.mxu0 %v3433
    %3626 = vmatmul.bf16.gmra.mxu0 %v3082
    %v3627 = vpop.f32.mrf.mxu0
    %v3628 = vadd.f32 %v3614, %v3627
    %v3629 = vpop.f32.mrf.mxu0
    %v3630 = vadd.f32 %v3616, %v3629
    %3631 = vdwg.mxu0
    %3632 = vmatpush.bf16.msra.mxu0 %v3428
    %3633 = vmatpush.bf16.msra.mxu0 %v3422
    %3634 = vmatpush.bf16.msra.mxu0 %v3416
    %3635 = vmatpush.bf16.msra.mxu0 %v3410
    %3636 = vmatpush.bf16.msra.mxu0 %v3404
    %3637 = vmatpush.bf16.msra.mxu0 %v3398
    %3638 = vmatpush.bf16.msra.mxu0 %v3392
    %3639 = vmatpush.bf16.msra.mxu0 %v3386
    %3640 = vmatmul.bf16.gmra.mxu0 %v3081
    %v3641 = vpop.f32.mrf.mxu0
    %v3642 = vadd.f32 %v3086, %v3641
    %v3643 = vpop.f32.mrf.mxu0
    %v3644 = vadd.f32 %v3086, %v3643
    %3645 = vdwg.mxu0
    %3646 = vmatpush.bf16.msra.mxu0 %v3476
    %3647 = vmatpush.bf16.msra.mxu0 %v3470
    %3648 = vmatpush.bf16.msra.mxu0 %v3464
    %3649 = vmatpush.bf16.msra.mxu0 %v3458
    %3650 = vmatpush.bf16.msra.mxu0 %v3452
    %3651 = vmatpush.bf16.msra.mxu0 %v3446
    %3652 = vmatpush.bf16.msra.mxu0 %v3440
    %3653 = vmatpush.bf16.msra.mxu0 %v3434
    %3654 = vmatmul.bf16.gmra.mxu0 %v3082
    %v3655 = vpop.f32.mrf.mxu0
    %v3656 = vadd.f32 %v3642, %v3655
    %v3657 = vpop.f32.mrf.mxu0
    %v3658 = vadd.f32 %v3644, %v3657
    %3659 = vdwg.mxu0
    %3660 = vmatpush.bf16.msra.mxu0 %v3429
    %3661 = vmatpush.bf16.msra.mxu0 %v3423
    %3662 = vmatpush.bf16.msra.mxu0 %v3417
    %3663 = vmatpush.bf16.msra.mxu0 %v3411
    %3664 = vmatpush.bf16.msra.mxu0 %v3405
    %3665 = vmatpush.bf16.msra.mxu0 %v3399
    %3666 = vmatpush.bf16.msra.mxu0 %v3393
    %3667 = vmatpush.bf16.msra.mxu0 %v3387
    %3668 = vmatmul.bf16.gmra.mxu0 %v3081
    %v3669 = vpop.f32.mrf.mxu0
    %v3670 = vadd.f32 %v3087, %v3669
    %v3671 = vpop.f32.mrf.mxu0
    %v3672 = vadd.f32 %v3087, %v3671
    %3673 = vdwg.mxu0
    %3674 = vmatpush.bf16.msra.mxu0 %v3477
    %3675 = vmatpush.bf16.msra.mxu0 %v3471
    %3676 = vmatpush.bf16.msra.mxu0 %v3465
    %3677 = vmatpush.bf16.msra.mxu0 %v3459
    %3678 = vmatpush.bf16.msra.mxu0 %v3453
    %3679 = vmatpush.bf16.msra.mxu0 %v3447
    %3680 = vmatpush.bf16.msra.mxu0 %v3441
    %3681 = vmatpush.bf16.msra.mxu0 %v3435
    %3682 = vmatmul.bf16.gmra.mxu0 %v3082
    %v3683 = vpop.f32.mrf.mxu0
    %v3684 = vadd.f32 %v3670, %v3683
    %v3685 = vpop.f32.mrf.mxu0
    %v3686 = vadd.f32 %v3672, %v3685
    %3687 = vdwg.mxu0
    %3688 = vmatpush.bf16.msra.mxu0 %v3430
    %3689 = vmatpush.bf16.msra.mxu0 %v3424
    %3690 = vmatpush.bf16.msra.mxu0 %v3418
    %3691 = vmatpush.bf16.msra.mxu0 %v3412
    %3692 = vmatpush.bf16.msra.mxu0 %v3406
    %3693 = vmatpush.bf16.msra.mxu0 %v3400
    %3694 = vmatpush.bf16.msra.mxu0 %v3394
    %3695 = vmatpush.bf16.msra.mxu0 %v3388
    %3696 = vmatmul.bf16.gmra.mxu0 %v3081
    %v3697 = vpop.f32.mrf.mxu0
    %v3698 = vadd.f32 %v3088, %v3697
    %v3699 = vpop.f32.mrf.mxu0
    %v3700 = vadd.f32 %v3088, %v3699
    %3701 = vdwg.mxu0
    %3702 = vmatpush.bf16.msra.mxu0 %v3478
    %3703 = vmatpush.bf16.msra.mxu0 %v3472
    %3704 = vmatpush.bf16.msra.mxu0 %v3466
    %3705 = vmatpush.bf16.msra.mxu0 %v3460
    %3706 = vmatpush.bf16.msra.mxu0 %v3454
    %3707 = vmatpush.bf16.msra.mxu0 %v3448
    %3708 = vmatpush.bf16.msra.mxu0 %v3442
    %3709 = vmatpush.bf16.msra.mxu0 %v3436
    %3710 = vmatmul.bf16.gmra.mxu0 %v3082
    %v3711 = vpop.f32.mrf.mxu0
    %v3712 = vadd.f32 %v3698, %v3711
    %v3713 = vpop.f32.mrf.mxu0
    %v3714 = vadd.f32 %v3700, %v3713
    %3715 = vdwg.mxu0
    %3716 = vmatpush.bf16.msra.mxu0 %v3431
    %3717 = vmatpush.bf16.msra.mxu0 %v3425
    %3718 = vmatpush.bf16.msra.mxu0 %v3419
    %3719 = vmatpush.bf16.msra.mxu0 %v3413
    %3720 = vmatpush.bf16.msra.mxu0 %v3407
    %3721 = vmatpush.bf16.msra.mxu0 %v3401
    %3722 = vmatpush.bf16.msra.mxu0 %v3395
    %3723 = vmatpush.bf16.msra.mxu0 %v3389
    %3724 = vmatmul.bf16.gmra.mxu0 %v3081
    %v3725 = vpop.f32.mrf.mxu0
    %v3726 = vadd.f32 %v3089, %v3725
    %v3727 = vpop.f32.mrf.mxu0
    %v3728 = vadd.f32 %v3089, %v3727
    %3729 = vdwg.mxu0
    %3730 = vmatpush.bf16.msra.mxu0 %v3479
    %3731 = vmatpush.bf16.msra.mxu0 %v3473
    %3732 = vmatpush.bf16.msra.mxu0 %v3467
    %3733 = vmatpush.bf16.msra.mxu0 %v3461
    %3734 = vmatpush.bf16.msra.mxu0 %v3455
    %3735 = vmatpush.bf16.msra.mxu0 %v3449
    %3736 = vmatpush.bf16.msra.mxu0 %v3443
    %3737 = vmatpush.bf16.msra.mxu0 %v3437
    %3738 = vmatmul.bf16.gmra.mxu0 %v3082
    %v3739 = vpop.f32.mrf.mxu0
    %v3740 = vadd.f32 %v3726, %v3739
    %v3741 = vpop.f32.mrf.mxu0
    %v3742 = vadd.f32 %v3728, %v3741
    %3743 = vdwg.mxu0
    %3744 = vmatpush.xpose.msra.mxu0 0.0
    %3745 = vmatpush.xpose.msra.mxu0 0.0
    %3746 = vmatpush.xpose.msra.mxu0 0.0
    %3747 = vmatpush.xpose.msra.mxu0 0.0
    %3748 = vmatpush.xpose.msra.mxu0 0.0
    %3749 = vmatpush.xpose.msra.mxu0 0.0
    %3750 = vmatpush.xpose.msra.mxu0 0.0
    %3751 = vmatpush.xpose.msra.mxu0 0.0
    %3752 = vmatpush.xpose.msra.mxu0 0.0
    %3753 = vmatpush.xpose.msra.mxu0 0.0
    %3754 = vmatpush.xpose.msra.mxu0 0.0
    %3755 = vmatpush.xpose.msra.mxu0 0.0
    %3756 = vmatpush.xpose.msra.mxu0 0.0
    %3757 = vmatpush.xpose.msra.mxu0 0.0
    %3758 = vmatpush.xpose.msra.mxu0 0.0
    %3759 = vmatpush.xpose.msra.mxu0 %v3656
    %3760 = vmatmul.f32.gmra.mxu0 %v3600
    %v3761 = vpop.f32.mrf.mxu0
    %v3762 = vadd.f32 0.0, %v3761
    %3763 = vdwg.mxu0
    %3764 = vmatpush.xpose.msra.mxu0 0.0
    %3765 = vmatpush.xpose.msra.mxu0 0.0
    %3766 = vmatpush.xpose.msra.mxu0 0.0
    %3767 = vmatpush.xpose.msra.mxu0 0.0
    %3768 = vmatpush.xpose.msra.mxu0 0.0
    %3769 = vmatpush.xpose.msra.mxu0 0.0
    %3770 = vmatpush.xpose.msra.mxu0 0.0
    %3771 = vmatpush.xpose.msra.mxu0 0.0
    %3772 = vmatpush.xpose.msra.mxu0 0.0
    %3773 = vmatpush.xpose.msra.mxu0 0.0
    %3774 = vmatpush.xpose.msra.mxu0 0.0
    %3775 = vmatpush.xpose.msra.mxu0 0.0
    %3776 = vmatpush.xpose.msra.mxu0 0.0
    %3777 = vmatpush.xpose.msra.mxu0 0.0
    %3778 = vmatpush.xpose.msra.mxu0 0.0
    %3779 = vmatpush.xpose.msra.mxu0 %v3658
    %3780 = vmatmul.f32.gmra.mxu0 %v3602
    %v3781 = vpop.f32.mrf.mxu0
    %v3782 = vadd.f32 0.0, %v3781
    %3783 = vdwg.mxu0
    %3784 = vmatpush.xpose.msra.mxu0 0.0
    %3785 = vmatpush.xpose.msra.mxu0 0.0
    %3786 = vmatpush.xpose.msra.mxu0 0.0
    %3787 = vmatpush.xpose.msra.mxu0 0.0
    %3788 = vmatpush.xpose.msra.mxu0 0.0
    %3789 = vmatpush.xpose.msra.mxu0 0.0
    %3790 = vmatpush.xpose.msra.mxu0 0.0
    %3791 = vmatpush.xpose.msra.mxu0 0.0
    %3792 = vmatpush.xpose.msra.mxu0 0.0
    %3793 = vmatpush.xpose.msra.mxu0 0.0
    %3794 = vmatpush.xpose.msra.mxu0 0.0
    %3795 = vmatpush.xpose.msra.mxu0 0.0
    %3796 = vmatpush.xpose.msra.mxu0 0.0
    %3797 = vmatpush.xpose.msra.mxu0 0.0
    %3798 = vmatpush.xpose.msra.mxu0 0.0
    %3799 = vmatpush.xpose.msra.mxu0 %v3684
    %3800 = vmatmul.f32.gmra.mxu0 %v3628
    %v3801 = vpop.f32.mrf.mxu0
    %v3802 = vadd.f32 0.0, %v3801
    %3803 = vdwg.mxu0
    %3804 = vmatpush.xpose.msra.mxu0 0.0
    %3805 = vmatpush.xpose.msra.mxu0 0.0
    %3806 = vmatpush.xpose.msra.mxu0 0.0
    %3807 = vmatpush.xpose.msra.mxu0 0.0
    %3808 = vmatpush.xpose.msra.mxu0 0.0
    %3809 = vmatpush.xpose.msra.mxu0 0.0
    %3810 = vmatpush.xpose.msra.mxu0 0.0
    %3811 = vmatpush.xpose.msra.mxu0 0.0
    %3812 = vmatpush.xpose.msra.mxu0 0.0
    %3813 = vmatpush.xpose.msra.mxu0 0.0
    %3814 = vmatpush.xpose.msra.mxu0 0.0
    %3815 = vmatpush.xpose.msra.mxu0 0.0
    %3816 = vmatpush.xpose.msra.mxu0 0.0
    %3817 = vmatpush.xpose.msra.mxu0 0.0
    %3818 = vmatpush.xpose.msra.mxu0 0.0
    %3819 = vmatpush.xpose.msra.mxu0 %v3686
    %3820 = vmatmul.f32.gmra.mxu0 %v3630
    %v3821 = vpop.f32.mrf.mxu0
    %v3822 = vadd.f32 0.0, %v3821
    %3823 = vdwg.mxu0
    %v3824 = vmul.f32 %v3762, 0.088388346
    %v3825 = vmul.f32 %v3782, 0.088388346
    %v3826 = vmul.f32 %v3802, 0.088388346
    %v3827 = vmul.f32 %v3822, 0.088388346
    %v3828 = vadd.f32 %v3824, %v1333
    %v3829 = vadd.f32 %v3825, %v1334
    %v3830 = vadd.f32 %v3826, %v1335
    %v3831 = vadd.f32 %v3827, %v1336
    %v3832 = vsel %vm1345, %v3828, -inf
    %3833 = vmax.xlane.f32.xlu0 %v3832
    %v3834 = vpop.xlane.xlu0 %3833
    %v3835 = vsel %vm1345, %v3829, -inf
    %3836 = vmax.xlane.f32.xlu0 %v3835
    %v3837 = vpop.xlane.xlu0 %3836
    %v3838 = vsel %vm1345, %v3830, -inf
    %3839 = vmax.xlane.f32.xlu0 %v3838
    %v3840 = vpop.xlane.xlu0 %3839
    %v3841 = vsel %vm1345, %v3831, -inf
    %3842 = vmax.xlane.f32.xlu0 %v3841
    %v3843 = vpop.xlane.xlu0 %3842
    %v3844 = vsub.f32 %v3828, %v3834
    %v3845 = vsub.f32 %v3829, %v3837
    %v3846 = vsub.f32 %v3830, %v3840
    %v3847 = vsub.f32 %v3831, %v3843
    %v3848 = vmul.f32 %v3844, 1.442695
    %v3849 = vpow.pop %v3848
    %v3850 = vmul.f32 %v3845, 1.442695
    %v3851 = vpow.pop %v3850
    %v3852 = vmul.f32 %v3846, 1.442695
    %v3853 = vpow.pop %v3852
    %v3854 = vmul.f32 %v3847, 1.442695
    %v3855 = vpow.pop %v3854
    %v3856 = vsel %vm1345, %v3849, 0.0
    %3857 = vadd.xlane.f32.xlu0 %v3856
    %v3858 = vpop.xlane.xlu0 %3857
    %v3859 = vsel %vm1345, %v3851, 0.0
    %3860 = vadd.xlane.f32.xlu0 %v3859
    %v3861 = vpop.xlane.xlu0 %3860
    %v3862 = vsel %vm1345, %v3853, 0.0
    %3863 = vadd.xlane.f32.xlu0 %v3862
    %v3864 = vpop.xlane.xlu0 %3863
    %v3865 = vsel %vm1345, %v3855, 0.0
    %3866 = vadd.xlane.f32.xlu0 %v3865
    %v3867 = vpop.xlane.xlu0 %3866
    %v3868 = vrcp.pop %v3858
    %v3869 = vrcp.pop %v3861
    %v3870 = vrcp.pop %v3864
    %v3871 = vrcp.pop %v3867
    %v3872 = vmul.f32 %v3849, %v3868
    %v3873 = vmul.f32 %v3851, %v3869
    %v3874 = vmul.f32 %v3853, %v3870
    %v3875 = vmul.f32 %v3855, %v3871
    %v3877 = vsel %vm1345, %v3872, 0
    %3879 = vmatpush.msra.mxu0 0.0
    %3880 = vmatpush.msra.mxu0 0.0
    %3881 = vmatpush.msra.mxu0 0.0
    %3882 = vmatpush.msra.mxu0 0.0
    %3883 = vmatpush.msra.mxu0 0.0
    %3884 = vmatpush.msra.mxu0 0.0
    %3885 = vmatpush.msra.mxu0 0.0
    %3886 = vmatpush.msra.mxu0 0.0
    %3887 = vmatpush.msra.mxu0 0.0
    %3888 = vmatpush.msra.mxu0 0.0
    %3889 = vmatpush.msra.mxu0 0.0
    %3890 = vmatpush.msra.mxu0 0.0
    %3891 = vmatpush.msra.mxu0 0.0
    %3892 = vmatpush.msra.mxu0 0.0
    %3893 = vmatpush.msra.mxu0 0.0
    %3894 = vmatpush.msra.mxu0 %v3712
    %3895 = vmatmul.f32.gmra.mxu0 %v3877
    %v3896 = vpop.f32.mrf.mxu0
    %v3897 = vadd.f32 0.0, %v3896
    %3898 = vdwg.mxu0
    %v3900 = vsel %vm1345, %v3873, 0
    %3902 = vmatpush.msra.mxu0 0.0
    %3903 = vmatpush.msra.mxu0 0.0
    %3904 = vmatpush.msra.mxu0 0.0
    %3905 = vmatpush.msra.mxu0 0.0
    %3906 = vmatpush.msra.mxu0 0.0
    %3907 = vmatpush.msra.mxu0 0.0
    %3908 = vmatpush.msra.mxu0 0.0
    %3909 = vmatpush.msra.mxu0 0.0
    %3910 = vmatpush.msra.mxu0 0.0
    %3911 = vmatpush.msra.mxu0 0.0
    %3912 = vmatpush.msra.mxu0 0.0
    %3913 = vmatpush.msra.mxu0 0.0
    %3914 = vmatpush.msra.mxu0 0.0
    %3915 = vmatpush.msra.mxu0 0.0
    %3916 = vmatpush.msra.mxu0 0.0
    %3917 = vmatpush.msra.mxu0 %v3714
    %3918 = vmatmul.f32.gmra.mxu0 %v3900
    %v3919 = vpop.f32.mrf.mxu0
    %v3920 = vadd.f32 0.0, %v3919
    %3921 = vdwg.mxu0
    %v3923 = vsel %vm1345, %v3874, 0
    %3925 = vmatpush.msra.mxu0 0.0
    %3926 = vmatpush.msra.mxu0 0.0
    %3927 = vmatpush.msra.mxu0 0.0
    %3928 = vmatpush.msra.mxu0 0.0
    %3929 = vmatpush.msra.mxu0 0.0
    %3930 = vmatpush.msra.mxu0 0.0
    %3931 = vmatpush.msra.mxu0 0.0
    %3932 = vmatpush.msra.mxu0 0.0
    %3933 = vmatpush.msra.mxu0 0.0
    %3934 = vmatpush.msra.mxu0 0.0
    %3935 = vmatpush.msra.mxu0 0.0
    %3936 = vmatpush.msra.mxu0 0.0
    %3937 = vmatpush.msra.mxu0 0.0
    %3938 = vmatpush.msra.mxu0 0.0
    %3939 = vmatpush.msra.mxu0 0.0
    %3940 = vmatpush.msra.mxu0 %v3740
    %3941 = vmatmul.f32.gmra.mxu0 %v3923
    %v3942 = vpop.f32.mrf.mxu0
    %v3943 = vadd.f32 0.0, %v3942
    %3944 = vdwg.mxu0
    %v3946 = vsel %vm1345, %v3875, 0
    %3948 = vmatpush.msra.mxu0 0.0
    %3949 = vmatpush.msra.mxu0 0.0
    %3950 = vmatpush.msra.mxu0 0.0
    %3951 = vmatpush.msra.mxu0 0.0
    %3952 = vmatpush.msra.mxu0 0.0
    %3953 = vmatpush.msra.mxu0 0.0
    %3954 = vmatpush.msra.mxu0 0.0
    %3955 = vmatpush.msra.mxu0 0.0
    %3956 = vmatpush.msra.mxu0 0.0
    %3957 = vmatpush.msra.mxu0 0.0
    %3958 = vmatpush.msra.mxu0 0.0
    %3959 = vmatpush.msra.mxu0 0.0
    %3960 = vmatpush.msra.mxu0 0.0
    %3961 = vmatpush.msra.mxu0 0.0
    %3962 = vmatpush.msra.mxu0 0.0
    %3963 = vmatpush.msra.mxu0 %v3742
    %3964 = vmatmul.f32.gmra.mxu0 %v3946
    %v3965 = vpop.f32.mrf.mxu0
    %v3966 = vadd.f32 0.0, %v3965
    %3967 = vdwg.mxu0
    %v3968 = vpack.c.bf16 %v3920, %v3897
    %v3969 = vpack.c.bf16 %v3966, %v3943
    %v3971 = vperm.slane %v2870, 0
    %v3972 = vperm.slane %v2870, 1
    %v4007 = vunpack.c.l.b16 %v2837
    %v4008 = vunpack.c.h.b16 %v2837
    %v4009 = vunpack.c.l.b16 %v2838
    %v4010 = vunpack.c.h.b16 %v2838
    %v4011 = vunpack.c.l.b16 %v2839
    %v4012 = vunpack.c.h.b16 %v2839
    %v4013 = vunpack.c.l.b16 %v2840
    %v4014 = vunpack.c.h.b16 %v2840
    %v4015 = vunpack.c.l.b16 %v2841
    %v4016 = vunpack.c.h.b16 %v2841
    %v4017 = vunpack.c.l.b16 %v2842
    %v4018 = vunpack.c.h.b16 %v2842
    %v4019 = vunpack.c.l.b16 %v2843
    %v4020 = vunpack.c.h.b16 %v2843
    %v4021 = vunpack.c.l.b16 %v2844
    %v4022 = vunpack.c.h.b16 %v2844
    %v4023 = vunpack.c.l.b16 %v2845
    %v4024 = vunpack.c.h.b16 %v2845
    %v4025 = vunpack.c.l.b16 %v2846
    %v4026 = vunpack.c.h.b16 %v2846
    %v4027 = vunpack.c.l.b16 %v2847
    %v4028 = vunpack.c.h.b16 %v2847
    %v4029 = vunpack.c.l.b16 %v2848
    %v4030 = vunpack.c.h.b16 %v2848
    %v4031 = vunpack.c.l.b16 %v2849
    %v4032 = vunpack.c.h.b16 %v2849
    %v4033 = vunpack.c.l.b16 %v2850
    %v4034 = vunpack.c.h.b16 %v2850
    %v4035 = vunpack.c.l.b16 %v2851
    %v4036 = vunpack.c.h.b16 %v2851
    %v4037 = vunpack.c.l.b16 %v2852
    %v4038 = vunpack.c.h.b16 %v2852
    %v4039 = vunpack.c.l.b16 %v2853
    %v4040 = vunpack.c.h.b16 %v2853
    %v4041 = vunpack.c.l.b16 %v2854
    %v4042 = vunpack.c.h.b16 %v2854
    %v4043 = vunpack.c.l.b16 %v2855
    %v4044 = vunpack.c.h.b16 %v2855
    %v4045 = vunpack.c.l.b16 %v2856
    %v4046 = vunpack.c.h.b16 %v2856
    %v4047 = vunpack.c.l.b16 %v2857
    %v4048 = vunpack.c.h.b16 %v2857
    %v4049 = vunpack.c.l.b16 %v2858
    %v4050 = vunpack.c.h.b16 %v2858
    %v4051 = vunpack.c.l.b16 %v2859
    %v4052 = vunpack.c.h.b16 %v2859
    %v4053 = vunpack.c.l.b16 %v2860
    %v4054 = vunpack.c.h.b16 %v2860
    %v4055 = vunpack.c.l.b16 %v2861
    %v4056 = vunpack.c.h.b16 %v2861
    %v4057 = vunpack.c.l.b16 %v2862
    %v4058 = vunpack.c.h.b16 %v2862
    %v4059 = vunpack.c.l.b16 %v2863
    %v4060 = vunpack.c.h.b16 %v2863
    %v4061 = vunpack.c.l.b16 %v2864
    %v4062 = vunpack.c.h.b16 %v2864
    %v4063 = vunpack.c.l.b16 %v2865
    %v4064 = vunpack.c.h.b16 %v2865
    %v4065 = vunpack.c.l.b16 %v2866
    %v4066 = vunpack.c.h.b16 %v2866
    %v4067 = vunpack.c.l.b16 %v2867
    %v4068 = vunpack.c.h.b16 %v2867
    %v4069 = vunpack.c.l.b16 %v2868
    %v4070 = vunpack.c.h.b16 %v2868
    %v4071 = vpack.c.b16 %v4009, %v4007
    %v4072 = vpack.c.b16 %v4010, %v4008
    %v4073 = vpack.c.b16 %v4013, %v4011
    %v4074 = vpack.c.b16 %v4014, %v4012
    %v4075 = vpack.c.b16 %v4017, %v4015
    %v4076 = vpack.c.b16 %v4018, %v4016
    %v4077 = vpack.c.b16 %v4021, %v4019
    %v4078 = vpack.c.b16 %v4022, %v4020
    %v4079 = vpack.c.b16 %v4025, %v4023
    %v4080 = vpack.c.b16 %v4026, %v4024
    %v4081 = vpack.c.b16 %v4029, %v4027
    %v4082 = vpack.c.b16 %v4030, %v4028
    %v4083 = vpack.c.b16 %v4033, %v4031
    %v4084 = vpack.c.b16 %v4034, %v4032
    %v4085 = vpack.c.b16 %v4037, %v4035
    %v4086 = vpack.c.b16 %v4038, %v4036
    %v4087 = vpack.c.b16 %v4041, %v4039
    %v4088 = vpack.c.b16 %v4042, %v4040
    %v4089 = vpack.c.b16 %v4045, %v4043
    %v4090 = vpack.c.b16 %v4046, %v4044
    %v4091 = vpack.c.b16 %v4049, %v4047
    %v4092 = vpack.c.b16 %v4050, %v4048
    %v4093 = vpack.c.b16 %v4053, %v4051
    %v4094 = vpack.c.b16 %v4054, %v4052
    %v4095 = vpack.c.b16 %v4057, %v4055
    %v4096 = vpack.c.b16 %v4058, %v4056
    %v4097 = vpack.c.b16 %v4061, %v4059
    %v4098 = vpack.c.b16 %v4062, %v4060
    %v4099 = vpack.c.b16 %v4065, %v4063
    %v4100 = vpack.c.b16 %v4066, %v4064
    %v4101 = vpack.c.b16 %v4069, %v4067
    %v4102 = vpack.c.b16 %v4070, %v4068
    %4135 = vmatpush.bf16.msra.mxu0 %v4085
    %4136 = vmatpush.bf16.msra.mxu0 %v4083
    %4137 = vmatpush.bf16.msra.mxu0 %v4081
    %4138 = vmatpush.bf16.msra.mxu0 %v4079
    %4139 = vmatpush.bf16.msra.mxu0 %v4077
    %4140 = vmatpush.bf16.msra.mxu0 %v4075
    %4141 = vmatpush.bf16.msra.mxu0 %v4073
    %4142 = vmatpush.bf16.msra.mxu0 %v4071
    %4143 = vmatmul.bf16.gmra.mxu0 %v3968
    %v4144 = vpop.f32.mrf.mxu0
    %v4145 = vadd.f32 %v3971, %v4144
    %v4146 = vpop.f32.mrf.mxu0
    %v4147 = vadd.f32 %v3971, %v4146
    %4148 = vdwg.mxu0
    %4149 = vmatpush.bf16.msra.mxu0 %v4101
    %4150 = vmatpush.bf16.msra.mxu0 %v4099
    %4151 = vmatpush.bf16.msra.mxu0 %v4097
    %4152 = vmatpush.bf16.msra.mxu0 %v4095
    %4153 = vmatpush.bf16.msra.mxu0 %v4093
    %4154 = vmatpush.bf16.msra.mxu0 %v4091
    %4155 = vmatpush.bf16.msra.mxu0 %v4089
    %4156 = vmatpush.bf16.msra.mxu0 %v4087
    %4157 = vmatmul.bf16.gmra.mxu0 %v3969
    %v4158 = vpop.f32.mrf.mxu0
    %v4159 = vadd.f32 %v4145, %v4158
    %v4160 = vpop.f32.mrf.mxu0
    %v4161 = vadd.f32 %v4147, %v4160
    %4162 = vdwg.mxu0
    %4163 = vmatpush.bf16.msra.mxu0 %v4086
    %4164 = vmatpush.bf16.msra.mxu0 %v4084
    %4165 = vmatpush.bf16.msra.mxu0 %v4082
    %4166 = vmatpush.bf16.msra.mxu0 %v4080
    %4167 = vmatpush.bf16.msra.mxu0 %v4078
    %4168 = vmatpush.bf16.msra.mxu0 %v4076
    %4169 = vmatpush.bf16.msra.mxu0 %v4074
    %4170 = vmatpush.bf16.msra.mxu0 %v4072
    %4171 = vmatmul.bf16.gmra.mxu0 %v3968
    %v4172 = vpop.f32.mrf.mxu0
    %v4173 = vadd.f32 %v3972, %v4172
    %v4174 = vpop.f32.mrf.mxu0
    %v4175 = vadd.f32 %v3972, %v4174
    %4176 = vdwg.mxu0
    %4177 = vmatpush.bf16.msra.mxu0 %v4102
    %4178 = vmatpush.bf16.msra.mxu0 %v4100
    %4179 = vmatpush.bf16.msra.mxu0 %v4098
    %4180 = vmatpush.bf16.msra.mxu0 %v4096
    %4181 = vmatpush.bf16.msra.mxu0 %v4094
    %4182 = vmatpush.bf16.msra.mxu0 %v4092
    %4183 = vmatpush.bf16.msra.mxu0 %v4090
    %4184 = vmatpush.bf16.msra.mxu0 %v4088
    %4185 = vmatmul.bf16.gmra.mxu0 %v3969
    %v4186 = vpop.f32.mrf.mxu0
    %v4187 = vadd.f32 %v4173, %v4186
    %v4188 = vpop.f32.mrf.mxu0
    %v4189 = vadd.f32 %v4175, %v4188
    %4190 = vdwg.mxu0
    %v4191 = vadd.f32 %v2733, %v4159
    %v4192 = vadd.f32 %v2734, %v4187
    %v4193 = vadd.f32 %v2735, %v4161
    %v4194 = vadd.f32 %v2736, %v4189
    %v4195 = vadd.f32 %v4191, %v4192
    %4196 = vadd.xlane.f32.xlu0 %v4195
    %v4197 = vpop.xlane.xlu0 %4196
    %v4198 = vadd.f32 %v4193, %v4194
    %4199 = vadd.xlane.f32.xlu0 %v4198
    %v4200 = vpop.xlane.xlu0 %4199
    %v4201 = vmul.f32 %v4197, %v519
    %v4202 = vmul.f32 %v4200, %v519
    %v4203 = vsub.f32 %v4191, %v4201
    %v4204 = vsub.f32 %v4192, %v4201
    %v4205 = vsub.f32 %v4193, %v4202
    %v4206 = vsub.f32 %v4194, %v4202
    %v4207 = vmul.f32 %v4203, %v4203
    %v4208 = vmul.f32 %v4204, %v4204
    %v4209 = vmul.f32 %v4205, %v4205
    %v4210 = vmul.f32 %v4206, %v4206
    %v4211 = vadd.f32 %v4207, %v4208
    %4212 = vadd.xlane.f32.xlu0 %v4211
    %v4213 = vpop.xlane.xlu0 %4212
    %v4214 = vadd.f32 %v4209, %v4210
    %4215 = vadd.xlane.f32.xlu0 %v4214
    %v4216 = vpop.xlane.xlu0 %4215
    %v4217 = vmul.f32 %v4213, %v519
    %v4218 = vmul.f32 %v4216, %v519
    %v4219 = vadd.f32 %v4217, 1e-05
    %v4220 = vadd.f32 %v4218, 1e-05
    %v4221 = vrsqrt.pop %v4219
    %v4222 = vmul.f32 %v4221, %v4219
    %v4223 = vmul.f32 %v4222, %v4221
    %v4224 = vmul.f32 0.5, %v4223
    %v4225 = vsub.f32 1.5, %v4224
    %v4226 = vmul.f32 %v4221, %v4225
    %vm4227 = vweird.f32 %v4219
    %vm4228 = vweird.f32 %v4221
    %vm4229 = vmor %vm4227, %vm4228
    %v4230 = vsel %vm4229, %v4221, %v4226
    %v4231 = vrsqrt.pop %v4220
    %v4232 = vmul.f32 %v4231, %v4220
    %v4233 = vmul.f32 %v4232, %v4231
    %v4234 = vmul.f32 0.5, %v4233
    %v4235 = vsub.f32 1.5, %v4234
    %v4236 = vmul.f32 %v4231, %v4235
    %vm4237 = vweird.f32 %v4220
    %vm4238 = vweird.f32 %v4231
    %vm4239 = vmor %vm4237, %vm4238
    %v4240 = vsel %vm4239, %v4231, %v4236
    %v4241 = vmul.f32 %v4203, %v4230
    %v4242 = vmul.f32 %v4204, %v4230
    %v4243 = vmul.f32 %v4205, %v4240
    %v4244 = vmul.f32 %v4206, %v4240
    %v4246 = vperm.slane %v2876, 0
    %v4247 = vperm.slane %v2876, 1
    %v4250 = vmul.f32 %v4241, %v4246
    %v4251 = vmul.f32 %v4242, %v4247
    %v4252 = vmul.f32 %v4243, %v4246
    %v4253 = vmul.f32 %v4244, %v4247
    %v4255 = vperm.slane %v2878, 0
    %v4256 = vperm.slane %v2878, 1
    %v4259 = vadd.f32 %v4250, %v4255
    %v4260 = vadd.f32 %v4251, %v4256
    %v4261 = vadd.f32 %v4252, %v4255
    %v4262 = vadd.f32 %v4253, %v4256
    %v4263 = vpack.c.bf16 %v4261, %v4259
    %v4264 = vpack.c.bf16 %v4262, %v4260
    %v4266 = vperm.slane %v2945, 0
    %v4267 = vperm.slane %v2945, 1
    %v4268 = vperm.slane %v2945, 2
    %v4269 = vperm.slane %v2945, 3
    %v4338 = vunpack.c.l.b16 %v2880
    %v4339 = vunpack.c.h.b16 %v2880
    %v4340 = vunpack.c.l.b16 %v2881
    %v4341 = vunpack.c.h.b16 %v2881
    %v4342 = vunpack.c.l.b16 %v2882
    %v4343 = vunpack.c.h.b16 %v2882
    %v4344 = vunpack.c.l.b16 %v2883
    %v4345 = vunpack.c.h.b16 %v2883
    %v4346 = vunpack.c.l.b16 %v2884
    %v4347 = vunpack.c.h.b16 %v2884
    %v4348 = vunpack.c.l.b16 %v2885
    %v4349 = vunpack.c.h.b16 %v2885
    %v4350 = vunpack.c.l.b16 %v2886
    %v4351 = vunpack.c.h.b16 %v2886
    %v4352 = vunpack.c.l.b16 %v2887
    %v4353 = vunpack.c.h.b16 %v2887
    %v4354 = vunpack.c.l.b16 %v2888
    %v4355 = vunpack.c.h.b16 %v2888
    %v4356 = vunpack.c.l.b16 %v2889
    %v4357 = vunpack.c.h.b16 %v2889
    %v4358 = vunpack.c.l.b16 %v2890
    %v4359 = vunpack.c.h.b16 %v2890
    %v4360 = vunpack.c.l.b16 %v2891
    %v4361 = vunpack.c.h.b16 %v2891
    %v4362 = vunpack.c.l.b16 %v2892
    %v4363 = vunpack.c.h.b16 %v2892
    %v4364 = vunpack.c.l.b16 %v2893
    %v4365 = vunpack.c.h.b16 %v2893
    %v4366 = vunpack.c.l.b16 %v2894
    %v4367 = vunpack.c.h.b16 %v2894
    %v4368 = vunpack.c.l.b16 %v2895
    %v4369 = vunpack.c.h.b16 %v2895
    %v4370 = vunpack.c.l.b16 %v2896
    %v4371 = vunpack.c.h.b16 %v2896
    %v4372 = vunpack.c.l.b16 %v2897
    %v4373 = vunpack.c.h.b16 %v2897
    %v4374 = vunpack.c.l.b16 %v2898
    %v4375 = vunpack.c.h.b16 %v2898
    %v4376 = vunpack.c.l.b16 %v2899
    %v4377 = vunpack.c.h.b16 %v2899
    %v4378 = vunpack.c.l.b16 %v2900
    %v4379 = vunpack.c.h.b16 %v2900
    %v4380 = vunpack.c.l.b16 %v2901
    %v4381 = vunpack.c.h.b16 %v2901
    %v4382 = vunpack.c.l.b16 %v2902
    %v4383 = vunpack.c.h.b16 %v2902
    %v4384 = vunpack.c.l.b16 %v2903
    %v4385 = vunpack.c.h.b16 %v2903
    %v4386 = vunpack.c.l.b16 %v2904
    %v4387 = vunpack.c.h.b16 %v2904
    %v4388 = vunpack.c.l.b16 %v2905
    %v4389 = vunpack.c.h.b16 %v2905
    %v4390 = vunpack.c.l.b16 %v2906
    %v4391 = vunpack.c.h.b16 %v2906
    %v4392 = vunpack.c.l.b16 %v2907
    %v4393 = vunpack.c.h.b16 %v2907
    %v4394 = vunpack.c.l.b16 %v2908
    %v4395 = vunpack.c.h.b16 %v2908
    %v4396 = vunpack.c.l.b16 %v2909
    %v4397 = vunpack.c.h.b16 %v2909
    %v4398 = vunpack.c.l.b16 %v2910
    %v4399 = vunpack.c.h.b16 %v2910
    %v4400 = vunpack.c.l.b16 %v2911
    %v4401 = vunpack.c.h.b16 %v2911
    %v4402 = vunpack.c.l.b16 %v2912
    %v4403 = vunpack.c.h.b16 %v2912
    %v4404 = vunpack.c.l.b16 %v2913
    %v4405 = vunpack.c.h.b16 %v2913
    %v4406 = vunpack.c.l.b16 %v2914
    %v4407 = vunpack.c.h.b16 %v2914
    %v4408 = vunpack.c.l.b16 %v2915
    %v4409 = vunpack.c.h.b16 %v2915
    %v4410 = vunpack.c.l.b16 %v2916
    %v4411 = vunpack.c.h.b16 %v2916
    %v4412 = vunpack.c.l.b16 %v2917
    %v4413 = vunpack.c.h.b16 %v2917
    %v4414 = vunpack.c.l.b16 %v2918
    %v4415 = vunpack.c.h.b16 %v2918
    %v4416 = vunpack.c.l.b16 %v2919
    %v4417 = vunpack.c.h.b16 %v2919
    %v4418 = vunpack.c.l.b16 %v2920
    %v4419 = vunpack.c.h.b16 %v2920
    %v4420 = vunpack.c.l.b16 %v2921
    %v4421 = vunpack.c.h.b16 %v2921
    %v4422 = vunpack.c.l.b16 %v2922
    %v4423 = vunpack.c.h.b16 %v2922
    %v4424 = vunpack.c.l.b16 %v2923
    %v4425 = vunpack.c.h.b16 %v2923
    %v4426 = vunpack.c.l.b16 %v2924
    %v4427 = vunpack.c.h.b16 %v2924
    %v4428 = vunpack.c.l.b16 %v2925
    %v4429 = vunpack.c.h.b16 %v2925
    %v4430 = vunpack.c.l.b16 %v2926
    %v4431 = vunpack.c.h.b16 %v2926
    %v4432 = vunpack.c.l.b16 %v2927
    %v4433 = vunpack.c.h.b16 %v2927
    %v4434 = vunpack.c.l.b16 %v2928
    %v4435 = vunpack.c.h.b16 %v2928
    %v4436 = vunpack.c.l.b16 %v2929
    %v4437 = vunpack.c.h.b16 %v2929
    %v4438 = vunpack.c.l.b16 %v2930
    %v4439 = vunpack.c.h.b16 %v2930
    %v4440 = vunpack.c.l.b16 %v2931
    %v4441 = vunpack.c.h.b16 %v2931
    %v4442 = vunpack.c.l.b16 %v2932
    %v4443 = vunpack.c.h.b16 %v2932
    %v4444 = vunpack.c.l.b16 %v2933
    %v4445 = vunpack.c.h.b16 %v2933
    %v4446 = vunpack.c.l.b16 %v2934
    %v4447 = vunpack.c.h.b16 %v2934
    %v4448 = vunpack.c.l.b16 %v2935
    %v4449 = vunpack.c.h.b16 %v2935
    %v4450 = vunpack.c.l.b16 %v2936
    %v4451 = vunpack.c.h.b16 %v2936
    %v4452 = vunpack.c.l.b16 %v2937
    %v4453 = vunpack.c.h.b16 %v2937
    %v4454 = vunpack.c.l.b16 %v2938
    %v4455 = vunpack.c.h.b16 %v2938
    %v4456 = vunpack.c.l.b16 %v2939
    %v4457 = vunpack.c.h.b16 %v2939
    %v4458 = vunpack.c.l.b16 %v2940
    %v4459 = vunpack.c.h.b16 %v2940
    %v4460 = vunpack.c.l.b16 %v2941
    %v4461 = vunpack.c.h.b16 %v2941
    %v4462 = vunpack.c.l.b16 %v2942
    %v4463 = vunpack.c.h.b16 %v2942
    %v4464 = vunpack.c.l.b16 %v2943
    %v4465 = vunpack.c.h.b16 %v2943
    %v4466 = vpack.c.b16 %v4342, %v4338
    %v4467 = vpack.c.b16 %v4343, %v4339
    %v4468 = vpack.c.b16 %v4344, %v4340
    %v4469 = vpack.c.b16 %v4345, %v4341
    %v4470 = vpack.c.b16 %v4350, %v4346
    %v4471 = vpack.c.b16 %v4351, %v4347
    %v4472 = vpack.c.b16 %v4352, %v4348
    %v4473 = vpack.c.b16 %v4353, %v4349
    %v4474 = vpack.c.b16 %v4358, %v4354
    %v4475 = vpack.c.b16 %v4359, %v4355
    %v4476 = vpack.c.b16 %v4360, %v4356
    %v4477 = vpack.c.b16 %v4361, %v4357
    %v4478 = vpack.c.b16 %v4366, %v4362
    %v4479 = vpack.c.b16 %v4367, %v4363
    %v4480 = vpack.c.b16 %v4368, %v4364
    %v4481 = vpack.c.b16 %v4369, %v4365
    %v4482 = vpack.c.b16 %v4374, %v4370
    %v4483 = vpack.c.b16 %v4375, %v4371
    %v4484 = vpack.c.b16 %v4376, %v4372
    %v4485 = vpack.c.b16 %v4377, %v4373
    %v4486 = vpack.c.b16 %v4382, %v4378
    %v4487 = vpack.c.b16 %v4383, %v4379
    %v4488 = vpack.c.b16 %v4384, %v4380
    %v4489 = vpack.c.b16 %v4385, %v4381
    %v4490 = vpack.c.b16 %v4390, %v4386
    %v4491 = vpack.c.b16 %v4391, %v4387
    %v4492 = vpack.c.b16 %v4392, %v4388
    %v4493 = vpack.c.b16 %v4393, %v4389
    %v4494 = vpack.c.b16 %v4398, %v4394
    %v4495 = vpack.c.b16 %v4399, %v4395
    %v4496 = vpack.c.b16 %v4400, %v4396
    %v4497 = vpack.c.b16 %v4401, %v4397
    %v4498 = vpack.c.b16 %v4406, %v4402
    %v4499 = vpack.c.b16 %v4407, %v4403
    %v4500 = vpack.c.b16 %v4408, %v4404
    %v4501 = vpack.c.b16 %v4409, %v4405
    %v4502 = vpack.c.b16 %v4414, %v4410
    %v4503 = vpack.c.b16 %v4415, %v4411
    %v4504 = vpack.c.b16 %v4416, %v4412
    %v4505 = vpack.c.b16 %v4417, %v4413
    %v4506 = vpack.c.b16 %v4422, %v4418
    %v4507 = vpack.c.b16 %v4423, %v4419
    %v4508 = vpack.c.b16 %v4424, %v4420
    %v4509 = vpack.c.b16 %v4425, %v4421
    %v4510 = vpack.c.b16 %v4430, %v4426
    %v4511 = vpack.c.b16 %v4431, %v4427
    %v4512 = vpack.c.b16 %v4432, %v4428
    %v4513 = vpack.c.b16 %v4433, %v4429
    %v4514 = vpack.c.b16 %v4438, %v4434
    %v4515 = vpack.c.b16 %v4439, %v4435
    %v4516 = vpack.c.b16 %v4440, %v4436
    %v4517 = vpack.c.b16 %v4441, %v4437
    %v4518 = vpack.c.b16 %v4446, %v4442
    %v4519 = vpack.c.b16 %v4447, %v4443
    %v4520 = vpack.c.b16 %v4448, %v4444
    %v4521 = vpack.c.b16 %v4449, %v4445
    %v4522 = vpack.c.b16 %v4454, %v4450
    %v4523 = vpack.c.b16 %v4455, %v4451
    %v4524 = vpack.c.b16 %v4456, %v4452
    %v4525 = vpack.c.b16 %v4457, %v4453
    %v4526 = vpack.c.b16 %v4462, %v4458
    %v4527 = vpack.c.b16 %v4463, %v4459
    %v4528 = vpack.c.b16 %v4464, %v4460
    %v4529 = vpack.c.b16 %v4465, %v4461
    %4594 = vmatpush.bf16.msra.mxu0 %v4494
    %4595 = vmatpush.bf16.msra.mxu0 %v4490
    %4596 = vmatpush.bf16.msra.mxu0 %v4486
    %4597 = vmatpush.bf16.msra.mxu0 %v4482
    %4598 = vmatpush.bf16.msra.mxu0 %v4478
    %4599 = vmatpush.bf16.msra.mxu0 %v4474
    %4600 = vmatpush.bf16.msra.mxu0 %v4470
    %4601 = vmatpush.bf16.msra.mxu0 %v4466
    %4602 = vmatmul.bf16.gmra.mxu0 %v4263
    %v4603 = vpop.f32.mrf.mxu0
    %v4604 = vadd.f32 %v4266, %v4603
    %v4605 = vpop.f32.mrf.mxu0
    %v4606 = vadd.f32 %v4266, %v4605
    %4607 = vdwg.mxu0
    %4608 = vmatpush.bf16.msra.mxu0 %v4526
    %4609 = vmatpush.bf16.msra.mxu0 %v4522
    %4610 = vmatpush.bf16.msra.mxu0 %v4518
    %4611 = vmatpush.bf16.msra.mxu0 %v4514
    %4612 = vmatpush.bf16.msra.mxu0 %v4510
    %4613 = vmatpush.bf16.msra.mxu0 %v4506
    %4614 = vmatpush.bf16.msra.mxu0 %v4502
    %4615 = vmatpush.bf16.msra.mxu0 %v4498
    %4616 = vmatmul.bf16.gmra.mxu0 %v4264
    %v4617 = vpop.f32.mrf.mxu0
    %v4618 = vadd.f32 %v4604, %v4617
    %v4619 = vpop.f32.mrf.mxu0
    %v4620 = vadd.f32 %v4606, %v4619
    %4621 = vdwg.mxu0
    %4622 = vmatpush.bf16.msra.mxu0 %v4495
    %4623 = vmatpush.bf16.msra.mxu0 %v4491
    %4624 = vmatpush.bf16.msra.mxu0 %v4487
    %4625 = vmatpush.bf16.msra.mxu0 %v4483
    %4626 = vmatpush.bf16.msra.mxu0 %v4479
    %4627 = vmatpush.bf16.msra.mxu0 %v4475
    %4628 = vmatpush.bf16.msra.mxu0 %v4471
    %4629 = vmatpush.bf16.msra.mxu0 %v4467
    %4630 = vmatmul.bf16.gmra.mxu0 %v4263
    %v4631 = vpop.f32.mrf.mxu0
    %v4632 = vadd.f32 %v4267, %v4631
    %v4633 = vpop.f32.mrf.mxu0
    %v4634 = vadd.f32 %v4267, %v4633
    %4635 = vdwg.mxu0
    %4636 = vmatpush.bf16.msra.mxu0 %v4527
    %4637 = vmatpush.bf16.msra.mxu0 %v4523
    %4638 = vmatpush.bf16.msra.mxu0 %v4519
    %4639 = vmatpush.bf16.msra.mxu0 %v4515
    %4640 = vmatpush.bf16.msra.mxu0 %v4511
    %4641 = vmatpush.bf16.msra.mxu0 %v4507
    %4642 = vmatpush.bf16.msra.mxu0 %v4503
    %4643 = vmatpush.bf16.msra.mxu0 %v4499
    %4644 = vmatmul.bf16.gmra.mxu0 %v4264
    %v4645 = vpop.f32.mrf.mxu0
    %v4646 = vadd.f32 %v4632, %v4645
    %v4647 = vpop.f32.mrf.mxu0
    %v4648 = vadd.f32 %v4634, %v4647
    %4649 = vdwg.mxu0
    %4650 = vmatpush.bf16.msra.mxu0 %v4496
    %4651 = vmatpush.bf16.msra.mxu0 %v4492
    %4652 = vmatpush.bf16.msra.mxu0 %v4488
    %4653 = vmatpush.bf16.msra.mxu0 %v4484
    %4654 = vmatpush.bf16.msra.mxu0 %v4480
    %4655 = vmatpush.bf16.msra.mxu0 %v4476
    %4656 = vmatpush.bf16.msra.mxu0 %v4472
    %4657 = vmatpush.bf16.msra.mxu0 %v4468
    %4658 = vmatmul.bf16.gmra.mxu0 %v4263
    %v4659 = vpop.f32.mrf.mxu0
    %v4660 = vadd.f32 %v4268, %v4659
    %v4661 = vpop.f32.mrf.mxu0
    %v4662 = vadd.f32 %v4268, %v4661
    %4663 = vdwg.mxu0
    %4664 = vmatpush.bf16.msra.mxu0 %v4528
    %4665 = vmatpush.bf16.msra.mxu0 %v4524
    %4666 = vmatpush.bf16.msra.mxu0 %v4520
    %4667 = vmatpush.bf16.msra.mxu0 %v4516
    %4668 = vmatpush.bf16.msra.mxu0 %v4512
    %4669 = vmatpush.bf16.msra.mxu0 %v4508
    %4670 = vmatpush.bf16.msra.mxu0 %v4504
    %4671 = vmatpush.bf16.msra.mxu0 %v4500
    %4672 = vmatmul.bf16.gmra.mxu0 %v4264
    %v4673 = vpop.f32.mrf.mxu0
    %v4674 = vadd.f32 %v4660, %v4673
    %v4675 = vpop.f32.mrf.mxu0
    %v4676 = vadd.f32 %v4662, %v4675
    %4677 = vdwg.mxu0
    %4678 = vmatpush.bf16.msra.mxu0 %v4497
    %4679 = vmatpush.bf16.msra.mxu0 %v4493
    %4680 = vmatpush.bf16.msra.mxu0 %v4489
    %4681 = vmatpush.bf16.msra.mxu0 %v4485
    %4682 = vmatpush.bf16.msra.mxu0 %v4481
    %4683 = vmatpush.bf16.msra.mxu0 %v4477
    %4684 = vmatpush.bf16.msra.mxu0 %v4473
    %4685 = vmatpush.bf16.msra.mxu0 %v4469
    %4686 = vmatmul.bf16.gmra.mxu0 %v4263
    %v4687 = vpop.f32.mrf.mxu0
    %v4688 = vadd.f32 %v4269, %v4687
    %v4689 = vpop.f32.mrf.mxu0
    %v4690 = vadd.f32 %v4269, %v4689
    %4691 = vdwg.mxu0
    %4692 = vmatpush.bf16.msra.mxu0 %v4529
    %4693 = vmatpush.bf16.msra.mxu0 %v4525
    %4694 = vmatpush.bf16.msra.mxu0 %v4521
    %4695 = vmatpush.bf16.msra.mxu0 %v4517
    %4696 = vmatpush.bf16.msra.mxu0 %v4513
    %4697 = vmatpush.bf16.msra.mxu0 %v4509
    %4698 = vmatpush.bf16.msra.mxu0 %v4505
    %4699 = vmatpush.bf16.msra.mxu0 %v4501
    %4700 = vmatmul.bf16.gmra.mxu0 %v4264
    %v4701 = vpop.f32.mrf.mxu0
    %v4702 = vadd.f32 %v4688, %v4701
    %v4703 = vpop.f32.mrf.mxu0
    %v4704 = vadd.f32 %v4690, %v4703
    %4705 = vdwg.mxu0
    %v4706 = vmul.f32 %v4618, 0.5
    %v4707 = vmul.f32 %v4646, 0.5
    %v4708 = vmul.f32 %v4674, 0.5
    %v4709 = vmul.f32 %v4702, 0.5
    %v4710 = vmul.f32 %v4620, 0.5
    %v4711 = vmul.f32 %v4648, 0.5
    %v4712 = vmul.f32 %v4676, 0.5
    %v4713 = vmul.f32 %v4704, 0.5
    %v4714 = vmul.f32 %v4618, 0.044715
    %v4715 = vmul.f32 %v4646, 0.044715
    %v4716 = vmul.f32 %v4674, 0.044715
    %v4717 = vmul.f32 %v4702, 0.044715
    %v4718 = vmul.f32 %v4620, 0.044715
    %v4719 = vmul.f32 %v4648, 0.044715
    %v4720 = vmul.f32 %v4676, 0.044715
    %v4721 = vmul.f32 %v4704, 0.044715
    %v4722 = vmul.f32 %v4714, %v4618
    %v4723 = vmul.f32 %v4715, %v4646
    %v4724 = vmul.f32 %v4716, %v4674
    %v4725 = vmul.f32 %v4717, %v4702
    %v4726 = vmul.f32 %v4718, %v4620
    %v4727 = vmul.f32 %v4719, %v4648
    %v4728 = vmul.f32 %v4720, %v4676
    %v4729 = vmul.f32 %v4721, %v4704
    %v4730 = vmul.f32 %v4722, %v4618
    %v4731 = vmul.f32 %v4723, %v4646
    %v4732 = vmul.f32 %v4724, %v4674
    %v4733 = vmul.f32 %v4725, %v4702
    %v4734 = vmul.f32 %v4726, %v4620
    %v4735 = vmul.f32 %v4727, %v4648
    %v4736 = vmul.f32 %v4728, %v4676
    %v4737 = vmul.f32 %v4729, %v4704
    %v4738 = vadd.f32 %v4618, %v4730
    %v4739 = vadd.f32 %v4646, %v4731
    %v4740 = vadd.f32 %v4674, %v4732
    %v4741 = vadd.f32 %v4702, %v4733
    %v4742 = vadd.f32 %v4620, %v4734
    %v4743 = vadd.f32 %v4648, %v4735
    %v4744 = vadd.f32 %v4676, %v4736
    %v4745 = vadd.f32 %v4704, %v4737
    %v4746 = vmul.f32 %v4738, 0.7978846
    %v4747 = vmul.f32 %v4739, 0.7978846
    %v4748 = vmul.f32 %v4740, 0.7978846
    %v4749 = vmul.f32 %v4741, 0.7978846
    %v4750 = vmul.f32 %v4742, 0.7978846
    %v4751 = vmul.f32 %v4743, 0.7978846
    %v4752 = vmul.f32 %v4744, 0.7978846
    %v4753 = vmul.f32 %v4745, 0.7978846
    %v4754 = vtanh.pop %v4746
    %v4755 = vtanh.pop %v4747
    %v4756 = vtanh.pop %v4748
    %v4757 = vtanh.pop %v4749
    %v4758 = vtanh.pop %v4750
    %v4759 = vtanh.pop %v4751
    %v4760 = vtanh.pop %v4752
    %v4761 = vtanh.pop %v4753
    %v4762 = vadd.f32 %v4754, 1.0
    %v4763 = vadd.f32 %v4755, 1.0
    %v4764 = vadd.f32 %v4756, 1.0
    %v4765 = vadd.f32 %v4757, 1.0
    %v4766 = vadd.f32 %v4758, 1.0
    %v4767 = vadd.f32 %v4759, 1.0
    %v4768 = vadd.f32 %v4760, 1.0
    %v4769 = vadd.f32 %v4761, 1.0
    %v4770 = vmul.f32 %v4706, %v4762
    %v4771 = vmul.f32 %v4707, %v4763
    %v4772 = vmul.f32 %v4708, %v4764
    %v4773 = vmul.f32 %v4709, %v4765
    %v4774 = vmul.f32 %v4710, %v4766
    %v4775 = vmul.f32 %v4711, %v4767
    %v4776 = vmul.f32 %v4712, %v4768
    %v4777 = vmul.f32 %v4713, %v4769
    %v4778 = vpack.c.bf16 %v4774, %v4770
    %v4779 = vpack.c.bf16 %v4775, %v4771
    %v4780 = vpack.c.bf16 %v4776, %v4772
    %v4781 = vpack.c.bf16 %v4777, %v4773
    %v4783 = vperm.slane %v3012, 0
    %v4784 = vperm.slane %v3012, 1
    %v4851 = vunpack.c.l.b16 %v2947
    %v4852 = vunpack.c.h.b16 %v2947
    %v4853 = vunpack.c.l.b16 %v2948
    %v4854 = vunpack.c.h.b16 %v2948
    %v4855 = vunpack.c.l.b16 %v2949
    %v4856 = vunpack.c.h.b16 %v2949
    %v4857 = vunpack.c.l.b16 %v2950
    %v4858 = vunpack.c.h.b16 %v2950
    %v4859 = vunpack.c.l.b16 %v2951
    %v4860 = vunpack.c.h.b16 %v2951
    %v4861 = vunpack.c.l.b16 %v2952
    %v4862 = vunpack.c.h.b16 %v2952
    %v4863 = vunpack.c.l.b16 %v2953
    %v4864 = vunpack.c.h.b16 %v2953
    %v4865 = vunpack.c.l.b16 %v2954
    %v4866 = vunpack.c.h.b16 %v2954
    %v4867 = vunpack.c.l.b16 %v2955
    %v4868 = vunpack.c.h.b16 %v2955
    %v4869 = vunpack.c.l.b16 %v2956
    %v4870 = vunpack.c.h.b16 %v2956
    %v4871 = vunpack.c.l.b16 %v2957
    %v4872 = vunpack.c.h.b16 %v2957
    %v4873 = vunpack.c.l.b16 %v2958
    %v4874 = vunpack.c.h.b16 %v2958
    %v4875 = vunpack.c.l.b16 %v2959
    %v4876 = vunpack.c.h.b16 %v2959
    %v4877 = vunpack.c.l.b16 %v2960
    %v4878 = vunpack.c.h.b16 %v2960
    %v4879 = vunpack.c.l.b16 %v2961
    %v4880 = vunpack.c.h.b16 %v2961
    %v4881 = vunpack.c.l.b16 %v2962
    %v4882 = vunpack.c.h.b16 %v2962
    %v4883 = vunpack.c.l.b16 %v2963
    %v4884 = vunpack.c.h.b16 %v2963
    %v4885 = vunpack.c.l.b16 %v2964
    %v4886 = vunpack.c.h.b16 %v2964
    %v4887 = vunpack.c.l.b16 %v2965
    %v4888 = vunpack.c.h.b16 %v2965
    %v4889 = vunpack.c.l.b16 %v2966
    %v4890 = vunpack.c.h.b16 %v2966
    %v4891 = vunpack.c.l.b16 %v2967
    %v4892 = vunpack.c.h.b16 %v2967
    %v4893 = vunpack.c.l.b16 %v2968
    %v4894 = vunpack.c.h.b16 %v2968
    %v4895 = vunpack.c.l.b16 %v2969
    %v4896 = vunpack.c.h.b16 %v2969
    %v4897 = vunpack.c.l.b16 %v2970
    %v4898 = vunpack.c.h.b16 %v2970
    %v4899 = vunpack.c.l.b16 %v2971
    %v4900 = vunpack.c.h.b16 %v2971
    %v4901 = vunpack.c.l.b16 %v2972
    %v4902 = vunpack.c.h.b16 %v2972
    %v4903 = vunpack.c.l.b16 %v2973
    %v4904 = vunpack.c.h.b16 %v2973
    %v4905 = vunpack.c.l.b16 %v2974
    %v4906 = vunpack.c.h.b16 %v2974
    %v4907 = vunpack.c.l.b16 %v2975
    %v4908 = vunpack.c.h.b16 %v2975
    %v4909 = vunpack.c.l.b16 %v2976
    %v4910 = vunpack.c.h.b16 %v2976
    %v4911 = vunpack.c.l.b16 %v2977
    %v4912 = vunpack.c.h.b16 %v2977
    %v4913 = vunpack.c.l.b16 %v2978
    %v4914 = vunpack.c.h.b16 %v2978
    %v4915 = vunpack.c.l.b16 %v2979
    %v4916 = vunpack.c.h.b16 %v2979
    %v4917 = vunpack.c.l.b16 %v2980
    %v4918 = vunpack.c.h.b16 %v2980
    %v4919 = vunpack.c.l.b16 %v2981
    %v4920 = vunpack.c.h.b16 %v2981
    %v4921 = vunpack.c.l.b16 %v2982
    %v4922 = vunpack.c.h.b16 %v2982
    %v4923 = vunpack.c.l.b16 %v2983
    %v4924 = vunpack.c.h.b16 %v2983
    %v4925 = vunpack.c.l.b16 %v2984
    %v4926 = vunpack.c.h.b16 %v2984
    %v4927 = vunpack.c.l.b16 %v2985
    %v4928 = vunpack.c.h.b16 %v2985
    %v4929 = vunpack.c.l.b16 %v2986
    %v4930 = vunpack.c.h.b16 %v2986
    %v4931 = vunpack.c.l.b16 %v2987
    %v4932 = vunpack.c.h.b16 %v2987
    %v4933 = vunpack.c.l.b16 %v2988
    %v4934 = vunpack.c.h.b16 %v2988
    %v4935 = vunpack.c.l.b16 %v2989
    %v4936 = vunpack.c.h.b16 %v2989
    %v4937 = vunpack.c.l.b16 %v2990
    %v4938 = vunpack.c.h.b16 %v2990
    %v4939 = vunpack.c.l.b16 %v2991
    %v4940 = vunpack.c.h.b16 %v2991
    %v4941 = vunpack.c.l.b16 %v2992
    %v4942 = vunpack.c.h.b16 %v2992
    %v4943 = vunpack.c.l.b16 %v2993
    %v4944 = vunpack.c.h.b16 %v2993
    %v4945 = vunpack.c.l.b16 %v2994
    %v4946 = vunpack.c.h.b16 %v2994
    %v4947 = vunpack.c.l.b16 %v2995
    %v4948 = vunpack.c.h.b16 %v2995
    %v4949 = vunpack.c.l.b16 %v2996
    %v4950 = vunpack.c.h.b16 %v2996
    %v4951 = vunpack.c.l.b16 %v2997
    %v4952 = vunpack.c.h.b16 %v2997
    %v4953 = vunpack.c.l.b16 %v2998
    %v4954 = vunpack.c.h.b16 %v2998
    %v4955 = vunpack.c.l.b16 %v2999
    %v4956 = vunpack.c.h.b16 %v2999
    %v4957 = vunpack.c.l.b16 %v3000
    %v4958 = vunpack.c.h.b16 %v3000
    %v4959 = vunpack.c.l.b16 %v3001
    %v4960 = vunpack.c.h.b16 %v3001
    %v4961 = vunpack.c.l.b16 %v3002
    %v4962 = vunpack.c.h.b16 %v3002
    %v4963 = vunpack.c.l.b16 %v3003
    %v4964 = vunpack.c.h.b16 %v3003
    %v4965 = vunpack.c.l.b16 %v3004
    %v4966 = vunpack.c.h.b16 %v3004
    %v4967 = vunpack.c.l.b16 %v3005
    %v4968 = vunpack.c.h.b16 %v3005
    %v4969 = vunpack.c.l.b16 %v3006
    %v4970 = vunpack.c.h.b16 %v3006
    %v4971 = vunpack.c.l.b16 %v3007
    %v4972 = vunpack.c.h.b16 %v3007
    %v4973 = vunpack.c.l.b16 %v3008
    %v4974 = vunpack.c.h.b16 %v3008
    %v4975 = vunpack.c.l.b16 %v3009
    %v4976 = vunpack.c.h.b16 %v3009
    %v4977 = vunpack.c.l.b16 %v3010
    %v4978 = vunpack.c.h.b16 %v3010
    %v4979 = vpack.c.b16 %v4853, %v4851
    %v4980 = vpack.c.b16 %v4854, %v4852
    %v4981 = vpack.c.b16 %v4857, %v4855
    %v4982 = vpack.c.b16 %v4858, %v4856
    %v4983 = vpack.c.b16 %v4861, %v4859
    %v4984 = vpack.c.b16 %v4862, %v4860
    %v4985 = vpack.c.b16 %v4865, %v4863
    %v4986 = vpack.c.b16 %v4866, %v4864
    %v4987 = vpack.c.b16 %v4869, %v4867
    %v4988 = vpack.c.b16 %v4870, %v4868
    %v4989 = vpack.c.b16 %v4873, %v4871
    %v4990 = vpack.c.b16 %v4874, %v4872
    %v4991 = vpack.c.b16 %v4877, %v4875
    %v4992 = vpack.c.b16 %v4878, %v4876
    %v4993 = vpack.c.b16 %v4881, %v4879
    %v4994 = vpack.c.b16 %v4882, %v4880
    %v4995 = vpack.c.b16 %v4885, %v4883
    %v4996 = vpack.c.b16 %v4886, %v4884
    %v4997 = vpack.c.b16 %v4889, %v4887
    %v4998 = vpack.c.b16 %v4890, %v4888
    %v4999 = vpack.c.b16 %v4893, %v4891
    %v5000 = vpack.c.b16 %v4894, %v4892
    %v5001 = vpack.c.b16 %v4897, %v4895
    %v5002 = vpack.c.b16 %v4898, %v4896
    %v5003 = vpack.c.b16 %v4901, %v4899
    %v5004 = vpack.c.b16 %v4902, %v4900
    %v5005 = vpack.c.b16 %v4905, %v4903
    %v5006 = vpack.c.b16 %v4906, %v4904
    %v5007 = vpack.c.b16 %v4909, %v4907
    %v5008 = vpack.c.b16 %v4910, %v4908
    %v5009 = vpack.c.b16 %v4913, %v4911
    %v5010 = vpack.c.b16 %v4914, %v4912
    %v5011 = vpack.c.b16 %v4917, %v4915
    %v5012 = vpack.c.b16 %v4918, %v4916
    %v5013 = vpack.c.b16 %v4921, %v4919
    %v5014 = vpack.c.b16 %v4922, %v4920
    %v5015 = vpack.c.b16 %v4925, %v4923
    %v5016 = vpack.c.b16 %v4926, %v4924
    %v5017 = vpack.c.b16 %v4929, %v4927
    %v5018 = vpack.c.b16 %v4930, %v4928
    %v5019 = vpack.c.b16 %v4933, %v4931
    %v5020 = vpack.c.b16 %v4934, %v4932
    %v5021 = vpack.c.b16 %v4937, %v4935
    %v5022 = vpack.c.b16 %v4938, %v4936
    %v5023 = vpack.c.b16 %v4941, %v4939
    %v5024 = vpack.c.b16 %v4942, %v4940
    %v5025 = vpack.c.b16 %v4945, %v4943
    %v5026 = vpack.c.b16 %v4946, %v4944
    %v5027 = vpack.c.b16 %v4949, %v4947
    %v5028 = vpack.c.b16 %v4950, %v4948
    %v5029 = vpack.c.b16 %v4953, %v4951
    %v5030 = vpack.c.b16 %v4954, %v4952
    %v5031 = vpack.c.b16 %v4957, %v4955
    %v5032 = vpack.c.b16 %v4958, %v4956
    %v5033 = vpack.c.b16 %v4961, %v4959
    %v5034 = vpack.c.b16 %v4962, %v4960
    %v5035 = vpack.c.b16 %v4965, %v4963
    %v5036 = vpack.c.b16 %v4966, %v4964
    %v5037 = vpack.c.b16 %v4969, %v4967
    %v5038 = vpack.c.b16 %v4970, %v4968
    %v5039 = vpack.c.b16 %v4973, %v4971
    %v5040 = vpack.c.b16 %v4974, %v4972
    %v5041 = vpack.c.b16 %v4977, %v4975
    %v5042 = vpack.c.b16 %v4978, %v4976
    %5107 = vmatpush.bf16.msra.mxu0 %v4993
    %5108 = vmatpush.bf16.msra.mxu0 %v4991
    %5109 = vmatpush.bf16.msra.mxu0 %v4989
    %5110 = vmatpush.bf16.msra.mxu0 %v4987
    %5111 = vmatpush.bf16.msra.mxu0 %v4985
    %5112 = vmatpush.bf16.msra.mxu0 %v4983
    %5113 = vmatpush.bf16.msra.mxu0 %v4981
    %5114 = vmatpush.bf16.msra.mxu0 %v4979
    %5115 = vmatmul.bf16.gmra.mxu0 %v4778
    %v5116 = vpop.f32.mrf.mxu0
    %v5117 = vadd.f32 %v4783, %v5116
    %v5118 = vpop.f32.mrf.mxu0
    %v5119 = vadd.f32 %v4783, %v5118
    %5120 = vdwg.mxu0
    %5121 = vmatpush.bf16.msra.mxu0 %v5009
    %5122 = vmatpush.bf16.msra.mxu0 %v5007
    %5123 = vmatpush.bf16.msra.mxu0 %v5005
    %5124 = vmatpush.bf16.msra.mxu0 %v5003
    %5125 = vmatpush.bf16.msra.mxu0 %v5001
    %5126 = vmatpush.bf16.msra.mxu0 %v4999
    %5127 = vmatpush.bf16.msra.mxu0 %v4997
    %5128 = vmatpush.bf16.msra.mxu0 %v4995
    %5129 = vmatmul.bf16.gmra.mxu0 %v4779
    %v5130 = vpop.f32.mrf.mxu0
    %v5131 = vadd.f32 %v5117, %v5130
    %v5132 = vpop.f32.mrf.mxu0
    %v5133 = vadd.f32 %v5119, %v5132
    %5134 = vdwg.mxu0
    %5135 = vmatpush.bf16.msra.mxu0 %v5025
    %5136 = vmatpush.bf16.msra.mxu0 %v5023
    %5137 = vmatpush.bf16.msra.mxu0 %v5021
    %5138 = vmatpush.bf16.msra.mxu0 %v5019
    %5139 = vmatpush.bf16.msra.mxu0 %v5017
    %5140 = vmatpush.bf16.msra.mxu0 %v5015
    %5141 = vmatpush.bf16.msra.mxu0 %v5013
    %5142 = vmatpush.bf16.msra.mxu0 %v5011
    %5143 = vmatmul.bf16.gmra.mxu0 %v4780
    %v5144 = vpop.f32.mrf.mxu0
    %v5145 = vadd.f32 %v5131, %v5144
    %v5146 = vpop.f32.mrf.mxu0
    %v5147 = vadd.f32 %v5133, %v5146
    %5148 = vdwg.mxu0
    %5149 = vmatpush.bf16.msra.mxu0 %v5041
    %5150 = vmatpush.bf16.msra.mxu0 %v5039
    %5151 = vmatpush.bf16.msra.mxu0 %v5037
    %5152 = vmatpush.bf16.msra.mxu0 %v5035
    %5153 = vmatpush.bf16.msra.mxu0 %v5033
    %5154 = vmatpush.bf16.msra.mxu0 %v5031
    %5155 = vmatpush.bf16.msra.mxu0 %v5029
    %5156 = vmatpush.bf16.msra.mxu0 %v5027
    %5157 = vmatmul.bf16.gmra.mxu0 %v4781
    %v5158 = vpop.f32.mrf.mxu0
    %v5159 = vadd.f32 %v5145, %v5158
    %v5160 = vpop.f32.mrf.mxu0
    %v5161 = vadd.f32 %v5147, %v5160
    %5162 = vdwg.mxu0
    %5163 = vmatpush.bf16.msra.mxu0 %v4994
    %5164 = vmatpush.bf16.msra.mxu0 %v4992
    %5165 = vmatpush.bf16.msra.mxu0 %v4990
    %5166 = vmatpush.bf16.msra.mxu0 %v4988
    %5167 = vmatpush.bf16.msra.mxu0 %v4986
    %5168 = vmatpush.bf16.msra.mxu0 %v4984
    %5169 = vmatpush.bf16.msra.mxu0 %v4982
    %5170 = vmatpush.bf16.msra.mxu0 %v4980
    %5171 = vmatmul.bf16.gmra.mxu0 %v4778
    %v5172 = vpop.f32.mrf.mxu0
    %v5173 = vadd.f32 %v4784, %v5172
    %v5174 = vpop.f32.mrf.mxu0
    %v5175 = vadd.f32 %v4784, %v5174
    %5176 = vdwg.mxu0
    %5177 = vmatpush.bf16.msra.mxu0 %v5010
    %5178 = vmatpush.bf16.msra.mxu0 %v5008
    %5179 = vmatpush.bf16.msra.mxu0 %v5006
    %5180 = vmatpush.bf16.msra.mxu0 %v5004
    %5181 = vmatpush.bf16.msra.mxu0 %v5002
    %5182 = vmatpush.bf16.msra.mxu0 %v5000
    %5183 = vmatpush.bf16.msra.mxu0 %v4998
    %5184 = vmatpush.bf16.msra.mxu0 %v4996
    %5185 = vmatmul.bf16.gmra.mxu0 %v4779
    %v5186 = vpop.f32.mrf.mxu0
    %v5187 = vadd.f32 %v5173, %v5186
    %v5188 = vpop.f32.mrf.mxu0
    %v5189 = vadd.f32 %v5175, %v5188
    %5190 = vdwg.mxu0
    %5191 = vmatpush.bf16.msra.mxu0 %v5026
    %5192 = vmatpush.bf16.msra.mxu0 %v5024
    %5193 = vmatpush.bf16.msra.mxu0 %v5022
    %5194 = vmatpush.bf16.msra.mxu0 %v5020
    %5195 = vmatpush.bf16.msra.mxu0 %v5018
    %5196 = vmatpush.bf16.msra.mxu0 %v5016
    %5197 = vmatpush.bf16.msra.mxu0 %v5014
    %5198 = vmatpush.bf16.msra.mxu0 %v5012
    %5199 = vmatmul.bf16.gmra.mxu0 %v4780
    %v5200 = vpop.f32.mrf.mxu0
    %v5201 = vadd.f32 %v5187, %v5200
    %v5202 = vpop.f32.mrf.mxu0
    %v5203 = vadd.f32 %v5189, %v5202
    %5204 = vdwg.mxu0
    %5205 = vmatpush.bf16.msra.mxu0 %v5042
    %5206 = vmatpush.bf16.msra.mxu0 %v5040
    %5207 = vmatpush.bf16.msra.mxu0 %v5038
    %5208 = vmatpush.bf16.msra.mxu0 %v5036
    %5209 = vmatpush.bf16.msra.mxu0 %v5034
    %5210 = vmatpush.bf16.msra.mxu0 %v5032
    %5211 = vmatpush.bf16.msra.mxu0 %v5030
    %5212 = vmatpush.bf16.msra.mxu0 %v5028
    %5213 = vmatmul.bf16.gmra.mxu0 %v4781
    %v5214 = vpop.f32.mrf.mxu0
    %v5215 = vadd.f32 %v5201, %v5214
    %v5216 = vpop.f32.mrf.mxu0
    %v5217 = vadd.f32 %v5203, %v5216
    %5218 = vdwg.mxu0
    %v5219 = vadd.f32 %v4191, %v5159
    %v5220 = vadd.f32 %v4192, %v5215
    %v5221 = vadd.f32 %v4193, %v5161
    %v5222 = vadd.f32 %v4194, %v5217
    %5223 = vst [vmem:[#allocation22] sm:$0xff] %v5219
    %5224 = vst [vmem:[#allocation22 + $0x8] sm:$0xff] %v5220
    %5225 = vst [vmem:[#allocation22 + $0x10] sm:$0xff] %v5221
    %5226 = vst [vmem:[#allocation22 + $0x18] sm:$0xff] %v5222
    // Predicated region
    $region106: #{tpu_custom_call.1} parent=1 // pred_check
      _
    $region107: #{tpu_custom_call.1} parent=1 // pred_check_branch
      %5228 = sbr.rel (0) target = $region109
    $region108: #{tpu_custom_call.1} parent=1 // pred_region
      %5230 = vsyncadd [#allocation4], 0
      %s5231 = sshll.u32 [#allocation22], 4
      %s5232 = int_to_ptr.vmem [resolvable:$true] %s5231
      %s5233 = sshll.u32 %s14, 4
      %s5234 = int_to_ptr.hbm [resolvable:$true] %s5233
      %5239 = dma.vmem_to_hbm [thread:$0]  %s5232, 512, %s5234, [#allocation4], 256, 256, 16
    $region109: #{tpu_custom_call.1} parent=1 // pred_fallthru
      _
    // Predicated region
    $region110: #{tpu_custom_call.1} parent=1 // pred_check
      _
    $region111: #{tpu_custom_call.1} parent=1 // pred_check_branch
      %5241 = sbr.rel (0) target = $region113
    $region112: #{tpu_custom_call.1} parent=1 // pred_region
      %5243 = dma.done [#allocation4], 512
    $region113: #{tpu_custom_call.1} parent=1 // pred_fallthru
      _
    %5244 = vsyncpa [#allocation3], 1
    %5245 = vsyncpa [#allocation6], 1
    %5246 = vsyncpa [#allocation9], 1
    %5247 = vsyncpa [#allocation12], 1
    %5248 = vsyncpa [#allocation15], 1
    %5249 = vsyncpa [#allocation18], 1
    %5250 = vsyncpa [#allocation21], 1
    %5251 = vsyncpa [#allocation4], 1

</llo_original>
